<compile_context>
chip_gen: v7x
topology: tpu7x:2x2x1
jax: 0.10.0
libtpu: 0.0.40
codegen_flags: <defaults>
</compile_context>

<pallas_src>
import functools

import jax
import jax.numpy as jnp
import numpy as np
from jax.experimental import pallas as pl
from jax.experimental.pallas import tpu as pltpu

_PAD_ALIGN = 128   # lane-aligned zero halo on each side of the shift buffer


def _pick_block(n, max_b=8):
    """Largest divisor of n (<= max_b) that keeps the grid length >= 2
    (so both v7x TensorCores get work from the "parallel" batch axis)."""
    best = 1
    for b in range(1, max_b + 1):
        if n % b == 0 and (n // b >= 2 or n <= 1):
            best = b
    return best


def _masknet_kernel(x_ref, mask_ref, w_ref, b_ref, o_ref, pad_ref, taps_ref,
                    *, Wp, BP, layers):
    """Fused 4-layer MaskNet forward for one block of B samples.

    x_ref   : (1, Cin0, BP)        f32  zero-padded input planes, B samples on lanes
    mask_ref: (1, BP)              f32  1.0 at interior padded pixels, 0.0 elsewhere
    w_ref   : (L, Cmax, Kmax)      bf16 per-layer (Cout, 9*Cin) taps, zero padded
    b_ref   : (L, Cmax, 1)         f32  per-layer biases, zero padded
    o_ref   : (1, CoutS, BP)       f32  lane-dense padded output planes
    pad_ref : (CinMax, 2*A + BP)   bf16 shift buffer with zero lane halo
    taps_ref: (9*CinMax, BP)       bf16 im2col matrix
    """
    A = _PAD_ALIGN
    # Zero only the halo lanes; the centre is fully rewritten every layer.
    # (Do NOT gate on program_id: with a parallel grid each core has private
    #  scratch and must initialize its own halo.)
    halo = jnp.zeros((pad_ref.shape[0], A), pad_ref.dtype)
    pad_ref[:, :A] = halo
    pad_ref[:, A + BP:] = halo

    mask = mask_ref[...]                                    # (1, BP) f32
    a_bf16 = x_ref[0].astype(jnp.bfloat16)                  # (Cin0, BP)

    n_layers = len(layers)
    for li, (cin, cout, act) in enumerate(layers):
        # Lane-aligned centre store: the zero-padded input of this layer.
        pad_ref[:cin, A:A + BP] = a_bf16

        offs = [A + (k // 3 - 1) * Wp + (k % 3 - 1) for k in range(9)]
        if cin % 16 == 0:
            # im2col into bf16 scratch; row offsets k*cin are 16-aligned
            # (bf16 sublane packing) so the stores are clean.
            for k, off in enumerate(offs):
                taps_ref[k * cin:(k + 1) * cin, :] = pad_ref[:cin, off:off + BP]
            taps = taps_ref[:9 * cin, :]                    # (9*Cin, BP) bf16
        else:
            # Tiny Cin (first layer): assemble the 9 shifted rows in registers
            # instead of misaligned single-row bf16 scratch stores.
            taps = jnp.concatenate(
                [pad_ref[:cin, off:off + BP].astype(jnp.float32) for off in offs],
                axis=0).astype(jnp.bfloat16)                # (9*Cin, BP) bf16

        w = w_ref[li, :cout, :9 * cin]                      # (Cout, 9*Cin) bf16
        b = b_ref[li, :cout, :]                             # (Cout, 1)     f32
        out = jnp.dot(w, taps, preferred_element_type=jnp.float32) + b
        out = jnp.maximum(out, 0.0) if act == "relu" else jax.nn.sigmoid(out)
        # Re-zero halo + dead lanes: this IS the next layer's "same" padding,
        # and it kills any cross-sample contamination from the batched shifts.
        out = out * mask

        if li + 1 < n_layers:
            a_bf16 = out.astype(jnp.bfloat16)
        else:
            o_ref[...] = out[None].astype(o_ref.dtype)


def masknet_forward(x_nchw, weights, biases):
    """MaskNet forward.  x_nchw: (N, 1, H, W) f32; weights: four HWIO (3,3,Cin,Cout)
    arrays; biases: four (Cout,) arrays.  Returns (N, 2, H, W) f32 sigmoid masks."""
    N, cin0, H, W = x_nchw.shape
    Hp, Wp = H + 2, W + 2
    P = Hp * Wp
    Ppad = ((P + 127) // 128) * 128        # per-sample plane padded to full vregs
    A = _PAD_ALIGN
    B = _pick_block(N)                     # samples per grid step
    G = N // B
    BP = B * Ppad

    acts = ["relu"] * (len(weights) - 1) + ["sigmoid"]

    # --- padded input, batch flattened onto the lane axis --------------------
    xp = jnp.pad(x_nchw, ((0, 0), (0, 0), (1, 1), (1, 1))).reshape(N, cin0, P)
    xp = jnp.pad(xp, ((0, 0), (0, 0), (0, Ppad - P)))
    xp = xp.reshape(G, B, cin0, Ppad).transpose(0, 2, 1, 3).reshape(G, cin0, BP)

    # --- interior mask over the flattened padded plane, tiled over B ---------
    rows = jnp.arange(Hp)
    cols = jnp.arange(Wp)
    interior = (((rows >= 1) & (rows <= H))[:, None]
                & ((cols >= 1) & (cols <= W))[None, :])
    mask_p = jnp.pad(interior.astype(jnp.float32).reshape(P), (0, Ppad - P))
    mask = jnp.tile(mask_p, (B,)).reshape(1, BP)

    # --- fold all layer weights / biases into ONE operand each ---------------
    cins = [w.shape[2] for w in weights]
    couts = [w.shape[3] for w in weights]
    c_in_max = max(cins)
    c_out_max = max(couts)
    k_max = 9 * c_in_max
    cout_last = couts[-1]
    cout_store = ((cout_last + 7) // 8) * 8      # pad final Cout to 8 for the store

    w_stk, b_stk = [], []
    for w, b, cin, cout in zip(weights, biases, cins, couts):
        # HWIO -> (Cout, 9*Cin) ordered (dy, dx, ci) to match the tap build.
        w9 = (jnp.transpose(w, (3, 0, 1, 2)).reshape(cout, 9 * cin)
              .astype(jnp.bfloat16))
        w_stk.append(jnp.pad(w9, ((0, c_out_max - cout), (0, k_max - 9 * cin))))
        b_stk.append(jnp.pad(b.reshape(cout, 1).astype(jnp.float32),
                             ((0, c_out_max - cout), (0, 0))))
    w_all = jnp.stack(w_stk)          # (L, Cmax, Kmax) bf16
    b_all = jnp.stack(b_stk)          # (L, Cmax, 1)    f32

    # Static per-layer (Cin, Cout_for_matmul, act); last Cout padded to the
    # store width (dummy rows have zero weight/bias and are sliced off below).
    layers = tuple(zip(cins, list(couts[:-1]) + [cout_store], acts))

    kernel = functools.partial(_masknet_kernel, Wp=Wp, BP=BP, layers=layers)

    out = pl.pallas_call(
        kernel,
        out_shape=jax.ShapeDtypeStruct((G, cout_store, BP), jnp.float32),
        grid_spec=pltpu.PrefetchScalarGridSpec(
            num_scalar_prefetch=0,
            grid=(G,),
            in_specs=[
                pl.BlockSpec((1, cin0, BP), lambda n: (n, 0, 0)),   # B samples / step
                pl.BlockSpec((1, BP), lambda n: (0, 0)),            # interior mask
                pl.BlockSpec(w_all.shape, lambda n: (0, 0, 0)),     # all weights
                pl.BlockSpec(b_all.shape, lambda n: (0, 0, 0)),     # all biases
            ],
            out_specs=pl.BlockSpec((1, cout_store, BP), lambda n: (n, 0, 0)),
            scratch_shapes=[
                pltpu.VMEM((c_in_max, 2 * A + BP), jnp.bfloat16),   # shift buffer
                pltpu.VMEM((9 * c_in_max, BP), jnp.bfloat16),       # im2col matrix
            ]),
        compiler_params=pltpu.CompilerParams(
            # "parallel" batch-block axis: both v7x TensorCores take a block
            # each (grid length kept >= 2 by _pick_block); sequential on v5e/v6e.
            dimension_semantics=("parallel",)),
    )(xp, mask, w_all, b_all)

    # (G, CoutS, B*Ppad) lane-dense padded planes -> (N, 2, H, W) interior.
    out = out.reshape(G, cout_store, B, Ppad).transpose(0, 2, 1, 3)
    out = out.reshape(N, cout_store, Ppad)[:, :cout_last, :P]
    return out.reshape(N, cout_last, Hp, Wp)[:, :, 1:H + 1, 1:W + 1]


def masknet_reference(x_nchw, weights, biases):
    """Pure-JAX f32 HIGHEST reference in NCHW (ground truth for validation)."""
    acts = ["relu"] * (len(weights) - 1) + ["sigmoid"]
    x = x_nchw
    for (w, b), act in zip(zip(weights, biases), acts):
        x = jax.lax.conv_general_dilated(
            x, w, window_strides=(1, 1), padding="SAME",
            dimension_numbers=("NCHW", "HWIO", "NCHW"),
            precision=jax.lax.Precision.HIGHEST)
        x = x + b.reshape(1, -1, 1, 1)
        x = jnp.maximum(x, 0.0) if act == "relu" else jax.nn.sigmoid(x)
    return x


if __name__ == "__main__":
    key = jax.random.PRNGKey(0)
    keys = jax.random.split(key, 9)
    kx, kparam = keys[0], keys[1:]

    # Small shapes consistent with the module: grayscale input, 2 mask channels.
    # N=4 exercises the batched (B=2 samples per grid step) path while staying tiny.
    N, H, W = 4, 16, 16
    x_nchw = jax.random.normal(kx, (N, 1, H, W), jnp.float32)   # PyTorch NCHW input

    # (Cin, Cout) per conv: encoder conv1/conv2, decoder conv1/conv2.
    layer_defs = [(1, 16), (16, 32), (32, 16), (16, 2)]
    weights, biases = [], []
    for i, (cin, cout) in enumerate(layer_defs):
        bound = 1.0 / (cin * 9) ** 0.5                 # PyTorch Conv2d init bounds
        weights.append(jax.random.uniform(kparam[2 * i], (3, 3, cin, cout),
                                          jnp.float32, minval=-bound, maxval=bound))
        biases.append(jax.random.uniform(kparam[2 * i + 1], (cout,),
                                         jnp.float32, minval=-bound, maxval=bound))
    weights, biases = tuple(weights), tuple(biases)

    fwd = jax.jit(masknet_forward)
    masks = jax.block_until_ready(fwd(x_nchw, weights, biases))

    ref = masknet_reference(x_nchw, weights, biases)
    # bf16 MXU operands / bf16 inter-layer activations (f32 accumulation) vs.
    # f32 HIGHEST reference -> 2e-2 tolerance.
    np.testing.assert_allclose(np.asarray(masks), np.asarray(ref),
                               atol=2e-2, rtol=2e-2)

    assert masks.shape == (N, 2, H, W)
    assert masks.dtype == jnp.float32
    print("KERNEL_OK")
</pallas_src>

<mosaic_0001>
module attributes {stable_mosaic.version = 11 : i64} {
  func.func @_masknet_kernel(%arg0: i32, %arg1: memref<1x1x768xf32, #tpu.memory_space<vmem>>, %arg2: memref<1x768xf32, #tpu.memory_space<vmem>>, %arg3: memref<4x32x288xbf16, #tpu.memory_space<vmem>>, %arg4: memref<4x32x1xf32, #tpu.memory_space<vmem>>, %arg5: memref<1x8x768xf32, #tpu.memory_space<vmem>>, %arg6: memref<32x1024xbf16, #tpu.memory_space<vmem>>, %arg7: memref<288x768xbf16, #tpu.memory_space<vmem>>) attributes {dimension_semantics = [#tpu.dimension_semantics<parallel>], iteration_bounds = array<i64: 2>, scalar_prefetch = 0 : i64, scratch_operands = 2 : i64, tpu.core_type = #tpu.core_type<tc>, window_params = [{transform_indices = @transform_0, window_bounds = array<i64: 1, 1, 768>}, {pipeline_mode = #tpu.pipeline_mode<synchronous>, transform_indices = @transform_1, window_bounds = array<i64: 1, 768>}, {pipeline_mode = #tpu.pipeline_mode<synchronous>, transform_indices = @transform_2, window_bounds = array<i64: 4, 32, 288>}, {pipeline_mode = #tpu.pipeline_mode<synchronous>, transform_indices = @transform_3, window_bounds = array<i64: 4, 32, 1>}, {transform_indices = @transform_4, window_bounds = array<i64: 1, 8, 768>}]} {
    %cst = arith.constant 0.000000e+00 : bf16
    %0 = vector.broadcast %cst : bf16 to vector<32x128xbf16>
    %c0 = arith.constant 0 : index
    %c0_0 = arith.constant 0 : index
    %1 = vector.load %arg6[%c0, %c0_0] : memref<32x1024xbf16, #tpu.memory_space<vmem>>, vector<32x128xbf16>
    tpu.vector_store %arg6[%c0, %c0_0], %0 {strides = array<i32>} : memref<32x1024xbf16, #tpu.memory_space<vmem>>, vector<32x128xbf16>,
    %c0_1 = arith.constant 0 : index
    %c896 = arith.constant 896 : index
    %2 = vector.load %arg6[%c0_1, %c896] : memref<32x1024xbf16, #tpu.memory_space<vmem>>, vector<32x128xbf16>
    tpu.vector_store %arg6[%c0_1, %c896], %0 {strides = array<i32>} : memref<32x1024xbf16, #tpu.memory_space<vmem>>, vector<32x128xbf16>,
    %c0_2 = arith.constant 0 : index
    %c0_3 = arith.constant 0 : index
    %3 = vector.load %arg2[%c0_2, %c0_3] : memref<1x768xf32, #tpu.memory_space<vmem>>, vector<1x768xf32>
    %c0_4 = arith.constant 0 : index
    %c0_5 = arith.constant 0 : index
    %c0_6 = arith.constant 0 : index
    %4 = vector.load %arg1[%c0_4, %c0_5, %c0_6] : memref<1x1x768xf32, #tpu.memory_space<vmem>>, vector<1x1x768xf32>
    %5 = vector.shape_cast %4 : vector<1x1x768xf32> to vector<1x768xf32>
    %6 = arith.truncf %5 : vector<1x768xf32> to vector<1x768xbf16>
    %c0_7 = arith.constant 0 : index
    %c128 = arith.constant 128 : index
    %7 = vector.load %arg6[%c0_7, %c128] : memref<32x1024xbf16, #tpu.memory_space<vmem>>, vector<1x768xbf16>
    tpu.vector_store %arg6[%c0_7, %c128], %6 {strides = array<i32>} : memref<32x1024xbf16, #tpu.memory_space<vmem>>, vector<1x768xbf16>,
    %c0_8 = arith.constant 0 : index
    %c109 = arith.constant 109 : index
    %8 = vector.load %arg6[%c0_8, %c109] : memref<32x1024xbf16, #tpu.memory_space<vmem>>, vector<1x768xbf16>
    %9 = arith.extf %8 : vector<1x768xbf16> to vector<1x768xf32>
    %c0_9 = arith.constant 0 : index
    %c110 = arith.constant 110 : index
    %10 = vector.load %arg6[%c0_9, %c110] : memref<32x1024xbf16, #tpu.memory_space<vmem>>, vector<1x768xbf16>
    %11 = arith.extf %10 : vector<1x768xbf16> to vector<1x768xf32>
    %c0_10 = arith.constant 0 : index
    %c111 = arith.constant 111 : index
    %12 = vector.load %arg6[%c0_10, %c111] : memref<32x1024xbf16, #tpu.memory_space<vmem>>, vector<1x768xbf16>
    %13 = arith.extf %12 : vector<1x768xbf16> to vector<1x768xf32>
    %c0_11 = arith.constant 0 : index
    %c127 = arith.constant 127 : index
    %14 = vector.load %arg6[%c0_11, %c127] : memref<32x1024xbf16, #tpu.memory_space<vmem>>, vector<1x768xbf16>
    %15 = arith.extf %14 : vector<1x768xbf16> to vector<1x768xf32>
    %c0_12 = arith.constant 0 : index
    %c128_13 = arith.constant 128 : index
    %16 = vector.load %arg6[%c0_12, %c128_13] : memref<32x1024xbf16, #tpu.memory_space<vmem>>, vector<1x768xbf16>
    %17 = arith.extf %16 : vector<1x768xbf16> to vector<1x768xf32>
    %c0_14 = arith.constant 0 : index
    %c129 = arith.constant 129 : index
    %18 = vector.load %arg6[%c0_14, %c129] : memref<32x1024xbf16, #tpu.memory_space<vmem>>, vector<1x768xbf16>
    %19 = arith.extf %18 : vector<1x768xbf16> to vector<1x768xf32>
    %c0_15 = arith.constant 0 : index
    %c145 = arith.constant 145 : index
    %20 = vector.load %arg6[%c0_15, %c145] : memref<32x1024xbf16, #tpu.memory_space<vmem>>, vector<1x768xbf16>
    %21 = arith.extf %20 : vector<1x768xbf16> to vector<1x768xf32>
    %c0_16 = arith.constant 0 : index
    %c146 = arith.constant 146 : index
    %22 = vector.load %arg6[%c0_16, %c146] : memref<32x1024xbf16, #tpu.memory_space<vmem>>, vector<1x768xbf16>
    %23 = arith.extf %22 : vector<1x768xbf16> to vector<1x768xf32>
    %c0_17 = arith.constant 0 : index
    %c147 = arith.constant 147 : index
    %24 = vector.load %arg6[%c0_17, %c147] : memref<32x1024xbf16, #tpu.memory_space<vmem>>, vector<1x768xbf16>
    %25 = arith.extf %24 : vector<1x768xbf16> to vector<1x768xf32>
    %26 = tpu.concatenate %9, %11, %13, %15, %17, %19, %21, %23, %25 in 0 : vector<1x768xf32>, vector<1x768xf32>, vector<1x768xf32>, vector<1x768xf32>, vector<1x768xf32>, vector<1x768xf32>, vector<1x768xf32>, vector<1x768xf32>, vector<1x768xf32> -> vector<9x768xf32>
    %27 = arith.truncf %26 : vector<9x768xf32> to vector<9x768xbf16>
    %c0_18 = arith.constant 0 : index
    %c0_19 = arith.constant 0 : index
    %c0_20 = arith.constant 0 : index
    %28 = vector.load %arg3[%c0_18, %c0_19, %c0_20] : memref<4x32x288xbf16, #tpu.memory_space<vmem>>, vector<1x16x9xbf16>
    %29 = vector.shape_cast %28 : vector<1x16x9xbf16> to vector<16x9xbf16>
    %c0_21 = arith.constant 0 : index
    %c0_22 = arith.constant 0 : index
    %c0_23 = arith.constant 0 : index
    %30 = vector.load %arg4[%c0_21, %c0_22, %c0_23] : memref<4x32x1xf32, #tpu.memory_space<vmem>>, vector<1x16x1xf32>
    %31 = vector.shape_cast %30 : vector<1x16x1xf32> to vector<16x1xf32>
    %cst_24 = arith.constant dense<0.000000e+00> : vector<16x768xf32>
    %32 = tpu.matmul %29, %27, %cst_24 {dimension_numbers = #tpu.dot_dimension_numbers<[1], [0], [0], [1], [0, 0, 1, 1], [], []>} : vector<16x9xbf16>, vector<9x768xbf16>, vector<16x768xf32> -> vector<16x768xf32>
    %33 = vector.broadcast %31 : vector<16x1xf32> to vector<16x768xf32>
    %34 = arith.addf %32, %33 : vector<16x768xf32>
    %cst_25 = arith.constant 0.000000e+00 : f32
    %35 = vector.broadcast %cst_25 : f32 to vector<16x768xf32>
    %36 = arith.maximumf %34, %35 : vector<16x768xf32>
    %37 = vector.broadcast %3 : vector<1x768xf32> to vector<16x768xf32>
    %38 = arith.mulf %36, %37 : vector<16x768xf32>
    %39 = arith.truncf %38 : vector<16x768xf32> to vector<16x768xbf16>
    %c0_26 = arith.constant 0 : index
    %c128_27 = arith.constant 128 : index
    %40 = vector.load %arg6[%c0_26, %c128_27] : memref<32x1024xbf16, #tpu.memory_space<vmem>>, vector<16x768xbf16>
    tpu.vector_store %arg6[%c0_26, %c128_27], %39 {strides = array<i32>} : memref<32x1024xbf16, #tpu.memory_space<vmem>>, vector<16x768xbf16>,
    %c0_28 = arith.constant 0 : index
    %c109_29 = arith.constant 109 : index
    %41 = vector.load %arg6[%c0_28, %c109_29] : memref<32x1024xbf16, #tpu.memory_space<vmem>>, vector<16x768xbf16>
    %c0_30 = arith.constant 0 : index
    %c0_31 = arith.constant 0 : index
    %42 = vector.load %arg7[%c0_30, %c0_31] : memref<288x768xbf16, #tpu.memory_space<vmem>>, vector<16x768xbf16>
    tpu.vector_store %arg7[%c0_30, %c0_31], %41 {strides = array<i32>} : memref<288x768xbf16, #tpu.memory_space<vmem>>, vector<16x768xbf16>,
    %c0_32 = arith.constant 0 : index
    %c110_33 = arith.constant 110 : index
    %43 = vector.load %arg6[%c0_32, %c110_33] : memref<32x1024xbf16, #tpu.memory_space<vmem>>, vector<16x768xbf16>
    %c16 = arith.constant 16 : index
    %c0_34 = arith.constant 0 : index
    %44 = vector.load %arg7[%c16, %c0_34] : memref<288x768xbf16, #tpu.memory_space<vmem>>, vector<16x768xbf16>
    tpu.vector_store %arg7[%c16, %c0_34], %43 {strides = array<i32>} : memref<288x768xbf16, #tpu.memory_space<vmem>>, vector<16x768xbf16>,
    %c0_35 = arith.constant 0 : index
    %c111_36 = arith.constant 111 : index
    %45 = vector.load %arg6[%c0_35, %c111_36] : memref<32x1024xbf16, #tpu.memory_space<vmem>>, vector<16x768xbf16>
    %c32 = arith.constant 32 : index
    %c0_37 = arith.constant 0 : index
    %46 = vector.load %arg7[%c32, %c0_37] : memref<288x768xbf16, #tpu.memory_space<vmem>>, vector<16x768xbf16>
    tpu.vector_store %arg7[%c32, %c0_37], %45 {strides = array<i32>} : memref<288x768xbf16, #tpu.memory_space<vmem>>, vector<16x768xbf16>,
    %c0_38 = arith.constant 0 : index
    %c127_39 = arith.constant 127 : index
    %47 = vector.load %arg6[%c0_38, %c127_39] : memref<32x1024xbf16, #tpu.memory_space<vmem>>, vector<16x768xbf16>
    %c48 = arith.constant 48 : index
    %c0_40 = arith.constant 0 : index
    %48 = vector.load %arg7[%c48, %c0_40] : memref<288x768xbf16, #tpu.memory_space<vmem>>, vector<16x768xbf16>
    tpu.vector_store %arg7[%c48, %c0_40], %47 {strides = array<i32>} : memref<288x768xbf16, #tpu.memory_space<vmem>>, vector<16x768xbf16>,
    %c0_41 = arith.constant 0 : index
    %c128_42 = arith.constant 128 : index
    %49 = vector.load %arg6[%c0_41, %c128_42] : memref<32x1024xbf16, #tpu.memory_space<vmem>>, vector<16x768xbf16>
    %c64 = arith.constant 64 : index
    %c0_43 = arith.constant 0 : index
    %50 = vector.load %arg7[%c64, %c0_43] : memref<288x768xbf16, #tpu.memory_space<vmem>>, vector<16x768xbf16>
    tpu.vector_store %arg7[%c64, %c0_43], %49 {strides = array<i32>} : memref<288x768xbf16, #tpu.memory_space<vmem>>, vector<16x768xbf16>,
    %c0_44 = arith.constant 0 : index
    %c129_45 = arith.constant 129 : index
    %51 = vector.load %arg6[%c0_44, %c129_45] : memref<32x1024xbf16, #tpu.memory_space<vmem>>, vector<16x768xbf16>
    %c80 = arith.constant 80 : index
    %c0_46 = arith.constant 0 : index
    %52 = vector.load %arg7[%c80, %c0_46] : memref<288x768xbf16, #tpu.memory_space<vmem>>, vector<16x768xbf16>
    tpu.vector_store %arg7[%c80, %c0_46], %51 {strides = array<i32>} : memref<288x768xbf16, #tpu.memory_space<vmem>>, vector<16x768xbf16>,
    %c0_47 = arith.constant 0 : index
    %c145_48 = arith.constant 145 : index
    %53 = vector.load %arg6[%c0_47, %c145_48] : memref<32x1024xbf16, #tpu.memory_space<vmem>>, vector<16x768xbf16>
    %c96 = arith.constant 96 : index
    %c0_49 = arith.constant 0 : index
    %54 = vector.load %arg7[%c96, %c0_49] : memref<288x768xbf16, #tpu.memory_space<vmem>>, vector<16x768xbf16>
    tpu.vector_store %arg7[%c96, %c0_49], %53 {strides = array<i32>} : memref<288x768xbf16, #tpu.memory_space<vmem>>, vector<16x768xbf16>,
    %c0_50 = arith.constant 0 : index
    %c146_51 = arith.constant 146 : index
    %55 = vector.load %arg6[%c0_50, %c146_51] : memref<32x1024xbf16, #tpu.memory_space<vmem>>, vector<16x768xbf16>
    %c112 = arith.constant 112 : index
    %c0_52 = arith.constant 0 : index
    %56 = vector.load %arg7[%c112, %c0_52] : memref<288x768xbf16, #tpu.memory_space<vmem>>, vector<16x768xbf16>
    tpu.vector_store %arg7[%c112, %c0_52], %55 {strides = array<i32>} : memref<288x768xbf16, #tpu.memory_space<vmem>>, vector<16x768xbf16>,
    %c0_53 = arith.constant 0 : index
    %c147_54 = arith.constant 147 : index
    %57 = vector.load %arg6[%c0_53, %c147_54] : memref<32x1024xbf16, #tpu.memory_space<vmem>>, vector<16x768xbf16>
    %c128_55 = arith.constant 128 : index
    %c0_56 = arith.constant 0 : index
    %58 = vector.load %arg7[%c128_55, %c0_56] : memref<288x768xbf16, #tpu.memory_space<vmem>>, vector<16x768xbf16>
    tpu.vector_store %arg7[%c128_55, %c0_56], %57 {strides = array<i32>} : memref<288x768xbf16, #tpu.memory_space<vmem>>, vector<16x768xbf16>,
    %c0_57 = arith.constant 0 : index
    %c0_58 = arith.constant 0 : index
    %59 = vector.load %arg7[%c0_57, %c0_58] : memref<288x768xbf16, #tpu.memory_space<vmem>>, vector<144x768xbf16>
    %c1 = arith.constant 1 : index
    %c0_59 = arith.constant 0 : index
    %c0_60 = arith.constant 0 : index
    %60 = vector.load %arg3[%c1, %c0_59, %c0_60] : memref<4x32x288xbf16, #tpu.memory_space<vmem>>, vector<1x32x144xbf16>
    %61 = vector.shape_cast %60 : vector<1x32x144xbf16> to vector<32x144xbf16>
    %c1_61 = arith.constant 1 : index
    %c0_62 = arith.constant 0 : index
    %c0_63 = arith.constant 0 : index
    %62 = vector.load %arg4[%c1_61, %c0_62, %c0_63] : memref<4x32x1xf32, #tpu.memory_space<vmem>>, vector<1x32x1xf32>
    %63 = vector.shape_cast %62 : vector<1x32x1xf32> to vector<32x1xf32>
    %cst_64 = arith.constant dense<0.000000e+00> : vector<32x768xf32>
    %64 = tpu.matmul %61, %59, %cst_64 {dimension_numbers = #tpu.dot_dimension_numbers<[1], [0], [0], [1], [0, 0, 1, 1], [], []>} : vector<32x144xbf16>, vector<144x768xbf16>, vector<32x768xf32> -> vector<32x768xf32>
    %65 = vector.broadcast %63 : vector<32x1xf32> to vector<32x768xf32>
    %66 = arith.addf %64, %65 : vector<32x768xf32>
    %cst_65 = arith.constant 0.000000e+00 : f32
    %67 = vector.broadcast %cst_65 : f32 to vector<32x768xf32>
    %68 = arith.maximumf %66, %67 : vector<32x768xf32>
    %69 = vector.broadcast %3 : vector<1x768xf32> to vector<32x768xf32>
    %70 = arith.mulf %68, %69 : vector<32x768xf32>
    %71 = arith.truncf %70 : vector<32x768xf32> to vector<32x768xbf16>
    %c0_66 = arith.constant 0 : index
    %c128_67 = arith.constant 128 : index
    %72 = vector.load %arg6[%c0_66, %c128_67] : memref<32x1024xbf16, #tpu.memory_space<vmem>>, vector<32x768xbf16>
    tpu.vector_store %arg6[%c0_66, %c128_67], %71 {strides = array<i32>} : memref<32x1024xbf16, #tpu.memory_space<vmem>>, vector<32x768xbf16>,
    %c0_68 = arith.constant 0 : index
    %c109_69 = arith.constant 109 : index
    %73 = vector.load %arg6[%c0_68, %c109_69] : memref<32x1024xbf16, #tpu.memory_space<vmem>>, vector<32x768xbf16>
    %c0_70 = arith.constant 0 : index
    %c0_71 = arith.constant 0 : index
    %74 = vector.load %arg7[%c0_70, %c0_71] : memref<288x768xbf16, #tpu.memory_space<vmem>>, vector<32x768xbf16>
    tpu.vector_store %arg7[%c0_70, %c0_71], %73 {strides = array<i32>} : memref<288x768xbf16, #tpu.memory_space<vmem>>, vector<32x768xbf16>,
    %c0_72 = arith.constant 0 : index
    %c110_73 = arith.constant 110 : index
    %75 = vector.load %arg6[%c0_72, %c110_73] : memref<32x1024xbf16, #tpu.memory_space<vmem>>, vector<32x768xbf16>
    %c32_74 = arith.constant 32 : index
    %c0_75 = arith.constant 0 : index
    %76 = vector.load %arg7[%c32_74, %c0_75] : memref<288x768xbf16, #tpu.memory_space<vmem>>, vector<32x768xbf16>
    tpu.vector_store %arg7[%c32_74, %c0_75], %75 {strides = array<i32>} : memref<288x768xbf16, #tpu.memory_space<vmem>>, vector<32x768xbf16>,
    %c0_76 = arith.constant 0 : index
    %c111_77 = arith.constant 111 : index
    %77 = vector.load %arg6[%c0_76, %c111_77] : memref<32x1024xbf16, #tpu.memory_space<vmem>>, vector<32x768xbf16>
    %c64_78 = arith.constant 64 : index
    %c0_79 = arith.constant 0 : index
    %78 = vector.load %arg7[%c64_78, %c0_79] : memref<288x768xbf16, #tpu.memory_space<vmem>>, vector<32x768xbf16>
    tpu.vector_store %arg7[%c64_78, %c0_79], %77 {strides = array<i32>} : memref<288x768xbf16, #tpu.memory_space<vmem>>, vector<32x768xbf16>,
    %c0_80 = arith.constant 0 : index
    %c127_81 = arith.constant 127 : index
    %79 = vector.load %arg6[%c0_80, %c127_81] : memref<32x1024xbf16, #tpu.memory_space<vmem>>, vector<32x768xbf16>
    %c96_82 = arith.constant 96 : index
    %c0_83 = arith.constant 0 : index
    %80 = vector.load %arg7[%c96_82, %c0_83] : memref<288x768xbf16, #tpu.memory_space<vmem>>, vector<32x768xbf16>
    tpu.vector_store %arg7[%c96_82, %c0_83], %79 {strides = array<i32>} : memref<288x768xbf16, #tpu.memory_space<vmem>>, vector<32x768xbf16>,
    %c0_84 = arith.constant 0 : index
    %c128_85 = arith.constant 128 : index
    %81 = vector.load %arg6[%c0_84, %c128_85] : memref<32x1024xbf16, #tpu.memory_space<vmem>>, vector<32x768xbf16>
    %c128_86 = arith.constant 128 : index
    %c0_87 = arith.constant 0 : index
    %82 = vector.load %arg7[%c128_86, %c0_87] : memref<288x768xbf16, #tpu.memory_space<vmem>>, vector<32x768xbf16>
    tpu.vector_store %arg7[%c128_86, %c0_87], %81 {strides = array<i32>} : memref<288x768xbf16, #tpu.memory_space<vmem>>, vector<32x768xbf16>,
    %c0_88 = arith.constant 0 : index
    %c129_89 = arith.constant 129 : index
    %83 = vector.load %arg6[%c0_88, %c129_89] : memref<32x1024xbf16, #tpu.memory_space<vmem>>, vector<32x768xbf16>
    %c160 = arith.constant 160 : index
    %c0_90 = arith.constant 0 : index
    %84 = vector.load %arg7[%c160, %c0_90] : memref<288x768xbf16, #tpu.memory_space<vmem>>, vector<32x768xbf16>
    tpu.vector_store %arg7[%c160, %c0_90], %83 {strides = array<i32>} : memref<288x768xbf16, #tpu.memory_space<vmem>>, vector<32x768xbf16>,
    %c0_91 = arith.constant 0 : index
    %c145_92 = arith.constant 145 : index
    %85 = vector.load %arg6[%c0_91, %c145_92] : memref<32x1024xbf16, #tpu.memory_space<vmem>>, vector<32x768xbf16>
    %c192 = arith.constant 192 : index
    %c0_93 = arith.constant 0 : index
    %86 = vector.load %arg7[%c192, %c0_93] : memref<288x768xbf16, #tpu.memory_space<vmem>>, vector<32x768xbf16>
    tpu.vector_store %arg7[%c192, %c0_93], %85 {strides = array<i32>} : memref<288x768xbf16, #tpu.memory_space<vmem>>, vector<32x768xbf16>,
    %c0_94 = arith.constant 0 : index
    %c146_95 = arith.constant 146 : index
    %87 = vector.load %arg6[%c0_94, %c146_95] : memref<32x1024xbf16, #tpu.memory_space<vmem>>, vector<32x768xbf16>
    %c224 = arith.constant 224 : index
    %c0_96 = arith.constant 0 : index
    %88 = vector.load %arg7[%c224, %c0_96] : memref<288x768xbf16, #tpu.memory_space<vmem>>, vector<32x768xbf16>
    tpu.vector_store %arg7[%c224, %c0_96], %87 {strides = array<i32>} : memref<288x768xbf16, #tpu.memory_space<vmem>>, vector<32x768xbf16>,
    %c0_97 = arith.constant 0 : index
    %c147_98 = arith.constant 147 : index
    %89 = vector.load %arg6[%c0_97, %c147_98] : memref<32x1024xbf16, #tpu.memory_space<vmem>>, vector<32x768xbf16>
    %c256 = arith.constant 256 : index
    %c0_99 = arith.constant 0 : index
    %90 = vector.load %arg7[%c256, %c0_99] : memref<288x768xbf16, #tpu.memory_space<vmem>>, vector<32x768xbf16>
    tpu.vector_store %arg7[%c256, %c0_99], %89 {strides = array<i32>} : memref<288x768xbf16, #tpu.memory_space<vmem>>, vector<32x768xbf16>,
    %c0_100 = arith.constant 0 : index
    %c0_101 = arith.constant 0 : index
    %91 = vector.load %arg7[%c0_100, %c0_101] : memref<288x768xbf16, #tpu.memory_space<vmem>>, vector<288x768xbf16>
    %c2 = arith.constant 2 : index
    %c0_102 = arith.constant 0 : index
    %c0_103 = arith.constant 0 : index
    %92 = vector.load %arg3[%c2, %c0_102, %c0_103] : memref<4x32x288xbf16, #tpu.memory_space<vmem>>, vector<1x16x288xbf16>
    %93 = vector.shape_cast %92 : vector<1x16x288xbf16> to vector<16x288xbf16>
    %c2_104 = arith.constant 2 : index
    %c0_105 = arith.constant 0 : index
    %c0_106 = arith.constant 0 : index
    %94 = vector.load %arg4[%c2_104, %c0_105, %c0_106] : memref<4x32x1xf32, #tpu.memory_space<vmem>>, vector<1x16x1xf32>
    %95 = vector.shape_cast %94 : vector<1x16x1xf32> to vector<16x1xf32>
    %cst_107 = arith.constant dense<0.000000e+00> : vector<16x768xf32>
    %96 = tpu.matmul %93, %91, %cst_107 {dimension_numbers = #tpu.dot_dimension_numbers<[1], [0], [0], [1], [0, 0, 1, 1], [], []>} : vector<16x288xbf16>, vector<288x768xbf16>, vector<16x768xf32> -> vector<16x768xf32>
    %97 = vector.broadcast %95 : vector<16x1xf32> to vector<16x768xf32>
    %98 = arith.addf %96, %97 : vector<16x768xf32>
    %cst_108 = arith.constant 0.000000e+00 : f32
    %99 = vector.broadcast %cst_108 : f32 to vector<16x768xf32>
    %100 = arith.maximumf %98, %99 : vector<16x768xf32>
    %101 = vector.broadcast %3 : vector<1x768xf32> to vector<16x768xf32>
    %102 = arith.mulf %100, %101 : vector<16x768xf32>
    %103 = arith.truncf %102 : vector<16x768xf32> to vector<16x768xbf16>
    %c0_109 = arith.constant 0 : index
    %c128_110 = arith.constant 128 : index
    %104 = vector.load %arg6[%c0_109, %c128_110] : memref<32x1024xbf16, #tpu.memory_space<vmem>>, vector<16x768xbf16>
    tpu.vector_store %arg6[%c0_109, %c128_110], %103 {strides = array<i32>} : memref<32x1024xbf16, #tpu.memory_space<vmem>>, vector<16x768xbf16>,
    %c0_111 = arith.constant 0 : index
    %c109_112 = arith.constant 109 : index
    %105 = vector.load %arg6[%c0_111, %c109_112] : memref<32x1024xbf16, #tpu.memory_space<vmem>>, vector<16x768xbf16>
    %c0_113 = arith.constant 0 : index
    %c0_114 = arith.constant 0 : index
    %106 = vector.load %arg7[%c0_113, %c0_114] : memref<288x768xbf16, #tpu.memory_space<vmem>>, vector<16x768xbf16>
    tpu.vector_store %arg7[%c0_113, %c0_114], %105 {strides = array<i32>} : memref<288x768xbf16, #tpu.memory_space<vmem>>, vector<16x768xbf16>,
    %c0_115 = arith.constant 0 : index
    %c110_116 = arith.constant 110 : index
    %107 = vector.load %arg6[%c0_115, %c110_116] : memref<32x1024xbf16, #tpu.memory_space<vmem>>, vector<16x768xbf16>
    %c16_117 = arith.constant 16 : index
    %c0_118 = arith.constant 0 : index
    %108 = vector.load %arg7[%c16_117, %c0_118] : memref<288x768xbf16, #tpu.memory_space<vmem>>, vector<16x768xbf16>
    tpu.vector_store %arg7[%c16_117, %c0_118], %107 {strides = array<i32>} : memref<288x768xbf16, #tpu.memory_space<vmem>>, vector<16x768xbf16>,
    %c0_119 = arith.constant 0 : index
    %c111_120 = arith.constant 111 : index
    %109 = vector.load %arg6[%c0_119, %c111_120] : memref<32x1024xbf16, #tpu.memory_space<vmem>>, vector<16x768xbf16>
    %c32_121 = arith.constant 32 : index
    %c0_122 = arith.constant 0 : index
    %110 = vector.load %arg7[%c32_121, %c0_122] : memref<288x768xbf16, #tpu.memory_space<vmem>>, vector<16x768xbf16>
    tpu.vector_store %arg7[%c32_121, %c0_122], %109 {strides = array<i32>} : memref<288x768xbf16, #tpu.memory_space<vmem>>, vector<16x768xbf16>,
    %c0_123 = arith.constant 0 : index
    %c127_124 = arith.constant 127 : index
    %111 = vector.load %arg6[%c0_123, %c127_124] : memref<32x1024xbf16, #tpu.memory_space<vmem>>, vector<16x768xbf16>
    %c48_125 = arith.constant 48 : index
    %c0_126 = arith.constant 0 : index
    %112 = vector.load %arg7[%c48_125, %c0_126] : memref<288x768xbf16, #tpu.memory_space<vmem>>, vector<16x768xbf16>
    tpu.vector_store %arg7[%c48_125, %c0_126], %111 {strides = array<i32>} : memref<288x768xbf16, #tpu.memory_space<vmem>>, vector<16x768xbf16>,
    %c0_127 = arith.constant 0 : index
    %c128_128 = arith.constant 128 : index
    %113 = vector.load %arg6[%c0_127, %c128_128] : memref<32x1024xbf16, #tpu.memory_space<vmem>>, vector<16x768xbf16>
    %c64_129 = arith.constant 64 : index
    %c0_130 = arith.constant 0 : index
    %114 = vector.load %arg7[%c64_129, %c0_130] : memref<288x768xbf16, #tpu.memory_space<vmem>>, vector<16x768xbf16>
    tpu.vector_store %arg7[%c64_129, %c0_130], %113 {strides = array<i32>} : memref<288x768xbf16, #tpu.memory_space<vmem>>, vector<16x768xbf16>,
    %c0_131 = arith.constant 0 : index
    %c129_132 = arith.constant 129 : index
    %115 = vector.load %arg6[%c0_131, %c129_132] : memref<32x1024xbf16, #tpu.memory_space<vmem>>, vector<16x768xbf16>
    %c80_133 = arith.constant 80 : index
    %c0_134 = arith.constant 0 : index
    %116 = vector.load %arg7[%c80_133, %c0_134] : memref<288x768xbf16, #tpu.memory_space<vmem>>, vector<16x768xbf16>
    tpu.vector_store %arg7[%c80_133, %c0_134], %115 {strides = array<i32>} : memref<288x768xbf16, #tpu.memory_space<vmem>>, vector<16x768xbf16>,
    %c0_135 = arith.constant 0 : index
    %c145_136 = arith.constant 145 : index
    %117 = vector.load %arg6[%c0_135, %c145_136] : memref<32x1024xbf16, #tpu.memory_space<vmem>>, vector<16x768xbf16>
    %c96_137 = arith.constant 96 : index
    %c0_138 = arith.constant 0 : index
    %118 = vector.load %arg7[%c96_137, %c0_138] : memref<288x768xbf16, #tpu.memory_space<vmem>>, vector<16x768xbf16>
    tpu.vector_store %arg7[%c96_137, %c0_138], %117 {strides = array<i32>} : memref<288x768xbf16, #tpu.memory_space<vmem>>, vector<16x768xbf16>,
    %c0_139 = arith.constant 0 : index
    %c146_140 = arith.constant 146 : index
    %119 = vector.load %arg6[%c0_139, %c146_140] : memref<32x1024xbf16, #tpu.memory_space<vmem>>, vector<16x768xbf16>
    %c112_141 = arith.constant 112 : index
    %c0_142 = arith.constant 0 : index
    %120 = vector.load %arg7[%c112_141, %c0_142] : memref<288x768xbf16, #tpu.memory_space<vmem>>, vector<16x768xbf16>
    tpu.vector_store %arg7[%c112_141, %c0_142], %119 {strides = array<i32>} : memref<288x768xbf16, #tpu.memory_space<vmem>>, vector<16x768xbf16>,
    %c0_143 = arith.constant 0 : index
    %c147_144 = arith.constant 147 : index
    %121 = vector.load %arg6[%c0_143, %c147_144] : memref<32x1024xbf16, #tpu.memory_space<vmem>>, vector<16x768xbf16>
    %c128_145 = arith.constant 128 : index
    %c0_146 = arith.constant 0 : index
    %122 = vector.load %arg7[%c128_145, %c0_146] : memref<288x768xbf16, #tpu.memory_space<vmem>>, vector<16x768xbf16>
    tpu.vector_store %arg7[%c128_145, %c0_146], %121 {strides = array<i32>} : memref<288x768xbf16, #tpu.memory_space<vmem>>, vector<16x768xbf16>,
    %c0_147 = arith.constant 0 : index
    %c0_148 = arith.constant 0 : index
    %123 = vector.load %arg7[%c0_147, %c0_148] : memref<288x768xbf16, #tpu.memory_space<vmem>>, vector<144x768xbf16>
    %c3 = arith.constant 3 : index
    %c0_149 = arith.constant 0 : index
    %c0_150 = arith.constant 0 : index
    %124 = vector.load %arg3[%c3, %c0_149, %c0_150] : memref<4x32x288xbf16, #tpu.memory_space<vmem>>, vector<1x8x144xbf16>
    %125 = vector.shape_cast %124 : vector<1x8x144xbf16> to vector<8x144xbf16>
    %c3_151 = arith.constant 3 : index
    %c0_152 = arith.constant 0 : index
    %c0_153 = arith.constant 0 : index
    %126 = vector.load %arg4[%c3_151, %c0_152, %c0_153] : memref<4x32x1xf32, #tpu.memory_space<vmem>>, vector<1x8x1xf32>
    %127 = vector.shape_cast %126 : vector<1x8x1xf32> to vector<8x1xf32>
    %cst_154 = arith.constant dense<0.000000e+00> : vector<8x768xf32>
    %128 = tpu.matmul %125, %123, %cst_154 {dimension_numbers = #tpu.dot_dimension_numbers<[1], [0], [0], [1], [0, 0, 1, 1], [], []>} : vector<8x144xbf16>, vector<144x768xbf16>, vector<8x768xf32> -> vector<8x768xf32>
    %129 = vector.broadcast %127 : vector<8x1xf32> to vector<8x768xf32>
    %130 = arith.addf %128, %129 : vector<8x768xf32>
    %131 = arith.negf %130 : vector<8x768xf32>
    %132 = math.exp %131 : vector<8x768xf32>
    %cst_155 = arith.constant 1.000000e+00 : f32
    %133 = vector.broadcast %cst_155 : f32 to vector<8x768xf32>
    %134 = arith.addf %133, %132 : vector<8x768xf32>
    %135 = arith.divf %133, %134 : vector<8x768xf32>
    %136 = vector.broadcast %3 : vector<1x768xf32> to vector<8x768xf32>
    %137 = arith.mulf %135, %136 : vector<8x768xf32>
    %138 = vector.shape_cast %137 : vector<8x768xf32> to vector<1x8x768xf32>
    %c0_156 = arith.constant 0 : index
    %c0_157 = arith.constant 0 : index
    %c0_158 = arith.constant 0 : index
    %139 = vector.load %arg5[%c0_156, %c0_157, %c0_158] : memref<1x8x768xf32, #tpu.memory_space<vmem>>, vector<1x8x768xf32>
    tpu.vector_store %arg5[%c0_156, %c0_157, %c0_158], %138 {strides = array<i32>} : memref<1x8x768xf32, #tpu.memory_space<vmem>>, vector<1x8x768xf32>,
    return
  }
  func.func @transform_0(%arg0: i32) -> (i32, i32, i32) {
    %c0_i32 = arith.constant 0 : i32
    %c0_i32_0 = arith.constant 0 : i32
    %c0_i32_1 = arith.constant 0 : i32
    return %arg0, %c0_i32, %c0_i32_0 : i32, i32, i32
  }
  func.func @transform_1(%arg0: i32) -> (i32, i32) {
    %c0_i32 = arith.constant 0 : i32
    %c0_i32_0 = arith.constant 0 : i32
    %c0_i32_1 = arith.constant 0 : i32
    return %c0_i32, %c0_i32_0 : i32, i32
  }
  func.func @transform_2(%arg0: i32) -> (i32, i32, i32) {
    %c0_i32 = arith.constant 0 : i32
    %c0_i32_0 = arith.constant 0 : i32
    %c0_i32_1 = arith.constant 0 : i32
    %c0_i32_2 = arith.constant 0 : i32
    return %c0_i32, %c0_i32_0, %c0_i32_1 : i32, i32, i32
  }
  func.func @transform_3(%arg0: i32) -> (i32, i32, i32) {
    %c0_i32 = arith.constant 0 : i32
    %c0_i32_0 = arith.constant 0 : i32
    %c0_i32_1 = arith.constant 0 : i32
    %c0_i32_2 = arith.constant 0 : i32
    return %c0_i32, %c0_i32_0, %c0_i32_1 : i32, i32, i32
  }
  func.func @transform_4(%arg0: i32) -> (i32, i32, i32) {
    %c0_i32 = arith.constant 0 : i32
    %c0_i32_0 = arith.constant 0 : i32
    %c0_i32_1 = arith.constant 0 : i32
    return %arg0, %c0_i32, %c0_i32_0 : i32, i32, i32
  }
}

</mosaic_0001>

<llo_original>
// kernel: masknet_forward.1
$region0: #{masknet_forward.1}
  #allocation0 [shape = 'u32[]', space=smem, size = 0x4, offset = 0x4, fixed_abs, tag = 'smem constant byte address 0x4 - core index']
  #allocation1 [shape = 'u32[144,128]{1,0:T(1,128)}', space=vmem, size = 0x12000, scoped, tag = 'internal scratch']
  #allocation2 [shape = 'bf16[32,1024]{1,0:T(16,128)(2,1)}', space=vmem, size = 0x10000, scoped, tag = 'scratch operand']
  #allocation3 [shape = 'bf16[288,768]{1,0:T(16,128)(2,1)}', space=vmem, size = 0x6c000, scoped, tag = 'scratch operand']
  %s0 = inlined_call_operand.vmem [shape: f32[2,1,768], index: 0, kind: input, shape index: {}]
  %s1 = inlined_call_operand.vmem [shape: f32[1,768], index: 1, kind: input, shape index: {}]
  %s2 = inlined_call_operand.vmem [shape: bf16[4,32,288], index: 2, kind: input, shape index: {}]
  %s3 = inlined_call_operand.vmem [shape: f32[4,32,1], index: 3, kind: input, shape index: {}]
  %s4 = inlined_call_operand.vmem [shape: f32[2,8,768], index: 4, kind: output, shape index: {}]
  %s5 = sld [smem:[#allocation0]]
  $region49: #{masknet_forward.1} parent=0
    _
  %s7 = ssub.s32 1, %s5
  %s8 = scalar_select 0, %s7, %s5
  loop: start=0, step=1, limit=4
  $region2: #{masknet_forward.1} parent=0 // loop_pre_header
    _
  $region3: #{masknet_forward.1} parent=0 // loop_header
    %s10 = sphi 0, %s14
    %p11 = scmp.ge.s32.totalorder %s10, 4
    %s20 = sphi 0, %s22
    %s23 = sphi 0, %s20
    %s24 = sphi 0, %s23
    %s40 = sphi 0, %s24
    %s44 = sphi 0, %s44
    %s46 = sphi 0, %s44
    %s47 = sphi 0, %s46
    %s61 = sphi 0, %s47
    %s65 = sphi 0, %s65
    %s67 = sphi 0, %s65
    %s68 = sphi 0, %s67
    %s82 = sphi 0, %s68
    %s86 = sphi 0, %s86
    %s88 = sphi 0, %s86
    %s89 = sphi 0, %s88
    %s103 = sphi 0, %s89
    %s109 = sphi 0, %s111
    %s112 = sphi 0, %s109
    %s113 = sphi 0, %s112
    %s129 = sphi 0, %s113
  $region4: #{masknet_forward.1} parent=0 // loop_header_branch
    %13 = sbr.rel (%p11) target = $region8
  $region5: #{masknet_forward.1} parent=0 // loop_body
    %s15 = ssub.s32 %s10, 1
    %s16 = ssub.s32 %s10, 2
    %s17 = sadd.s32 %s10, 1
    %s18 = ssub.s32 %s10, %s17
    %p19 = scmp.eq.s32.totalorder %s18, 0
    %s21 = sadd.s32 %s20, 1
    %s22 = scalar_select %p19, %s20, %s21
    %p25 = pneg %p19
    %p26 = scmp.eq.s32.totalorder %s10, 1
    %p27 = por %p25, %p26
    %p28 = scmp.ne.s32.totalorder %s20, %s23
    %p29 = scmp.eq.s32.totalorder %s10, 0
    %p30 = por %p28, %p29
    %p31 = scmp.ne.s32.totalorder %s20, %s23
    %p32 = scmp.eq.s32.totalorder %s15, 1
    %p33 = por %p31, %p32
    %p34 = scmp.ne.s32.totalorder %s23, %s24
    %p35 = scmp.eq.s32.totalorder %s15, 0
    %p36 = por %p34, %p35
    %p37 = scmp.ne.s32.totalorder %s23, %s24
    %p38 = scmp.eq.s32.totalorder %s16, 1
    %p39 = por %p37, %p38
    %p41 = scmp.ne.s32.totalorder %s24, %s40
    %p42 = scmp.eq.s32.totalorder %s16, 0
    %p43 = por %p41, %p42
    %s45 = sadd.s32 %s44, 1
    %p48 = scmp.eq.s32.totalorder %s10, 1
    %p49 = scmp.ne.s32.totalorder %s44, %s46
    %p50 = scmp.eq.s32.totalorder %s10, 0
    %p51 = por %p49, %p50
    %p52 = scmp.ne.s32.totalorder %s44, %s46
    %p53 = scmp.eq.s32.totalorder %s15, 1
    %p54 = por %p52, %p53
    %p55 = scmp.ne.s32.totalorder %s46, %s47
    %p56 = scmp.eq.s32.totalorder %s15, 0
    %p57 = por %p55, %p56
    %p58 = scmp.ne.s32.totalorder %s46, %s47
    %p59 = scmp.eq.s32.totalorder %s16, 1
    %p60 = por %p58, %p59
    %p62 = scmp.ne.s32.totalorder %s47, %s61
    %p63 = scmp.eq.s32.totalorder %s16, 0
    %p64 = por %p62, %p63
    %s66 = sadd.s32 %s65, 1
    %p69 = scmp.eq.s32.totalorder %s10, 1
    %p70 = scmp.ne.s32.totalorder %s65, %s67
    %p71 = scmp.eq.s32.totalorder %s10, 0
    %p72 = por %p70, %p71
    %p73 = scmp.ne.s32.totalorder %s65, %s67
    %p74 = scmp.eq.s32.totalorder %s15, 1
    %p75 = por %p73, %p74
    %p76 = scmp.ne.s32.totalorder %s67, %s68
    %p77 = scmp.eq.s32.totalorder %s15, 0
    %p78 = por %p76, %p77
    %p79 = scmp.ne.s32.totalorder %s67, %s68
    %p80 = scmp.eq.s32.totalorder %s16, 1
    %p81 = por %p79, %p80
    %p83 = scmp.ne.s32.totalorder %s68, %s82
    %p84 = scmp.eq.s32.totalorder %s16, 0
    %p85 = por %p83, %p84
    %s87 = sadd.s32 %s86, 1
    %p90 = scmp.eq.s32.totalorder %s10, 1
    %p91 = scmp.ne.s32.totalorder %s86, %s88
    %p92 = scmp.eq.s32.totalorder %s10, 0
    %p93 = por %p91, %p92
    %p94 = scmp.ne.s32.totalorder %s86, %s88
    %p95 = scmp.eq.s32.totalorder %s15, 1
    %p96 = por %p94, %p95
    %p97 = scmp.ne.s32.totalorder %s88, %s89
    %p98 = scmp.eq.s32.totalorder %s15, 0
    %p99 = por %p97, %p98
    %p100 = scmp.ne.s32.totalorder %s88, %s89
    %p101 = scmp.eq.s32.totalorder %s16, 1
    %p102 = por %p100, %p101
    %p104 = scmp.ne.s32.totalorder %s89, %s103
    %p105 = scmp.eq.s32.totalorder %s16, 0
    %p106 = por %p104, %p105
    %s107 = ssub.s32 %s10, %s17
    %p108 = scmp.eq.s32.totalorder %s107, 0
    %s110 = sadd.s32 %s109, 1
    %s111 = scalar_select %p108, %s109, %s110
    %p114 = pneg %p108
    %p115 = scmp.eq.s32.totalorder %s10, 1
    %p116 = por %p114, %p115
    %p117 = scmp.ne.s32.totalorder %s109, %s112
    %p118 = scmp.eq.s32.totalorder %s10, 0
    %p119 = por %p117, %p118
    %p120 = scmp.ne.s32.totalorder %s109, %s112
    %p121 = scmp.eq.s32.totalorder %s15, 1
    %p122 = por %p120, %p121
    %p123 = scmp.ne.s32.totalorder %s112, %s113
    %p124 = scmp.eq.s32.totalorder %s15, 0
    %p125 = por %p123, %p124
    %p126 = scmp.ne.s32.totalorder %s112, %s113
    %p127 = scmp.eq.s32.totalorder %s16, 1
    %p128 = por %p126, %p127
    %p130 = scmp.ne.s32.totalorder %s113, %s129
    %p131 = scmp.eq.s32.totalorder %s16, 0
    %p132 = por %p130, %p131
    %p133 = scmp.le.s32.totalorder 1, %s10
    %p134 = scmp.lt.s32.totalorder %s10, 3
    %p135 = pnand %p133, %p134
    %p136 = pneg %p135
    // Predicated region
    $region9: #{masknet_forward.1} parent=5 // pred_check
      _
    $region10: #{masknet_forward.1} parent=5 // pred_check_branch
      %138 = sbr.rel (%p135) target = $region12
    $region11: #{masknet_forward.1} parent=5 // pred_region
      %s139 = ssub.s32 %s10, 1
      // Predicated region
      $region13: #{masknet_forward.1} parent=11 // pred_check
        %p140 = pneg %p57
      $region14: #{masknet_forward.1} parent=11 // pred_check_branch
        %142 = sbr.rel (%p140) target = $region16
      $region15: #{masknet_forward.1} parent=11 // pred_region
        _
      $region16: #{masknet_forward.1} parent=11 // pred_fallthru
        _
      // Predicated region
      $region17: #{masknet_forward.1} parent=11 // pred_check
        %p143 = pneg %p78
      $region18: #{masknet_forward.1} parent=11 // pred_check_branch
        %145 = sbr.rel (%p143) target = $region20
      $region19: #{masknet_forward.1} parent=11 // pred_region
        _
      $region20: #{masknet_forward.1} parent=11 // pred_fallthru
        _
      // Predicated region
      $region21: #{masknet_forward.1} parent=11 // pred_check
        %p146 = pneg %p99
      $region22: #{masknet_forward.1} parent=11 // pred_check_branch
        %148 = sbr.rel (%p146) target = $region24
      $region23: #{masknet_forward.1} parent=11 // pred_region
        _
      $region24: #{masknet_forward.1} parent=11 // pred_fallthru
        _
    $region12: #{masknet_forward.1} parent=5 // pred_fallthru
      _
    %p149 = scmp.lt.s32.totalorder %s10, 2
    // Predicated region
    $region25: #{masknet_forward.1} parent=5 // pred_check
      %p150 = pneg %p149
    $region26: #{masknet_forward.1} parent=5 // pred_check_branch
      %152 = sbr.rel (%p150) target = $region28
    $region27: #{masknet_forward.1} parent=5 // pred_region
      // Predicated region
      $region29: #{masknet_forward.1} parent=27 // pred_check
        %p153 = pneg %p30
      $region30: #{masknet_forward.1} parent=27 // pred_check_branch
        %155 = sbr.rel (%p153) target = $region32
      $region31: #{masknet_forward.1} parent=27 // pred_region
        %p156 = scmp.lt.s32.totalorder %s10, 1
        %s157 = scalar_select %p156, %s10, 1
        %s158 = smul.addr %s157, 6
        %s159 = scalar_lea.vmem %s0, %s158
      $region32: #{masknet_forward.1} parent=27 // pred_fallthru
        _
    $region28: #{masknet_forward.1} parent=5 // pred_fallthru
      _
    %p160 = scmp.le.s32.totalorder 1, %s10
    %p161 = scmp.lt.s32.totalorder %s10, 3
    %p162 = pnand %p160, %p161
    %p163 = pneg %p162
    // Predicated region
    $region33: #{masknet_forward.1} parent=5 // pred_check
      _
    $region34: #{masknet_forward.1} parent=5 // pred_check_branch
      %165 = sbr.rel (%p162) target = $region36
    $region35: #{masknet_forward.1} parent=5 // pred_region
      %s166 = ssub.s32 %s10, 1
      %p167 = scmp.lt.s32.totalorder %s15, 1
      %s168 = scalar_select %p167, %s15, 1
      %s169 = smul.addr %s168, 6
      %s170 = scalar_lea.vmem %s0, %s169
      %p171 = pneg %p36
      %p172 = pneg %p33
      %p173 = pneg %p57
      %p174 = pneg %p54
      %p175 = pneg %p78
      %p176 = pneg %p75
      %p177 = pneg %p99
      %p178 = pneg %p96
      %p179 = pneg %p125
      %p180 = pneg %p122
      %p181 = scmp.lt.s32.totalorder %s15, 1
      %s182 = scalar_select %p181, %s15, 1
      %s183 = smul.addr %s182, 6
      %s184 = smul.addr %s183, 8
      %s185 = scalar_lea.vmem %s4, %s184
      %p186 = scmp.lt.s32.totalorder %s15, 1
      %s187 = scalar_select %p186, %s15, 1
      %s188 = smul.addr %s187, 6
      %s189 = scalar_lea.vmem %s0, %s188
      %p190 = scmp.lt.s32.totalorder %s15, 1
      %s191 = scalar_select %p190, %s15, 1
      %s192 = smul.addr %s191, 6
      %s193 = smul.addr %s192, 8
      %s194 = scalar_lea.vmem %s4, %s193
      %196 = vst [vmem:[#allocation2] sm:$0xff] 0
      %197 = vst [vmem:[#allocation2 + $0x40] sm:$0xff] 0
      %198 = vst [vmem:[#allocation2 + $0x38] sm:$0xff] 0
      %199 = vst [vmem:[#allocation2 + $0x78] sm:$0xff] 0
      %v200 = vld [vmem:[%s1] sm:$0x3f]
      %v201 = vld [vmem:[%s189] sm:$0x3f]
      %v203 = vlaneseq
      %v204 = vshrl.u32 %v203, 7
      %v205 = vsub.s32 0, %v204
      %v206 = vrot.slane %v201, %v205
      %v207 = vlaneseq
      %v208 = vshrl.u32 %v207, 7
      %v209 = vsub.s32 1, %v208
      %v210 = vrot.slane %v201, %v209
      %v211 = vlaneseq
      %v212 = vshrl.u32 %v211, 7
      %v213 = vsub.s32 2, %v212
      %v214 = vrot.slane %v201, %v213
      %v215 = vlaneseq
      %v216 = vshrl.u32 %v215, 7
      %v217 = vsub.s32 3, %v216
      %v218 = vrot.slane %v201, %v217
      %v219 = vlaneseq
      %v220 = vshrl.u32 %v219, 7
      %v221 = vsub.s32 4, %v220
      %v222 = vrot.slane %v201, %v221
      %v223 = vlaneseq
      %v224 = vshrl.u32 %v223, 7
      %v225 = vsub.s32 5, %v224
      %v226 = vrot.slane %v201, %v225
      %v233 = vpack.c.bf16 %v206, %v206
      %v234 = vpack.c.bf16 %v210, %v210
      %v235 = vpack.c.bf16 %v214, %v214
      %v236 = vpack.c.bf16 %v218, %v218
      %v237 = vpack.c.bf16 %v222, %v222
      %v238 = vpack.c.bf16 %v226, %v226
      %vm239 = vcmask 1040384
      %vm240 = vsmask.f32 256
      %vm241 = vmand %vm239, %vm240
      %v242 = vld [vmem:[#allocation2 + $0x8] sm:$0x1]
      %v243 = vsel %vm241, %v233, %v242
      %244 = vst [vmem:[#allocation2 + $0x8] sm:$0x1] %v243
      %v245 = vld [vmem:[#allocation2 + $0x10] sm:$0x1]
      %v246 = vsel %vm241, %v234, %v245
      %247 = vst [vmem:[#allocation2 + $0x10] sm:$0x1] %v246
      %v248 = vld [vmem:[#allocation2 + $0x18] sm:$0x1]
      %v249 = vsel %vm241, %v235, %v248
      %250 = vst [vmem:[#allocation2 + $0x18] sm:$0x1] %v249
      %v251 = vld [vmem:[#allocation2 + $0x20] sm:$0x1]
      %v252 = vsel %vm241, %v236, %v251
      %253 = vst [vmem:[#allocation2 + $0x20] sm:$0x1] %v252
      %v254 = vld [vmem:[#allocation2 + $0x28] sm:$0x1]
      %v255 = vsel %vm241, %v237, %v254
      %256 = vst [vmem:[#allocation2 + $0x28] sm:$0x1] %v255
      %v257 = vld [vmem:[#allocation2 + $0x30] sm:$0x1]
      %v258 = vsel %vm241, %v238, %v257
      %259 = vst [vmem:[#allocation2 + $0x30] sm:$0x1] %v258
      %v260 = vld [vmem:[#allocation2] sm:$0x1]
      %v261 = vld [vmem:[#allocation2 + $0x8] sm:$0x1]
      %v262 = vld [vmem:[#allocation2 + $0x10] sm:$0x1]
      %v263 = vld [vmem:[#allocation2 + $0x18] sm:$0x1]
      %v264 = vld [vmem:[#allocation2 + $0x20] sm:$0x1]
      %v265 = vld [vmem:[#allocation2 + $0x28] sm:$0x1]
      %v266 = vld [vmem:[#allocation2 + $0x30] sm:$0x1]
      %v267 = vunpack.c.l.bf16 %v260
      %v268 = vunpack.c.l.bf16 %v261
      %v269 = vunpack.c.l.bf16 %v262
      %v270 = vunpack.c.l.bf16 %v263
      %v271 = vunpack.c.l.bf16 %v264
      %v272 = vunpack.c.l.bf16 %v265
      %v273 = vunpack.c.l.bf16 %v266
      %v274 = vld [vmem:[#allocation2 + $0x38] sm:$0x1]
      %v275 = vunpack.c.l.bf16 %v274
      %v283 = vrot.slane %v267, 7
      %v284 = vrot.slane %v268, 7
      %v285 = vrot.slane %v269, 7
      %v286 = vrot.slane %v270, 7
      %v287 = vrot.slane %v271, 7
      %v288 = vrot.slane %v272, 7
      %v289 = vrot.slane %v273, 7
      %290 = vrot.lane.b32.xlu0 %v283, 127
      %v291 = vpop.permute.xlu0 %290
      %292 = vrot.lane.b32.xlu0 %v284, 127
      %v293 = vpop.permute.xlu0 %292
      %294 = vrot.lane.b32.xlu0 %v285, 127
      %v295 = vpop.permute.xlu0 %294
      %296 = vrot.lane.b32.xlu0 %v286, 127
      %v297 = vpop.permute.xlu0 %296
      %298 = vrot.lane.b32.xlu0 %v287, 127
      %v299 = vpop.permute.xlu0 %298
      %300 = vrot.lane.b32.xlu0 %v288, 127
      %v301 = vpop.permute.xlu0 %300
      %302 = vrot.lane.b32.xlu0 %v289, 127
      %v303 = vpop.permute.xlu0 %302
      %vm304 = vcmask 1039360
      %v305 = vsel %vm304, %v291, %v293
      %v306 = vsel %vm304, %v293, %v295
      %v307 = vsel %vm304, %v295, %v297
      %v308 = vsel %vm304, %v297, %v299
      %v309 = vsel %vm304, %v299, %v301
      %v310 = vsel %vm304, %v301, %v303
      %v318 = vrot.slane %v267, 6
      %v319 = vrot.slane %v268, 6
      %v320 = vrot.slane %v269, 6
      %v321 = vrot.slane %v270, 6
      %v322 = vrot.slane %v271, 6
      %v323 = vrot.slane %v272, 6
      %v324 = vrot.slane %v273, 6
      %325 = vrot.lane.b32.xlu0 %v318, 126
      %v326 = vpop.permute.xlu0 %325
      %327 = vrot.lane.b32.xlu0 %v319, 126
      %v328 = vpop.permute.xlu0 %327
      %329 = vrot.lane.b32.xlu0 %v320, 126
      %v330 = vpop.permute.xlu0 %329
      %331 = vrot.lane.b32.xlu0 %v321, 126
      %v332 = vpop.permute.xlu0 %331
      %333 = vrot.lane.b32.xlu0 %v322, 126
      %v334 = vpop.permute.xlu0 %333
      %335 = vrot.lane.b32.xlu0 %v323, 126
      %v336 = vpop.permute.xlu0 %335
      %337 = vrot.lane.b32.xlu0 %v324, 126
      %v338 = vpop.permute.xlu0 %337
      %vm339 = vcmask 1031168
      %v340 = vsel %vm339, %v326, %v328
      %v341 = vsel %vm339, %v328, %v330
      %v342 = vsel %vm339, %v330, %v332
      %v343 = vsel %vm339, %v332, %v334
      %v344 = vsel %vm339, %v334, %v336
      %v345 = vsel %vm339, %v336, %v338
      %v353 = vrot.slane %v267, 5
      %v354 = vrot.slane %v268, 5
      %v355 = vrot.slane %v269, 5
      %v356 = vrot.slane %v270, 5
      %v357 = vrot.slane %v271, 5
      %v358 = vrot.slane %v272, 5
      %v359 = vrot.slane %v273, 5
      %360 = vrot.lane.b32.xlu0 %v353, 110
      %v361 = vpop.permute.xlu0 %360
      %362 = vrot.lane.b32.xlu0 %v354, 110
      %v363 = vpop.permute.xlu0 %362
      %364 = vrot.lane.b32.xlu0 %v355, 110
      %v365 = vpop.permute.xlu0 %364
      %366 = vrot.lane.b32.xlu0 %v356, 110
      %v367 = vpop.permute.xlu0 %366
      %368 = vrot.lane.b32.xlu0 %v357, 110
      %v369 = vpop.permute.xlu0 %368
      %370 = vrot.lane.b32.xlu0 %v358, 110
      %v371 = vpop.permute.xlu0 %370
      %372 = vrot.lane.b32.xlu0 %v359, 110
      %v373 = vpop.permute.xlu0 %372
      %vm374 = vcmask 900096
      %v375 = vsel %vm374, %v361, %v363
      %v376 = vsel %vm374, %v363, %v365
      %v377 = vsel %vm374, %v365, %v367
      %v378 = vsel %vm374, %v367, %v369
      %v379 = vsel %vm374, %v369, %v371
      %v380 = vsel %vm374, %v371, %v373
      %v388 = vrot.slane %v268, 4
      %v389 = vrot.slane %v269, 4
      %v390 = vrot.slane %v270, 4
      %v391 = vrot.slane %v271, 4
      %v392 = vrot.slane %v272, 4
      %v393 = vrot.slane %v273, 4
      %394 = vrot.lane.b32.xlu0 %v388, 109
      %v395 = vpop.permute.xlu0 %394
      %396 = vrot.lane.b32.xlu0 %v389, 109
      %v397 = vpop.permute.xlu0 %396
      %398 = vrot.lane.b32.xlu0 %v390, 109
      %v399 = vpop.permute.xlu0 %398
      %400 = vrot.lane.b32.xlu0 %v391, 109
      %v401 = vpop.permute.xlu0 %400
      %402 = vrot.lane.b32.xlu0 %v392, 109
      %v403 = vpop.permute.xlu0 %402
      %404 = vrot.lane.b32.xlu0 %v393, 109
      %v405 = vpop.permute.xlu0 %404
      %vm406 = vcmask 891904
      %v407 = vsel %vm406, %v395, %v397
      %v408 = vsel %vm406, %v397, %v399
      %v409 = vsel %vm406, %v399, %v401
      %v410 = vsel %vm406, %v401, %v403
      %v411 = vsel %vm406, %v403, %v405
      %v420 = vrot.slane %v268, 3
      %v421 = vrot.slane %v269, 3
      %v422 = vrot.slane %v270, 3
      %v423 = vrot.slane %v271, 3
      %v424 = vrot.slane %v272, 3
      %v425 = vrot.slane %v273, 3
      %v426 = vrot.slane %v275, 3
      %427 = vrot.lane.b32.xlu0 %v420, 108
      %v428 = vpop.permute.xlu0 %427
      %429 = vrot.lane.b32.xlu0 %v421, 108
      %v430 = vpop.permute.xlu0 %429
      %431 = vrot.lane.b32.xlu0 %v422, 108
      %v432 = vpop.permute.xlu0 %431
      %433 = vrot.lane.b32.xlu0 %v423, 108
      %v434 = vpop.permute.xlu0 %433
      %435 = vrot.lane.b32.xlu0 %v424, 108
      %v436 = vpop.permute.xlu0 %435
      %437 = vrot.lane.b32.xlu0 %v425, 108
      %v438 = vpop.permute.xlu0 %437
      %439 = vrot.lane.b32.xlu0 %v426, 108
      %v440 = vpop.permute.xlu0 %439
      %vm441 = vcmask 883712
      %v442 = vsel %vm441, %v428, %v430
      %v443 = vsel %vm441, %v430, %v432
      %v444 = vsel %vm441, %v432, %v434
      %v445 = vsel %vm441, %v434, %v436
      %v446 = vsel %vm441, %v436, %v438
      %v447 = vsel %vm441, %v438, %v440
      %v455 = vrot.slane %v268, 2
      %v456 = vrot.slane %v269, 2
      %v457 = vrot.slane %v270, 2
      %v458 = vrot.slane %v271, 2
      %v459 = vrot.slane %v272, 2
      %v460 = vrot.slane %v273, 2
      %v461 = vrot.slane %v275, 2
      %462 = vrot.lane.b32.xlu0 %v455, 92
      %v463 = vpop.permute.xlu0 %462
      %464 = vrot.lane.b32.xlu0 %v456, 92
      %v465 = vpop.permute.xlu0 %464
      %466 = vrot.lane.b32.xlu0 %v457, 92
      %v467 = vpop.permute.xlu0 %466
      %468 = vrot.lane.b32.xlu0 %v458, 92
      %v469 = vpop.permute.xlu0 %468
      %470 = vrot.lane.b32.xlu0 %v459, 92
      %v471 = vpop.permute.xlu0 %470
      %472 = vrot.lane.b32.xlu0 %v460, 92
      %v473 = vpop.permute.xlu0 %472
      %474 = vrot.lane.b32.xlu0 %v461, 92
      %v475 = vpop.permute.xlu0 %474
      %vm476 = vcmask 752640
      %v477 = vsel %vm476, %v463, %v465
      %v478 = vsel %vm476, %v465, %v467
      %v479 = vsel %vm476, %v467, %v469
      %v480 = vsel %vm476, %v469, %v471
      %v481 = vsel %vm476, %v471, %v473
      %v482 = vsel %vm476, %v473, %v475
      %v490 = vrot.slane %v268, 1
      %v491 = vrot.slane %v269, 1
      %v492 = vrot.slane %v270, 1
      %v493 = vrot.slane %v271, 1
      %v494 = vrot.slane %v272, 1
      %v495 = vrot.slane %v273, 1
      %v496 = vrot.slane %v275, 1
      %497 = vrot.lane.b32.xlu0 %v490, 91
      %v498 = vpop.permute.xlu0 %497
      %499 = vrot.lane.b32.xlu0 %v491, 91
      %v500 = vpop.permute.xlu0 %499
      %501 = vrot.lane.b32.xlu0 %v492, 91
      %v502 = vpop.permute.xlu0 %501
      %503 = vrot.lane.b32.xlu0 %v493, 91
      %v504 = vpop.permute.xlu0 %503
      %505 = vrot.lane.b32.xlu0 %v494, 91
      %v506 = vpop.permute.xlu0 %505
      %507 = vrot.lane.b32.xlu0 %v495, 91
      %v508 = vpop.permute.xlu0 %507
      %509 = vrot.lane.b32.xlu0 %v496, 91
      %v510 = vpop.permute.xlu0 %509
      %vm511 = vcmask 744448
      %v512 = vsel %vm511, %v498, %v500
      %v513 = vsel %vm511, %v500, %v502
      %v514 = vsel %vm511, %v502, %v504
      %v515 = vsel %vm511, %v504, %v506
      %v516 = vsel %vm511, %v506, %v508
      %v517 = vsel %vm511, %v508, %v510
      %525 = vrot.lane.b32.xlu0 %v268, 90
      %v526 = vpop.permute.xlu0 %525
      %527 = vrot.lane.b32.xlu0 %v269, 90
      %v528 = vpop.permute.xlu0 %527
      %529 = vrot.lane.b32.xlu0 %v270, 90
      %v530 = vpop.permute.xlu0 %529
      %531 = vrot.lane.b32.xlu0 %v271, 90
      %v532 = vpop.permute.xlu0 %531
      %533 = vrot.lane.b32.xlu0 %v272, 90
      %v534 = vpop.permute.xlu0 %533
      %535 = vrot.lane.b32.xlu0 %v273, 90
      %v536 = vpop.permute.xlu0 %535
      %537 = vrot.lane.b32.xlu0 %v275, 90
      %v538 = vpop.permute.xlu0 %537
      %vm539 = vcmask 736256
      %v540 = vsel %vm539, %v526, %v528
      %v541 = vsel %vm539, %v528, %v530
      %v542 = vsel %vm539, %v530, %v532
      %v543 = vsel %vm539, %v532, %v534
      %v544 = vsel %vm539, %v534, %v536
      %v545 = vsel %vm539, %v536, %v538
      %vm553 = vcmask 1040384
      %v554 = vsel %vm553, %v267, %v305
      %v555 = vsel %vm553, %v268, %v306
      %v556 = vsel %vm553, %v269, %v307
      %v557 = vsel %vm553, %v270, %v308
      %v558 = vsel %vm553, %v271, %v309
      %v559 = vsel %vm553, %v272, %v310
      %v560 = vsel %vm553, %v273, %v303
      %vm561 = vcmask 1041408
      %v562 = vsel %vm561, %v554, %v340
      %v563 = vsel %vm561, %v555, %v341
      %v564 = vsel %vm561, %v556, %v342
      %v565 = vsel %vm561, %v557, %v343
      %v566 = vsel %vm561, %v558, %v344
      %v567 = vsel %vm561, %v559, %v345
      %v568 = vsel %vm561, %v560, %v338
      %vm569 = vcmask 1042432
      %v570 = vsel %vm569, %v562, %v375
      %v571 = vsel %vm569, %v563, %v376
      %v572 = vsel %vm569, %v564, %v377
      %v573 = vsel %vm569, %v565, %v378
      %v574 = vsel %vm569, %v566, %v379
      %v575 = vsel %vm569, %v567, %v380
      %v576 = vsel %vm569, %v568, %v373
      %vm577 = vcmask 1043456
      %v578 = vsel %vm577, %v570, %v395
      %v579 = vsel %vm577, %v571, %v407
      %v580 = vsel %vm577, %v572, %v408
      %v581 = vsel %vm577, %v573, %v409
      %v582 = vsel %vm577, %v574, %v410
      %v583 = vsel %vm577, %v575, %v411
      %v584 = vsel %vm577, %v576, %v405
      %vm585 = vcmask 1044480
      %v586 = vsel %vm585, %v578, %v428
      %v587 = vsel %vm585, %v579, %v442
      %v588 = vsel %vm585, %v580, %v443
      %v589 = vsel %vm585, %v581, %v444
      %v590 = vsel %vm585, %v582, %v445
      %v591 = vsel %vm585, %v583, %v446
      %v592 = vsel %vm585, %v584, %v447
      %vm593 = vcmask 1045504
      %v594 = vsel %vm593, %v586, %v463
      %v595 = vsel %vm593, %v587, %v477
      %v596 = vsel %vm593, %v588, %v478
      %v597 = vsel %vm593, %v589, %v479
      %v598 = vsel %vm593, %v590, %v480
      %v599 = vsel %vm593, %v591, %v481
      %v600 = vsel %vm593, %v592, %v482
      %vm601 = vcmask 1046528
      %v602 = vsel %vm601, %v594, %v498
      %v603 = vsel %vm601, %v595, %v512
      %v604 = vsel %vm601, %v596, %v513
      %v605 = vsel %vm601, %v597, %v514
      %v606 = vsel %vm601, %v598, %v515
      %v607 = vsel %vm601, %v599, %v516
      %v608 = vsel %vm601, %v600, %v517
      %v609 = vpack.c.bf16 %v526, %v602
      %v610 = vpack.c.bf16 %v540, %v603
      %v611 = vpack.c.bf16 %v541, %v604
      %v612 = vpack.c.bf16 %v542, %v605
      %v613 = vpack.c.bf16 %v543, %v606
      %v614 = vpack.c.bf16 %v544, %v607
      %v615 = vpack.c.bf16 %v545, %v608
      %v616 = vld [vmem:[%s2] sm:$0xf]
      %v617 = vld [vmem:[%s2 + $0xc] sm:$0xf]
      %v618 = vld [vmem:[%s3] sm:$0xff]
      %v619 = vld [vmem:[%s3 + $0x8] sm:$0xff]
      %621 = vset.pattern.permute.xlu0 0
      %622 = vperm.xlu0 %621, %v618
      %v623 = vpop.permute.xlu0 %622
      %626 = vset.pattern.permute.xlu0 0
      %627 = vperm.xlu0 %626, %v619
      %v628 = vpop.permute.xlu0 %627
      %v632 = vunpack.c.l.b16 %v616
      %v633 = vunpack.c.l.b16 %v617
      %v634 = vpack.c.b16 %v633, %v632
      %642 = vrot.lane.b32.xlu0 %v609, 19
      %v643 = vpop.permute.xlu0 %642
      %644 = vrot.lane.b32.xlu0 %v610, 19
      %v645 = vpop.permute.xlu0 %644
      %646 = vrot.lane.b32.xlu0 %v611, 19
      %v647 = vpop.permute.xlu0 %646
      %648 = vrot.lane.b32.xlu0 %v612, 19
      %v649 = vpop.permute.xlu0 %648
      %650 = vrot.lane.b32.xlu0 %v613, 19
      %v651 = vpop.permute.xlu0 %650
      %652 = vrot.lane.b32.xlu0 %v614, 19
      %v653 = vpop.permute.xlu0 %652
      %654 = vrot.lane.b32.xlu0 %v615, 19
      %v655 = vpop.permute.xlu0 %654
      %vm656 = vcmask 154624
      %v657 = vsel %vm656, %v643, %v645
      %v658 = vsel %vm656, %v645, %v647
      %v659 = vsel %vm656, %v647, %v649
      %v660 = vsel %vm656, %v649, %v651
      %v661 = vsel %vm656, %v651, %v653
      %v662 = vsel %vm656, %v653, %v655
      %vm663 = vcmask 72704
      %v665 = vsel %vm663, %v634, 0
      %v667 = vsel %vm577, 4294967295, 65535
      %v668 = vsel %vm585, %v667, 0
      %v670 = vand.u32 %v657, %v668
      %v673 = vand.u32 %v658, %v668
      %v676 = vand.u32 %v659, %v668
      %v679 = vand.u32 %v660, %v668
      %v682 = vand.u32 %v661, %v668
      %v685 = vand.u32 %v662, %v668
      %687 = vmatprep.subr.bf16.mxu0 %v673
      %688 = vmatpush1.bf16.msra.mxu0 %v670
      %689 = vmatprep.subr.bf16.mxu0 0
      %690 = vmatpush1.bf16.msra.mxu0 0
      %691 = vmatprep.subr.bf16.mxu0 0
      %692 = vmatpush1.bf16.msra.mxu0 0
      %693 = vmatprep.subr.bf16.mxu0 0
      %694 = vmatpush1.bf16.msra.mxu0 0
      %695 = vmatprep.subr.bf16.mxu0 0
      %696 = vmatpush1.bf16.msra.mxu0 0
      %697 = vmatprep.subr.bf16.mxu0 0
      %698 = vmatpush1.bf16.msra.mxu0 0
      %699 = vmatprep.subr.bf16.mxu0 0
      %700 = vmatpush1.bf16.msra.mxu0 0
      %701 = vmatprep.subr.bf16.mxu0 0
      %702 = vmatpush1.bf16.msra.mxu0 0
      %703 = vmatprep.subr.bf16.mxu0 0
      %704 = vmatpush1.bf16.msra.mxu0 0
      %705 = vmatprep.subr.bf16.mxu0 0
      %706 = vmatpush1.bf16.msra.mxu0 0
      %707 = vmatprep.subr.bf16.mxu0 0
      %708 = vmatpush1.bf16.msra.mxu0 0
      %709 = vmatprep.subr.bf16.mxu0 0
      %710 = vmatpush1.bf16.msra.mxu0 0
      %711 = vmatprep.subr.bf16.mxu0 0
      %712 = vmatpush1.bf16.msra.mxu0 0
      %713 = vmatprep.subr.bf16.mxu0 0
      %714 = vmatpush1.bf16.msra.mxu0 0
      %715 = vmatprep.subr.bf16.mxu0 0
      %716 = vmatpush1.bf16.msra.mxu0 0
      %717 = vmatprep.subr.bf16.mxu0 0
      %718 = vmatpush1.bf16.msra.mxu0 0
      %719 = vmatprep.mubr.bf16.mxu0 0
      %720 = vmatmul.mubr.bf16.gmra.mrb[0].mxu0 %v665
      %v721 = vpop.f32.mrb[0].mxu0
      %v722 = vadd.f32 %v623, %v721
      %v723 = vpop.f32.mrb[0].mxu0
      %v724 = vadd.f32 %v623, %v723
      %v725 = vpop.f32.mrb[0].mxu0
      %v726 = vadd.f32 %v628, %v725
      %v727 = vpop.f32.mrb[0].mxu0
      %v728 = vadd.f32 %v628, %v727
      %729 = vdwg.mxu0
      %730 = vmatprep.subr.bf16.mxu0 %v679
      %731 = vmatpush1.bf16.msra.mxu0 %v676
      %732 = vmatprep.subr.bf16.mxu0 0
      %733 = vmatpush1.bf16.msra.mxu0 0
      %734 = vmatprep.subr.bf16.mxu0 0
      %735 = vmatpush1.bf16.msra.mxu0 0
      %736 = vmatprep.subr.bf16.mxu0 0
      %737 = vmatpush1.bf16.msra.mxu0 0
      %738 = vmatprep.subr.bf16.mxu0 0
      %739 = vmatpush1.bf16.msra.mxu0 0
      %740 = vmatprep.subr.bf16.mxu0 0
      %741 = vmatpush1.bf16.msra.mxu0 0
      %742 = vmatprep.subr.bf16.mxu0 0
      %743 = vmatpush1.bf16.msra.mxu0 0
      %744 = vmatprep.subr.bf16.mxu0 0
      %745 = vmatpush1.bf16.msra.mxu0 0
      %746 = vmatprep.subr.bf16.mxu0 0
      %747 = vmatpush1.bf16.msra.mxu0 0
      %748 = vmatprep.subr.bf16.mxu0 0
      %749 = vmatpush1.bf16.msra.mxu0 0
      %750 = vmatprep.subr.bf16.mxu0 0
      %751 = vmatpush1.bf16.msra.mxu0 0
      %752 = vmatprep.subr.bf16.mxu0 0
      %753 = vmatpush1.bf16.msra.mxu0 0
      %754 = vmatprep.subr.bf16.mxu0 0
      %755 = vmatpush1.bf16.msra.mxu0 0
      %756 = vmatprep.subr.bf16.mxu0 0
      %757 = vmatpush1.bf16.msra.mxu0 0
      %758 = vmatprep.subr.bf16.mxu0 0
      %759 = vmatpush1.bf16.msra.mxu0 0
      %760 = vmatprep.subr.bf16.mxu0 0
      %761 = vmatpush1.bf16.msra.mxu0 0
      %762 = vmatprep.mubr.bf16.mxu0 0
      %763 = vmatmul.mubr.bf16.gmra.mrb[0].mxu0 %v665
      %v764 = vpop.f32.mrb[0].mxu0
      %v765 = vadd.f32 %v623, %v764
      %v766 = vpop.f32.mrb[0].mxu0
      %v767 = vadd.f32 %v623, %v766
      %v768 = vpop.f32.mrb[0].mxu0
      %v769 = vadd.f32 %v628, %v768
      %v770 = vpop.f32.mrb[0].mxu0
      %v771 = vadd.f32 %v628, %v770
      %772 = vdwg.mxu0
      %773 = vmatprep.subr.bf16.mxu0 %v685
      %774 = vmatpush1.bf16.msra.mxu0 %v682
      %775 = vmatprep.subr.bf16.mxu0 0
      %776 = vmatpush1.bf16.msra.mxu0 0
      %777 = vmatprep.subr.bf16.mxu0 0
      %778 = vmatpush1.bf16.msra.mxu0 0
      %779 = vmatprep.subr.bf16.mxu0 0
      %780 = vmatpush1.bf16.msra.mxu0 0
      %781 = vmatprep.subr.bf16.mxu0 0
      %782 = vmatpush1.bf16.msra.mxu0 0
      %783 = vmatprep.subr.bf16.mxu0 0
      %784 = vmatpush1.bf16.msra.mxu0 0
      %785 = vmatprep.subr.bf16.mxu0 0
      %786 = vmatpush1.bf16.msra.mxu0 0
      %787 = vmatprep.subr.bf16.mxu0 0
      %788 = vmatpush1.bf16.msra.mxu0 0
      %789 = vmatprep.subr.bf16.mxu0 0
      %790 = vmatpush1.bf16.msra.mxu0 0
      %791 = vmatprep.subr.bf16.mxu0 0
      %792 = vmatpush1.bf16.msra.mxu0 0
      %793 = vmatprep.subr.bf16.mxu0 0
      %794 = vmatpush1.bf16.msra.mxu0 0
      %795 = vmatprep.subr.bf16.mxu0 0
      %796 = vmatpush1.bf16.msra.mxu0 0
      %797 = vmatprep.subr.bf16.mxu0 0
      %798 = vmatpush1.bf16.msra.mxu0 0
      %799 = vmatprep.subr.bf16.mxu0 0
      %800 = vmatpush1.bf16.msra.mxu0 0
      %801 = vmatprep.subr.bf16.mxu0 0
      %802 = vmatpush1.bf16.msra.mxu0 0
      %803 = vmatprep.subr.bf16.mxu0 0
      %804 = vmatpush1.bf16.msra.mxu0 0
      %805 = vmatprep.mubr.bf16.mxu0 0
      %806 = vmatmul.mubr.bf16.gmra.mrb[0].mxu0 %v665
      %v807 = vpop.f32.mrb[0].mxu0
      %v808 = vadd.f32 %v623, %v807
      %v809 = vpop.f32.mrb[0].mxu0
      %v810 = vadd.f32 %v623, %v809
      %v811 = vpop.f32.mrb[0].mxu0
      %v812 = vadd.f32 %v628, %v811
      %v813 = vpop.f32.mrb[0].mxu0
      %v814 = vadd.f32 %v628, %v813
      %815 = vdwg.mxu0
      %v816 = vmax.f32 %v722, 0.0
      %v817 = vmax.f32 %v724, 0.0
      %v818 = vmax.f32 %v765, 0.0
      %v819 = vmax.f32 %v767, 0.0
      %v820 = vmax.f32 %v808, 0.0
      %v821 = vmax.f32 %v810, 0.0
      %v822 = vmax.f32 %v726, 0.0
      %v823 = vmax.f32 %v728, 0.0
      %v824 = vmax.f32 %v769, 0.0
      %v825 = vmax.f32 %v771, 0.0
      %v826 = vmax.f32 %v812, 0.0
      %v827 = vmax.f32 %v814, 0.0
      %v829 = vlaneseq
      %v830 = vshrl.u32 %v829, 7
      %v831 = vsub.s32 0, %v830
      %v832 = vrot.slane %v200, %v831
      %v833 = vlaneseq
      %v834 = vshrl.u32 %v833, 7
      %v835 = vsub.s32 1, %v834
      %v836 = vrot.slane %v200, %v835
      %v837 = vlaneseq
      %v838 = vshrl.u32 %v837, 7
      %v839 = vsub.s32 2, %v838
      %v840 = vrot.slane %v200, %v839
      %v841 = vlaneseq
      %v842 = vshrl.u32 %v841, 7
      %v843 = vsub.s32 3, %v842
      %v844 = vrot.slane %v200, %v843
      %v845 = vlaneseq
      %v846 = vshrl.u32 %v845, 7
      %v847 = vsub.s32 4, %v846
      %v848 = vrot.slane %v200, %v847
      %v849 = vlaneseq
      %v850 = vshrl.u32 %v849, 7
      %v851 = vsub.s32 5, %v850
      %v852 = vrot.slane %v200, %v851
      %v859 = vmul.f32 %v816, %v832
      %v860 = vmul.f32 %v817, %v836
      %v861 = vmul.f32 %v818, %v840
      %v862 = vmul.f32 %v819, %v844
      %v863 = vmul.f32 %v820, %v848
      %v864 = vmul.f32 %v821, %v852
      %v865 = vmul.f32 %v822, %v832
      %v866 = vmul.f32 %v823, %v836
      %v867 = vmul.f32 %v824, %v840
      %v868 = vmul.f32 %v825, %v844
      %v869 = vmul.f32 %v826, %v848
      %v870 = vmul.f32 %v827, %v852
      %v871 = vpack.c.bf16 %v865, %v859
      %v872 = vpack.c.bf16 %v866, %v860
      %v873 = vpack.c.bf16 %v867, %v861
      %v874 = vpack.c.bf16 %v868, %v862
      %v875 = vpack.c.bf16 %v869, %v863
      %v876 = vpack.c.bf16 %v870, %v864
      %877 = vst [vmem:[#allocation2 + $0x8] sm:$0xff] %v871
      %878 = vst [vmem:[#allocation2 + $0x10] sm:$0xff] %v872
      %879 = vst [vmem:[#allocation2 + $0x18] sm:$0xff] %v873
      %880 = vst [vmem:[#allocation2 + $0x20] sm:$0xff] %v874
      %881 = vst [vmem:[#allocation2 + $0x28] sm:$0xff] %v875
      %882 = vst [vmem:[#allocation2 + $0x30] sm:$0xff] %v876
      %v883 = vld [vmem:[#allocation2] sm:$0xff]
      %v884 = vld [vmem:[#allocation2 + $0x8] sm:$0xff]
      %v885 = vld [vmem:[#allocation2 + $0x10] sm:$0xff]
      %v886 = vld [vmem:[#allocation2 + $0x18] sm:$0xff]
      %v887 = vld [vmem:[#allocation2 + $0x20] sm:$0xff]
      %v888 = vld [vmem:[#allocation2 + $0x28] sm:$0xff]
      %v889 = vld [vmem:[#allocation2 + $0x30] sm:$0xff]
      %897 = vrot.lane.b32.xlu0 %v883, 19
      %v898 = vpop.permute.xlu0 %897
      %899 = vrot.lane.b32.xlu0 %v884, 19
      %v900 = vpop.permute.xlu0 %899
      %901 = vrot.lane.b32.xlu0 %v885, 19
      %v902 = vpop.permute.xlu0 %901
      %903 = vrot.lane.b32.xlu0 %v886, 19
      %v904 = vpop.permute.xlu0 %903
      %905 = vrot.lane.b32.xlu0 %v887, 19
      %v906 = vpop.permute.xlu0 %905
      %907 = vrot.lane.b32.xlu0 %v888, 19
      %v908 = vpop.permute.xlu0 %907
      %909 = vrot.lane.b32.xlu0 %v889, 19
      %v910 = vpop.permute.xlu0 %909
      %v911 = vsel %vm656, %v898, %v900
      %v912 = vsel %vm656, %v900, %v902
      %v913 = vsel %vm656, %v902, %v904
      %v914 = vsel %vm656, %v904, %v906
      %v915 = vsel %vm656, %v906, %v908
      %v916 = vsel %vm656, %v908, %v910
      %923 = vst [vmem:[#allocation3] sm:$0xff] %v911
      %924 = vst [vmem:[#allocation3 + $0x8] sm:$0xff] %v912
      %925 = vst [vmem:[#allocation3 + $0x10] sm:$0xff] %v913
      %926 = vst [vmem:[#allocation3 + $0x18] sm:$0xff] %v914
      %927 = vst [vmem:[#allocation3 + $0x20] sm:$0xff] %v915
      %928 = vst [vmem:[#allocation3 + $0x28] sm:$0xff] %v916
      %v929 = vld [vmem:[#allocation2] sm:$0xff]
      %v930 = vld [vmem:[#allocation2 + $0x8] sm:$0xff]
      %v931 = vld [vmem:[#allocation2 + $0x10] sm:$0xff]
      %v932 = vld [vmem:[#allocation2 + $0x18] sm:$0xff]
      %v933 = vld [vmem:[#allocation2 + $0x20] sm:$0xff]
      %v934 = vld [vmem:[#allocation2 + $0x28] sm:$0xff]
      %v935 = vld [vmem:[#allocation2 + $0x30] sm:$0xff]
      %943 = vrot.lane.b32.xlu0 %v929, 18
      %v944 = vpop.permute.xlu0 %943
      %945 = vrot.lane.b32.xlu0 %v930, 18
      %v946 = vpop.permute.xlu0 %945
      %947 = vrot.lane.b32.xlu0 %v931, 18
      %v948 = vpop.permute.xlu0 %947
      %949 = vrot.lane.b32.xlu0 %v932, 18
      %v950 = vpop.permute.xlu0 %949
      %951 = vrot.lane.b32.xlu0 %v933, 18
      %v952 = vpop.permute.xlu0 %951
      %953 = vrot.lane.b32.xlu0 %v934, 18
      %v954 = vpop.permute.xlu0 %953
      %955 = vrot.lane.b32.xlu0 %v935, 18
      %v956 = vpop.permute.xlu0 %955
      %vm957 = vcmask 146432
      %v958 = vsel %vm957, %v944, %v946
      %v959 = vsel %vm957, %v946, %v948
      %v960 = vsel %vm957, %v948, %v950
      %v961 = vsel %vm957, %v950, %v952
      %v962 = vsel %vm957, %v952, %v954
      %v963 = vsel %vm957, %v954, %v956
      %970 = vst [vmem:[#allocation3 + $0x30] sm:$0xff] %v958
      %971 = vst [vmem:[#allocation3 + $0x38] sm:$0xff] %v959
      %972 = vst [vmem:[#allocation3 + $0x40] sm:$0xff] %v960
      %973 = vst [vmem:[#allocation3 + $0x48] sm:$0xff] %v961
      %974 = vst [vmem:[#allocation3 + $0x50] sm:$0xff] %v962
      %975 = vst [vmem:[#allocation3 + $0x58] sm:$0xff] %v963
      %v976 = vld [vmem:[#allocation2] sm:$0xff]
      %v977 = vld [vmem:[#allocation2 + $0x8] sm:$0xff]
      %v978 = vld [vmem:[#allocation2 + $0x10] sm:$0xff]
      %v979 = vld [vmem:[#allocation2 + $0x18] sm:$0xff]
      %v980 = vld [vmem:[#allocation2 + $0x20] sm:$0xff]
      %v981 = vld [vmem:[#allocation2 + $0x28] sm:$0xff]
      %v982 = vld [vmem:[#allocation2 + $0x30] sm:$0xff]
      %990 = vrot.lane.b32.xlu0 %v976, 17
      %v991 = vpop.permute.xlu0 %990
      %992 = vrot.lane.b32.xlu0 %v977, 17
      %v993 = vpop.permute.xlu0 %992
      %994 = vrot.lane.b32.xlu0 %v978, 17
      %v995 = vpop.permute.xlu0 %994
      %996 = vrot.lane.b32.xlu0 %v979, 17
      %v997 = vpop.permute.xlu0 %996
      %998 = vrot.lane.b32.xlu0 %v980, 17
      %v999 = vpop.permute.xlu0 %998
      %1000 = vrot.lane.b32.xlu0 %v981, 17
      %v1001 = vpop.permute.xlu0 %1000
      %1002 = vrot.lane.b32.xlu0 %v982, 17
      %v1003 = vpop.permute.xlu0 %1002
      %vm1004 = vcmask 138240
      %v1005 = vsel %vm1004, %v991, %v993
      %v1006 = vsel %vm1004, %v993, %v995
      %v1007 = vsel %vm1004, %v995, %v997
      %v1008 = vsel %vm1004, %v997, %v999
      %v1009 = vsel %vm1004, %v999, %v1001
      %v1010 = vsel %vm1004, %v1001, %v1003
      %1017 = vst [vmem:[#allocation3 + $0x60] sm:$0xff] %v1005
      %1018 = vst [vmem:[#allocation3 + $0x68] sm:$0xff] %v1006
      %1019 = vst [vmem:[#allocation3 + $0x70] sm:$0xff] %v1007
      %1020 = vst [vmem:[#allocation3 + $0x78] sm:$0xff] %v1008
      %1021 = vst [vmem:[#allocation3 + $0x80] sm:$0xff] %v1009
      %1022 = vst [vmem:[#allocation3 + $0x88] sm:$0xff] %v1010
      %v1023 = vld [vmem:[#allocation2] sm:$0xff]
      %v1024 = vld [vmem:[#allocation2 + $0x8] sm:$0xff]
      %v1025 = vld [vmem:[#allocation2 + $0x10] sm:$0xff]
      %v1026 = vld [vmem:[#allocation2 + $0x18] sm:$0xff]
      %v1027 = vld [vmem:[#allocation2 + $0x20] sm:$0xff]
      %v1028 = vld [vmem:[#allocation2 + $0x28] sm:$0xff]
      %v1029 = vld [vmem:[#allocation2 + $0x30] sm:$0xff]
      %1037 = vrot.lane.b32.xlu0 %v1023, 1
      %v1038 = vpop.permute.xlu0 %1037
      %1039 = vrot.lane.b32.xlu0 %v1024, 1
      %v1040 = vpop.permute.xlu0 %1039
      %1041 = vrot.lane.b32.xlu0 %v1025, 1
      %v1042 = vpop.permute.xlu0 %1041
      %1043 = vrot.lane.b32.xlu0 %v1026, 1
      %v1044 = vpop.permute.xlu0 %1043
      %1045 = vrot.lane.b32.xlu0 %v1027, 1
      %v1046 = vpop.permute.xlu0 %1045
      %1047 = vrot.lane.b32.xlu0 %v1028, 1
      %v1048 = vpop.permute.xlu0 %1047
      %1049 = vrot.lane.b32.xlu0 %v1029, 1
      %v1050 = vpop.permute.xlu0 %1049
      %vm1051 = vcmask 7168
      %v1052 = vsel %vm1051, %v1038, %v1040
      %v1053 = vsel %vm1051, %v1040, %v1042
      %v1054 = vsel %vm1051, %v1042, %v1044
      %v1055 = vsel %vm1051, %v1044, %v1046
      %v1056 = vsel %vm1051, %v1046, %v1048
      %v1057 = vsel %vm1051, %v1048, %v1050
      %1064 = vst [vmem:[#allocation3 + $0x90] sm:$0xff] %v1052
      %1065 = vst [vmem:[#allocation3 + $0x98] sm:$0xff] %v1053
      %1066 = vst [vmem:[#allocation3 + $0xa0] sm:$0xff] %v1054
      %1067 = vst [vmem:[#allocation3 + $0xa8] sm:$0xff] %v1055
      %1068 = vst [vmem:[#allocation3 + $0xb0] sm:$0xff] %v1056
      %1069 = vst [vmem:[#allocation3 + $0xb8] sm:$0xff] %v1057
      %v1070 = vld [vmem:[#allocation2 + $0x8] sm:$0xff]
      %v1071 = vld [vmem:[#allocation2 + $0x10] sm:$0xff]
      %v1072 = vld [vmem:[#allocation2 + $0x18] sm:$0xff]
      %v1073 = vld [vmem:[#allocation2 + $0x20] sm:$0xff]
      %v1074 = vld [vmem:[#allocation2 + $0x28] sm:$0xff]
      %v1075 = vld [vmem:[#allocation2 + $0x30] sm:$0xff]
      %1076 = vst [vmem:[#allocation3 + $0xc0] sm:$0xff] %v1070
      %1077 = vst [vmem:[#allocation3 + $0xc8] sm:$0xff] %v1071
      %1078 = vst [vmem:[#allocation3 + $0xd0] sm:$0xff] %v1072
      %1079 = vst [vmem:[#allocation3 + $0xd8] sm:$0xff] %v1073
      %1080 = vst [vmem:[#allocation3 + $0xe0] sm:$0xff] %v1074
      %1081 = vst [vmem:[#allocation3 + $0xe8] sm:$0xff] %v1075
      %v1082 = vld [vmem:[#allocation2 + $0x8] sm:$0xff]
      %v1083 = vld [vmem:[#allocation2 + $0x10] sm:$0xff]
      %v1084 = vld [vmem:[#allocation2 + $0x18] sm:$0xff]
      %v1085 = vld [vmem:[#allocation2 + $0x20] sm:$0xff]
      %v1086 = vld [vmem:[#allocation2 + $0x28] sm:$0xff]
      %v1087 = vld [vmem:[#allocation2 + $0x30] sm:$0xff]
      %v1088 = vld [vmem:[#allocation2 + $0x38] sm:$0xff]
      %1096 = vrot.lane.b32.xlu0 %v1082, 127
      %v1097 = vpop.permute.xlu0 %1096
      %1098 = vrot.lane.b32.xlu0 %v1083, 127
      %v1099 = vpop.permute.xlu0 %1098
      %1100 = vrot.lane.b32.xlu0 %v1084, 127
      %v1101 = vpop.permute.xlu0 %1100
      %1102 = vrot.lane.b32.xlu0 %v1085, 127
      %v1103 = vpop.permute.xlu0 %1102
      %1104 = vrot.lane.b32.xlu0 %v1086, 127
      %v1105 = vpop.permute.xlu0 %1104
      %1106 = vrot.lane.b32.xlu0 %v1087, 127
      %v1107 = vpop.permute.xlu0 %1106
      %1108 = vrot.lane.b32.xlu0 %v1088, 127
      %v1109 = vpop.permute.xlu0 %1108
      %vm1110 = vcmask 1039360
      %v1111 = vsel %vm1110, %v1097, %v1099
      %v1112 = vsel %vm1110, %v1099, %v1101
      %v1113 = vsel %vm1110, %v1101, %v1103
      %v1114 = vsel %vm1110, %v1103, %v1105
      %v1115 = vsel %vm1110, %v1105, %v1107
      %v1116 = vsel %vm1110, %v1107, %v1109
      %1123 = vst [vmem:[#allocation3 + $0xf0] sm:$0xff] %v1111
      %1124 = vst [vmem:[#allocation3 + $0xf8] sm:$0xff] %v1112
      %1125 = vst [vmem:[#allocation3 + $0x100] sm:$0xff] %v1113
      %1126 = vst [vmem:[#allocation3 + $0x108] sm:$0xff] %v1114
      %1127 = vst [vmem:[#allocation3 + $0x110] sm:$0xff] %v1115
      %1128 = vst [vmem:[#allocation3 + $0x118] sm:$0xff] %v1116
      %v1129 = vld [vmem:[#allocation2 + $0x8] sm:$0xff]
      %v1130 = vld [vmem:[#allocation2 + $0x10] sm:$0xff]
      %v1131 = vld [vmem:[#allocation2 + $0x18] sm:$0xff]
      %v1132 = vld [vmem:[#allocation2 + $0x20] sm:$0xff]
      %v1133 = vld [vmem:[#allocation2 + $0x28] sm:$0xff]
      %v1134 = vld [vmem:[#allocation2 + $0x30] sm:$0xff]
      %v1135 = vld [vmem:[#allocation2 + $0x38] sm:$0xff]
      %1143 = vrot.lane.b32.xlu0 %v1129, 111
      %v1144 = vpop.permute.xlu0 %1143
      %1145 = vrot.lane.b32.xlu0 %v1130, 111
      %v1146 = vpop.permute.xlu0 %1145
      %1147 = vrot.lane.b32.xlu0 %v1131, 111
      %v1148 = vpop.permute.xlu0 %1147
      %1149 = vrot.lane.b32.xlu0 %v1132, 111
      %v1150 = vpop.permute.xlu0 %1149
      %1151 = vrot.lane.b32.xlu0 %v1133, 111
      %v1152 = vpop.permute.xlu0 %1151
      %1153 = vrot.lane.b32.xlu0 %v1134, 111
      %v1154 = vpop.permute.xlu0 %1153
      %1155 = vrot.lane.b32.xlu0 %v1135, 111
      %v1156 = vpop.permute.xlu0 %1155
      %vm1157 = vcmask 908288
      %v1158 = vsel %vm1157, %v1144, %v1146
      %v1159 = vsel %vm1157, %v1146, %v1148
      %v1160 = vsel %vm1157, %v1148, %v1150
      %v1161 = vsel %vm1157, %v1150, %v1152
      %v1162 = vsel %vm1157, %v1152, %v1154
      %v1163 = vsel %vm1157, %v1154, %v1156
      %1170 = vst [vmem:[#allocation3 + $0x120] sm:$0xff] %v1158
      %1171 = vst [vmem:[#allocation3 + $0x128] sm:$0xff] %v1159
      %1172 = vst [vmem:[#allocation3 + $0x130] sm:$0xff] %v1160
      %1173 = vst [vmem:[#allocation3 + $0x138] sm:$0xff] %v1161
      %1174 = vst [vmem:[#allocation3 + $0x140] sm:$0xff] %v1162
      %1175 = vst [vmem:[#allocation3 + $0x148] sm:$0xff] %v1163
      %v1176 = vld [vmem:[#allocation2 + $0x8] sm:$0xff]
      %v1177 = vld [vmem:[#allocation2 + $0x10] sm:$0xff]
      %v1178 = vld [vmem:[#allocation2 + $0x18] sm:$0xff]
      %v1179 = vld [vmem:[#allocation2 + $0x20] sm:$0xff]
      %v1180 = vld [vmem:[#allocation2 + $0x28] sm:$0xff]
      %v1181 = vld [vmem:[#allocation2 + $0x30] sm:$0xff]
      %v1182 = vld [vmem:[#allocation2 + $0x38] sm:$0xff]
      %1190 = vrot.lane.b32.xlu0 %v1176, 110
      %v1191 = vpop.permute.xlu0 %1190
      %1192 = vrot.lane.b32.xlu0 %v1177, 110
      %v1193 = vpop.permute.xlu0 %1192
      %1194 = vrot.lane.b32.xlu0 %v1178, 110
      %v1195 = vpop.permute.xlu0 %1194
      %1196 = vrot.lane.b32.xlu0 %v1179, 110
      %v1197 = vpop.permute.xlu0 %1196
      %1198 = vrot.lane.b32.xlu0 %v1180, 110
      %v1199 = vpop.permute.xlu0 %1198
      %1200 = vrot.lane.b32.xlu0 %v1181, 110
      %v1201 = vpop.permute.xlu0 %1200
      %1202 = vrot.lane.b32.xlu0 %v1182, 110
      %v1203 = vpop.permute.xlu0 %1202
      %vm1204 = vcmask 900096
      %v1205 = vsel %vm1204, %v1191, %v1193
      %v1206 = vsel %vm1204, %v1193, %v1195
      %v1207 = vsel %vm1204, %v1195, %v1197
      %v1208 = vsel %vm1204, %v1197, %v1199
      %v1209 = vsel %vm1204, %v1199, %v1201
      %v1210 = vsel %vm1204, %v1201, %v1203
      %1217 = vst [vmem:[#allocation3 + $0x150] sm:$0xff] %v1205
      %1218 = vst [vmem:[#allocation3 + $0x158] sm:$0xff] %v1206
      %1219 = vst [vmem:[#allocation3 + $0x160] sm:$0xff] %v1207
      %1220 = vst [vmem:[#allocation3 + $0x168] sm:$0xff] %v1208
      %1221 = vst [vmem:[#allocation3 + $0x170] sm:$0xff] %v1209
      %1222 = vst [vmem:[#allocation3 + $0x178] sm:$0xff] %v1210
      %v1223 = vld [vmem:[#allocation2 + $0x8] sm:$0xff]
      %v1224 = vld [vmem:[#allocation2 + $0x10] sm:$0xff]
      %v1225 = vld [vmem:[#allocation2 + $0x18] sm:$0xff]
      %v1226 = vld [vmem:[#allocation2 + $0x20] sm:$0xff]
      %v1227 = vld [vmem:[#allocation2 + $0x28] sm:$0xff]
      %v1228 = vld [vmem:[#allocation2 + $0x30] sm:$0xff]
      %v1229 = vld [vmem:[#allocation2 + $0x38] sm:$0xff]
      %1237 = vrot.lane.b32.xlu0 %v1223, 109
      %v1238 = vpop.permute.xlu0 %1237
      %1239 = vrot.lane.b32.xlu0 %v1224, 109
      %v1240 = vpop.permute.xlu0 %1239
      %1241 = vrot.lane.b32.xlu0 %v1225, 109
      %v1242 = vpop.permute.xlu0 %1241
      %1243 = vrot.lane.b32.xlu0 %v1226, 109
      %v1244 = vpop.permute.xlu0 %1243
      %1245 = vrot.lane.b32.xlu0 %v1227, 109
      %v1246 = vpop.permute.xlu0 %1245
      %1247 = vrot.lane.b32.xlu0 %v1228, 109
      %v1248 = vpop.permute.xlu0 %1247
      %1249 = vrot.lane.b32.xlu0 %v1229, 109
      %v1250 = vpop.permute.xlu0 %1249
      %vm1251 = vcmask 891904
      %v1252 = vsel %vm1251, %v1238, %v1240
      %v1253 = vsel %vm1251, %v1240, %v1242
      %v1254 = vsel %vm1251, %v1242, %v1244
      %v1255 = vsel %vm1251, %v1244, %v1246
      %v1256 = vsel %vm1251, %v1246, %v1248
      %v1257 = vsel %vm1251, %v1248, %v1250
      %1264 = vst [vmem:[#allocation3 + $0x180] sm:$0xff] %v1252
      %1265 = vst [vmem:[#allocation3 + $0x188] sm:$0xff] %v1253
      %1266 = vst [vmem:[#allocation3 + $0x190] sm:$0xff] %v1254
      %1267 = vst [vmem:[#allocation3 + $0x198] sm:$0xff] %v1255
      %1268 = vst [vmem:[#allocation3 + $0x1a0] sm:$0xff] %v1256
      %1269 = vst [vmem:[#allocation3 + $0x1a8] sm:$0xff] %v1257
      %v1270 = vld [vmem:[#allocation3] sm:$0xff]
      %v1271 = vld [vmem:[#allocation3 + $0x8] sm:$0xff]
      %v1272 = vld [vmem:[#allocation3 + $0x10] sm:$0xff]
      %v1273 = vld [vmem:[#allocation3 + $0x18] sm:$0xff]
      %v1274 = vld [vmem:[#allocation3 + $0x20] sm:$0xff]
      %v1275 = vld [vmem:[#allocation3 + $0x28] sm:$0xff]
      %v1276 = vld [vmem:[#allocation3 + $0x30] sm:$0xff]
      %v1277 = vld [vmem:[#allocation3 + $0x38] sm:$0xff]
      %v1278 = vld [vmem:[#allocation3 + $0x40] sm:$0xff]
      %v1279 = vld [vmem:[#allocation3 + $0x48] sm:$0xff]
      %v1280 = vld [vmem:[#allocation3 + $0x50] sm:$0xff]
      %v1281 = vld [vmem:[#allocation3 + $0x58] sm:$0xff]
      %v1282 = vld [vmem:[#allocation3 + $0x60] sm:$0xff]
      %v1283 = vld [vmem:[#allocation3 + $0x68] sm:$0xff]
      %v1284 = vld [vmem:[#allocation3 + $0x70] sm:$0xff]
      %v1285 = vld [vmem:[#allocation3 + $0x78] sm:$0xff]
      %v1286 = vld [vmem:[#allocation3 + $0x80] sm:$0xff]
      %v1287 = vld [vmem:[#allocation3 + $0x88] sm:$0xff]
      %v1288 = vld [vmem:[#allocation3 + $0x90] sm:$0xff]
      %v1289 = vld [vmem:[#allocation3 + $0x98] sm:$0xff]
      %v1290 = vld [vmem:[#allocation3 + $0xa0] sm:$0xff]
      %v1291 = vld [vmem:[#allocation3 + $0xa8] sm:$0xff]
      %v1292 = vld [vmem:[#allocation3 + $0xb0] sm:$0xff]
      %v1293 = vld [vmem:[#allocation3 + $0xb8] sm:$0xff]
      %v1294 = vld [vmem:[#allocation3 + $0xc0] sm:$0xff]
      %v1295 = vld [vmem:[#allocation3 + $0xc8] sm:$0xff]
      %v1296 = vld [vmem:[#allocation3 + $0xd0] sm:$0xff]
      %v1297 = vld [vmem:[#allocation3 + $0xd8] sm:$0xff]
      %v1298 = vld [vmem:[#allocation3 + $0xe0] sm:$0xff]
      %v1299 = vld [vmem:[#allocation3 + $0xe8] sm:$0xff]
      %v1300 = vld [vmem:[#allocation3 + $0xf0] sm:$0xff]
      %v1301 = vld [vmem:[#allocation3 + $0xf8] sm:$0xff]
      %v1302 = vld [vmem:[#allocation3 + $0x100] sm:$0xff]
      %v1303 = vld [vmem:[#allocation3 + $0x108] sm:$0xff]
      %v1304 = vld [vmem:[#allocation3 + $0x110] sm:$0xff]
      %v1305 = vld [vmem:[#allocation3 + $0x118] sm:$0xff]
      %v1306 = vld [vmem:[#allocation3 + $0x120] sm:$0xff]
      %v1307 = vld [vmem:[#allocation3 + $0x128] sm:$0xff]
      %v1308 = vld [vmem:[#allocation3 + $0x130] sm:$0xff]
      %v1309 = vld [vmem:[#allocation3 + $0x138] sm:$0xff]
      %v1310 = vld [vmem:[#allocation3 + $0x140] sm:$0xff]
      %v1311 = vld [vmem:[#allocation3 + $0x148] sm:$0xff]
      %v1312 = vld [vmem:[#allocation3 + $0x150] sm:$0xff]
      %v1313 = vld [vmem:[#allocation3 + $0x158] sm:$0xff]
      %v1314 = vld [vmem:[#allocation3 + $0x160] sm:$0xff]
      %v1315 = vld [vmem:[#allocation3 + $0x168] sm:$0xff]
      %v1316 = vld [vmem:[#allocation3 + $0x170] sm:$0xff]
      %v1317 = vld [vmem:[#allocation3 + $0x178] sm:$0xff]
      %v1318 = vld [vmem:[#allocation3 + $0x180] sm:$0xff]
      %v1319 = vld [vmem:[#allocation3 + $0x188] sm:$0xff]
      %v1320 = vld [vmem:[#allocation3 + $0x190] sm:$0xff]
      %v1321 = vld [vmem:[#allocation3 + $0x198] sm:$0xff]
      %v1322 = vld [vmem:[#allocation3 + $0x1a0] sm:$0xff]
      %v1323 = vld [vmem:[#allocation3 + $0x1a8] sm:$0xff]
      %s1324 = scalar_lea.vmem %s2, 48
      %v1325 = vld [vmem:[%s1324] sm:$0xff]
      %v1326 = vld [vmem:[%s1324 + $0xc] sm:$0xff]
      %v1327 = vld [vmem:[%s1324 + $0x18] sm:$0xff]
      %v1328 = vld [vmem:[%s1324 + $0x24] sm:$0xff]
      %s1329 = scalar_lea.vmem %s3, 32
      %v1330 = vld [vmem:[%s1329] sm:$0xff]
      %v1331 = vld [vmem:[%s1329 + $0x8] sm:$0xff]
      %v1332 = vld [vmem:[%s1329 + $0x10] sm:$0xff]
      %v1333 = vld [vmem:[%s1329 + $0x18] sm:$0xff]
      %1335 = vset.pattern.permute.xlu0 0
      %1336 = vperm.xlu0 %1335, %v1330
      %v1337 = vpop.permute.xlu0 %1336
      %1340 = vset.pattern.permute.xlu0 0
      %1341 = vperm.xlu0 %1340, %v1331
      %v1342 = vpop.permute.xlu0 %1341
      %1345 = vset.pattern.permute.xlu0 0
      %1346 = vperm.xlu0 %1345, %v1332
      %v1347 = vpop.permute.xlu0 %1346
      %1350 = vset.pattern.permute.xlu0 0
      %1351 = vperm.xlu0 %1350, %v1333
      %v1352 = vpop.permute.xlu0 %1351
      %v1358 = vunpack.c.l.b16 %v1325
      %v1359 = vunpack.c.h.b16 %v1325
      %v1360 = vunpack.c.l.b16 %v1326
      %v1361 = vunpack.c.h.b16 %v1326
      %v1362 = vunpack.c.l.b16 %v1327
      %v1363 = vunpack.c.h.b16 %v1327
      %v1364 = vunpack.c.l.b16 %v1328
      %v1365 = vunpack.c.h.b16 %v1328
      %v1366 = vpack.c.b16 %v1360, %v1358
      %v1367 = vpack.c.b16 %v1361, %v1359
      %v1368 = vpack.c.b16 %v1364, %v1362
      %v1369 = vpack.c.b16 %v1365, %v1363
      %vm1372 = vcmask 130048
      %v1374 = vsel %vm1372, %v1367, 0
      %v1377 = vsel %vm1372, %v1369, 0
      %1379 = vmatprep.subr.bf16.mxu0 %v1271
      %1380 = vmatpush1.bf16.msra.mxu0 %v1270
      %1381 = vmatprep.subr.bf16.mxu0 %v1277
      %1382 = vmatpush1.bf16.msra.mxu0 %v1276
      %1383 = vmatprep.subr.bf16.mxu0 %v1283
      %1384 = vmatpush1.bf16.msra.mxu0 %v1282
      %1385 = vmatprep.subr.bf16.mxu0 %v1289
      %1386 = vmatpush1.bf16.msra.mxu0 %v1288
      %1387 = vmatprep.subr.bf16.mxu0 %v1295
      %1388 = vmatpush1.bf16.msra.mxu0 %v1294
      %1389 = vmatprep.subr.bf16.mxu0 %v1301
      %1390 = vmatpush1.bf16.msra.mxu0 %v1300
      %1391 = vmatprep.subr.bf16.mxu0 %v1307
      %1392 = vmatpush1.bf16.msra.mxu0 %v1306
      %1393 = vmatprep.subr.bf16.mxu0 %v1313
      %1394 = vmatpush1.bf16.msra.mxu0 %v1312
      %1395 = vmatprep.subr.bf16.mxu0 %v1319
      %1396 = vmatpush1.bf16.msra.mxu0 %v1318
      %1397 = vmatprep.subr.bf16.mxu0 0
      %1398 = vmatpush1.bf16.msra.mxu0 0
      %1399 = vmatprep.subr.bf16.mxu0 0
      %1400 = vmatpush1.bf16.msra.mxu0 0
      %1401 = vmatprep.subr.bf16.mxu0 0
      %1402 = vmatpush1.bf16.msra.mxu0 0
      %1403 = vmatprep.subr.bf16.mxu0 0
      %1404 = vmatpush1.bf16.msra.mxu0 0
      %1405 = vmatprep.subr.bf16.mxu0 0
      %1406 = vmatpush1.bf16.msra.mxu0 0
      %1407 = vmatprep.subr.bf16.mxu0 0
      %1408 = vmatpush1.bf16.msra.mxu0 0
      %1409 = vmatprep.subr.bf16.mxu0 0
      %1410 = vmatpush1.bf16.msra.mxu0 0
      %1411 = vmatprep.mubr.bf16.mxu0 %v1374
      %1412 = vmatmul.mubr.bf16.gmra.mrb[0].mxu0 %v1366
      %v1413 = vpop.f32.mrb[0].mxu0
      %v1414 = vadd.f32 %v1337, %v1413
      %v1415 = vpop.f32.mrb[0].mxu0
      %v1416 = vadd.f32 %v1337, %v1415
      %v1417 = vpop.f32.mrb[0].mxu0
      %v1418 = vadd.f32 %v1342, %v1417
      %v1419 = vpop.f32.mrb[0].mxu0
      %v1420 = vadd.f32 %v1342, %v1419
      %1421 = vmatprep.mubr.bf16.mxu0 %v1377
      %1422 = vmatmul.mubr.bf16.gmra.mrb[0].mxu0 %v1368
      %v1423 = vpop.f32.mrb[0].mxu0
      %v1424 = vadd.f32 %v1347, %v1423
      %v1425 = vpop.f32.mrb[0].mxu0
      %v1426 = vadd.f32 %v1347, %v1425
      %v1427 = vpop.f32.mrb[0].mxu0
      %v1428 = vadd.f32 %v1352, %v1427
      %v1429 = vpop.f32.mrb[0].mxu0
      %v1430 = vadd.f32 %v1352, %v1429
      %1431 = vdwg.mxu0
      %1432 = vmatprep.subr.bf16.mxu0 %v1273
      %1433 = vmatpush1.bf16.msra.mxu0 %v1272
      %1434 = vmatprep.subr.bf16.mxu0 %v1279
      %1435 = vmatpush1.bf16.msra.mxu0 %v1278
      %1436 = vmatprep.subr.bf16.mxu0 %v1285
      %1437 = vmatpush1.bf16.msra.mxu0 %v1284
      %1438 = vmatprep.subr.bf16.mxu0 %v1291
      %1439 = vmatpush1.bf16.msra.mxu0 %v1290
      %1440 = vmatprep.subr.bf16.mxu0 %v1297
      %1441 = vmatpush1.bf16.msra.mxu0 %v1296
      %1442 = vmatprep.subr.bf16.mxu0 %v1303
      %1443 = vmatpush1.bf16.msra.mxu0 %v1302
      %1444 = vmatprep.subr.bf16.mxu0 %v1309
      %1445 = vmatpush1.bf16.msra.mxu0 %v1308
      %1446 = vmatprep.subr.bf16.mxu0 %v1315
      %1447 = vmatpush1.bf16.msra.mxu0 %v1314
      %1448 = vmatprep.subr.bf16.mxu0 %v1321
      %1449 = vmatpush1.bf16.msra.mxu0 %v1320
      %1450 = vmatprep.subr.bf16.mxu0 0
      %1451 = vmatpush1.bf16.msra.mxu0 0
      %1452 = vmatprep.subr.bf16.mxu0 0
      %1453 = vmatpush1.bf16.msra.mxu0 0
      %1454 = vmatprep.subr.bf16.mxu0 0
      %1455 = vmatpush1.bf16.msra.mxu0 0
      %1456 = vmatprep.subr.bf16.mxu0 0
      %1457 = vmatpush1.bf16.msra.mxu0 0
      %1458 = vmatprep.subr.bf16.mxu0 0
      %1459 = vmatpush1.bf16.msra.mxu0 0
      %1460 = vmatprep.subr.bf16.mxu0 0
      %1461 = vmatpush1.bf16.msra.mxu0 0
      %1462 = vmatprep.subr.bf16.mxu0 0
      %1463 = vmatpush1.bf16.msra.mxu0 0
      %1464 = vmatprep.mubr.bf16.mxu0 %v1374
      %1465 = vmatmul.mubr.bf16.gmra.mrb[0].mxu0 %v1366
      %v1466 = vpop.f32.mrb[0].mxu0
      %v1467 = vadd.f32 %v1337, %v1466
      %v1468 = vpop.f32.mrb[0].mxu0
      %v1469 = vadd.f32 %v1337, %v1468
      %v1470 = vpop.f32.mrb[0].mxu0
      %v1471 = vadd.f32 %v1342, %v1470
      %v1472 = vpop.f32.mrb[0].mxu0
      %v1473 = vadd.f32 %v1342, %v1472
      %1474 = vmatprep.mubr.bf16.mxu0 %v1377
      %1475 = vmatmul.mubr.bf16.gmra.mrb[0].mxu0 %v1368
      %v1476 = vpop.f32.mrb[0].mxu0
      %v1477 = vadd.f32 %v1347, %v1476
      %v1478 = vpop.f32.mrb[0].mxu0
      %v1479 = vadd.f32 %v1347, %v1478
      %v1480 = vpop.f32.mrb[0].mxu0
      %v1481 = vadd.f32 %v1352, %v1480
      %v1482 = vpop.f32.mrb[0].mxu0
      %v1483 = vadd.f32 %v1352, %v1482
      %1484 = vdwg.mxu0
      %1485 = vmatprep.subr.bf16.mxu0 %v1275
      %1486 = vmatpush1.bf16.msra.mxu0 %v1274
      %1487 = vmatprep.subr.bf16.mxu0 %v1281
      %1488 = vmatpush1.bf16.msra.mxu0 %v1280
      %1489 = vmatprep.subr.bf16.mxu0 %v1287
      %1490 = vmatpush1.bf16.msra.mxu0 %v1286
      %1491 = vmatprep.subr.bf16.mxu0 %v1293
      %1492 = vmatpush1.bf16.msra.mxu0 %v1292
      %1493 = vmatprep.subr.bf16.mxu0 %v1299
      %1494 = vmatpush1.bf16.msra.mxu0 %v1298
      %1495 = vmatprep.subr.bf16.mxu0 %v1305
      %1496 = vmatpush1.bf16.msra.mxu0 %v1304
      %1497 = vmatprep.subr.bf16.mxu0 %v1311
      %1498 = vmatpush1.bf16.msra.mxu0 %v1310
      %1499 = vmatprep.subr.bf16.mxu0 %v1317
      %1500 = vmatpush1.bf16.msra.mxu0 %v1316
      %1501 = vmatprep.subr.bf16.mxu0 %v1323
      %1502 = vmatpush1.bf16.msra.mxu0 %v1322
      %1503 = vmatprep.subr.bf16.mxu0 0
      %1504 = vmatpush1.bf16.msra.mxu0 0
      %1505 = vmatprep.subr.bf16.mxu0 0
      %1506 = vmatpush1.bf16.msra.mxu0 0
      %1507 = vmatprep.subr.bf16.mxu0 0
      %1508 = vmatpush1.bf16.msra.mxu0 0
      %1509 = vmatprep.subr.bf16.mxu0 0
      %1510 = vmatpush1.bf16.msra.mxu0 0
      %1511 = vmatprep.subr.bf16.mxu0 0
      %1512 = vmatpush1.bf16.msra.mxu0 0
      %1513 = vmatprep.subr.bf16.mxu0 0
      %1514 = vmatpush1.bf16.msra.mxu0 0
      %1515 = vmatprep.subr.bf16.mxu0 0
      %1516 = vmatpush1.bf16.msra.mxu0 0
      %1517 = vmatprep.mubr.bf16.mxu0 %v1374
      %1518 = vmatmul.mubr.bf16.gmra.mrb[0].mxu0 %v1366
      %v1519 = vpop.f32.mrb[0].mxu0
      %v1520 = vadd.f32 %v1337, %v1519
      %v1521 = vpop.f32.mrb[0].mxu0
      %v1522 = vadd.f32 %v1337, %v1521
      %v1523 = vpop.f32.mrb[0].mxu0
      %v1524 = vadd.f32 %v1342, %v1523
      %v1525 = vpop.f32.mrb[0].mxu0
      %v1526 = vadd.f32 %v1342, %v1525
      %1527 = vmatprep.mubr.bf16.mxu0 %v1377
      %1528 = vmatmul.mubr.bf16.gmra.mrb[0].mxu0 %v1368
      %v1529 = vpop.f32.mrb[0].mxu0
      %v1530 = vadd.f32 %v1347, %v1529
      %v1531 = vpop.f32.mrb[0].mxu0
      %v1532 = vadd.f32 %v1347, %v1531
      %v1533 = vpop.f32.mrb[0].mxu0
      %v1534 = vadd.f32 %v1352, %v1533
      %v1535 = vpop.f32.mrb[0].mxu0
      %v1536 = vadd.f32 %v1352, %v1535
      %1537 = vdwg.mxu0
      %v1538 = vmax.f32 %v1414, 0.0
      %v1539 = vmax.f32 %v1416, 0.0
      %v1540 = vmax.f32 %v1467, 0.0
      %v1541 = vmax.f32 %v1469, 0.0
      %v1542 = vmax.f32 %v1520, 0.0
      %v1543 = vmax.f32 %v1522, 0.0
      %v1544 = vmax.f32 %v1418, 0.0
      %v1545 = vmax.f32 %v1420, 0.0
      %v1546 = vmax.f32 %v1471, 0.0
      %v1547 = vmax.f32 %v1473, 0.0
      %v1548 = vmax.f32 %v1524, 0.0
      %v1549 = vmax.f32 %v1526, 0.0
      %v1550 = vmax.f32 %v1424, 0.0
      %v1551 = vmax.f32 %v1426, 0.0
      %v1552 = vmax.f32 %v1477, 0.0
      %v1553 = vmax.f32 %v1479, 0.0
      %v1554 = vmax.f32 %v1530, 0.0
      %v1555 = vmax.f32 %v1532, 0.0
      %v1556 = vmax.f32 %v1428, 0.0
      %v1557 = vmax.f32 %v1430, 0.0
      %v1558 = vmax.f32 %v1481, 0.0
      %v1559 = vmax.f32 %v1483, 0.0
      %v1560 = vmax.f32 %v1534, 0.0
      %v1561 = vmax.f32 %v1536, 0.0
      %v1562 = vmul.f32 %v1538, %v832
      %v1563 = vmul.f32 %v1539, %v836
      %v1564 = vmul.f32 %v1540, %v840
      %v1565 = vmul.f32 %v1541, %v844
      %v1566 = vmul.f32 %v1542, %v848
      %v1567 = vmul.f32 %v1543, %v852
      %v1568 = vmul.f32 %v1544, %v832
      %v1569 = vmul.f32 %v1545, %v836
      %v1570 = vmul.f32 %v1546, %v840
      %v1571 = vmul.f32 %v1547, %v844
      %v1572 = vmul.f32 %v1548, %v848
      %v1573 = vmul.f32 %v1549, %v852
      %v1574 = vmul.f32 %v1550, %v832
      %v1575 = vmul.f32 %v1551, %v836
      %v1576 = vmul.f32 %v1552, %v840
      %v1577 = vmul.f32 %v1553, %v844
      %v1578 = vmul.f32 %v1554, %v848
      %v1579 = vmul.f32 %v1555, %v852
      %v1580 = vmul.f32 %v1556, %v832
      %v1581 = vmul.f32 %v1557, %v836
      %v1582 = vmul.f32 %v1558, %v840
      %v1583 = vmul.f32 %v1559, %v844
      %v1584 = vmul.f32 %v1560, %v848
      %v1585 = vmul.f32 %v1561, %v852
      %v1586 = vpack.c.bf16 %v1568, %v1562
      %v1587 = vpack.c.bf16 %v1569, %v1563
      %v1588 = vpack.c.bf16 %v1570, %v1564
      %v1589 = vpack.c.bf16 %v1571, %v1565
      %v1590 = vpack.c.bf16 %v1572, %v1566
      %v1591 = vpack.c.bf16 %v1573, %v1567
      %v1592 = vpack.c.bf16 %v1580, %v1574
      %v1593 = vpack.c.bf16 %v1581, %v1575
      %v1594 = vpack.c.bf16 %v1582, %v1576
      %v1595 = vpack.c.bf16 %v1583, %v1577
      %v1596 = vpack.c.bf16 %v1584, %v1578
      %v1597 = vpack.c.bf16 %v1585, %v1579
      %1598 = vst [vmem:[#allocation2 + $0x8] sm:$0xff] %v1586
      %1599 = vst [vmem:[#allocation2 + $0x10] sm:$0xff] %v1587
      %1600 = vst [vmem:[#allocation2 + $0x18] sm:$0xff] %v1588
      %1601 = vst [vmem:[#allocation2 + $0x20] sm:$0xff] %v1589
      %1602 = vst [vmem:[#allocation2 + $0x28] sm:$0xff] %v1590
      %1603 = vst [vmem:[#allocation2 + $0x30] sm:$0xff] %v1591
      %1604 = vst [vmem:[#allocation2 + $0x48] sm:$0xff] %v1592
      %1605 = vst [vmem:[#allocation2 + $0x50] sm:$0xff] %v1593
      %1606 = vst [vmem:[#allocation2 + $0x58] sm:$0xff] %v1594
      %1607 = vst [vmem:[#allocation2 + $0x60] sm:$0xff] %v1595
      %1608 = vst [vmem:[#allocation2 + $0x68] sm:$0xff] %v1596
      %1609 = vst [vmem:[#allocation2 + $0x70] sm:$0xff] %v1597
      %v1610 = vld [vmem:[#allocation2] sm:$0xff]
      %v1611 = vld [vmem:[#allocation2 + $0x8] sm:$0xff]
      %v1612 = vld [vmem:[#allocation2 + $0x10] sm:$0xff]
      %v1613 = vld [vmem:[#allocation2 + $0x18] sm:$0xff]
      %v1614 = vld [vmem:[#allocation2 + $0x20] sm:$0xff]
      %v1615 = vld [vmem:[#allocation2 + $0x28] sm:$0xff]
      %v1616 = vld [vmem:[#allocation2 + $0x30] sm:$0xff]
      %v1617 = vld [vmem:[#allocation2 + $0x40] sm:$0xff]
      %v1618 = vld [vmem:[#allocation2 + $0x48] sm:$0xff]
      %v1619 = vld [vmem:[#allocation2 + $0x50] sm:$0xff]
      %v1620 = vld [vmem:[#allocation2 + $0x58] sm:$0xff]
      %v1621 = vld [vmem:[#allocation2 + $0x60] sm:$0xff]
      %v1622 = vld [vmem:[#allocation2 + $0x68] sm:$0xff]
      %v1623 = vld [vmem:[#allocation2 + $0x70] sm:$0xff]
      %1638 = vrot.lane.b32.xlu0 %v1610, 19
      %v1639 = vpop.permute.xlu0 %1638
      %1640 = vrot.lane.b32.xlu0 %v1611, 19
      %v1641 = vpop.permute.xlu0 %1640
      %1642 = vrot.lane.b32.xlu0 %v1612, 19
      %v1643 = vpop.permute.xlu0 %1642
      %1644 = vrot.lane.b32.xlu0 %v1613, 19
      %v1645 = vpop.permute.xlu0 %1644
      %1646 = vrot.lane.b32.xlu0 %v1614, 19
      %v1647 = vpop.permute.xlu0 %1646
      %1648 = vrot.lane.b32.xlu0 %v1615, 19
      %v1649 = vpop.permute.xlu0 %1648
      %1650 = vrot.lane.b32.xlu0 %v1616, 19
      %v1651 = vpop.permute.xlu0 %1650
      %1652 = vrot.lane.b32.xlu0 %v1617, 19
      %v1653 = vpop.permute.xlu0 %1652
      %1654 = vrot.lane.b32.xlu0 %v1618, 19
      %v1655 = vpop.permute.xlu0 %1654
      %1656 = vrot.lane.b32.xlu0 %v1619, 19
      %v1657 = vpop.permute.xlu0 %1656
      %1658 = vrot.lane.b32.xlu0 %v1620, 19
      %v1659 = vpop.permute.xlu0 %1658
      %1660 = vrot.lane.b32.xlu0 %v1621, 19
      %v1661 = vpop.permute.xlu0 %1660
      %1662 = vrot.lane.b32.xlu0 %v1622, 19
      %v1663 = vpop.permute.xlu0 %1662
      %1664 = vrot.lane.b32.xlu0 %v1623, 19
      %v1665 = vpop.permute.xlu0 %1664
      %v1666 = vsel %vm656, %v1639, %v1641
      %v1667 = vsel %vm656, %v1641, %v1643
      %v1668 = vsel %vm656, %v1643, %v1645
      %v1669 = vsel %vm656, %v1645, %v1647
      %v1670 = vsel %vm656, %v1647, %v1649
      %v1671 = vsel %vm656, %v1649, %v1651
      %v1672 = vsel %vm656, %v1653, %v1655
      %v1673 = vsel %vm656, %v1655, %v1657
      %v1674 = vsel %vm656, %v1657, %v1659
      %v1675 = vsel %vm656, %v1659, %v1661
      %v1676 = vsel %vm656, %v1661, %v1663
      %v1677 = vsel %vm656, %v1663, %v1665
      %1690 = vst [vmem:[#allocation3] sm:$0xff] %v1666
      %1691 = vst [vmem:[#allocation3 + $0x8] sm:$0xff] %v1667
      %1692 = vst [vmem:[#allocation3 + $0x10] sm:$0xff] %v1668
      %1693 = vst [vmem:[#allocation3 + $0x18] sm:$0xff] %v1669
      %1694 = vst [vmem:[#allocation3 + $0x20] sm:$0xff] %v1670
      %1695 = vst [vmem:[#allocation3 + $0x28] sm:$0xff] %v1671
      %1696 = vst [vmem:[#allocation3 + $0x30] sm:$0xff] %v1672
      %1697 = vst [vmem:[#allocation3 + $0x38] sm:$0xff] %v1673
      %1698 = vst [vmem:[#allocation3 + $0x40] sm:$0xff] %v1674
      %1699 = vst [vmem:[#allocation3 + $0x48] sm:$0xff] %v1675
      %1700 = vst [vmem:[#allocation3 + $0x50] sm:$0xff] %v1676
      %1701 = vst [vmem:[#allocation3 + $0x58] sm:$0xff] %v1677
      %v1702 = vld [vmem:[#allocation2] sm:$0xff]
      %v1703 = vld [vmem:[#allocation2 + $0x8] sm:$0xff]
      %v1704 = vld [vmem:[#allocation2 + $0x10] sm:$0xff]
      %v1705 = vld [vmem:[#allocation2 + $0x18] sm:$0xff]
      %v1706 = vld [vmem:[#allocation2 + $0x20] sm:$0xff]
      %v1707 = vld [vmem:[#allocation2 + $0x28] sm:$0xff]
      %v1708 = vld [vmem:[#allocation2 + $0x30] sm:$0xff]
      %v1709 = vld [vmem:[#allocation2 + $0x40] sm:$0xff]
      %v1710 = vld [vmem:[#allocation2 + $0x48] sm:$0xff]
      %v1711 = vld [vmem:[#allocation2 + $0x50] sm:$0xff]
      %v1712 = vld [vmem:[#allocation2 + $0x58] sm:$0xff]
      %v1713 = vld [vmem:[#allocation2 + $0x60] sm:$0xff]
      %v1714 = vld [vmem:[#allocation2 + $0x68] sm:$0xff]
      %v1715 = vld [vmem:[#allocation2 + $0x70] sm:$0xff]
      %1730 = vrot.lane.b32.xlu0 %v1702, 18
      %v1731 = vpop.permute.xlu0 %1730
      %1732 = vrot.lane.b32.xlu0 %v1703, 18
      %v1733 = vpop.permute.xlu0 %1732
      %1734 = vrot.lane.b32.xlu0 %v1704, 18
      %v1735 = vpop.permute.xlu0 %1734
      %1736 = vrot.lane.b32.xlu0 %v1705, 18
      %v1737 = vpop.permute.xlu0 %1736
      %1738 = vrot.lane.b32.xlu0 %v1706, 18
      %v1739 = vpop.permute.xlu0 %1738
      %1740 = vrot.lane.b32.xlu0 %v1707, 18
      %v1741 = vpop.permute.xlu0 %1740
      %1742 = vrot.lane.b32.xlu0 %v1708, 18
      %v1743 = vpop.permute.xlu0 %1742
      %1744 = vrot.lane.b32.xlu0 %v1709, 18
      %v1745 = vpop.permute.xlu0 %1744
      %1746 = vrot.lane.b32.xlu0 %v1710, 18
      %v1747 = vpop.permute.xlu0 %1746
      %1748 = vrot.lane.b32.xlu0 %v1711, 18
      %v1749 = vpop.permute.xlu0 %1748
      %1750 = vrot.lane.b32.xlu0 %v1712, 18
      %v1751 = vpop.permute.xlu0 %1750
      %1752 = vrot.lane.b32.xlu0 %v1713, 18
      %v1753 = vpop.permute.xlu0 %1752
      %1754 = vrot.lane.b32.xlu0 %v1714, 18
      %v1755 = vpop.permute.xlu0 %1754
      %1756 = vrot.lane.b32.xlu0 %v1715, 18
      %v1757 = vpop.permute.xlu0 %1756
      %v1758 = vsel %vm957, %v1731, %v1733
      %v1759 = vsel %vm957, %v1733, %v1735
      %v1760 = vsel %vm957, %v1735, %v1737
      %v1761 = vsel %vm957, %v1737, %v1739
      %v1762 = vsel %vm957, %v1739, %v1741
      %v1763 = vsel %vm957, %v1741, %v1743
      %v1764 = vsel %vm957, %v1745, %v1747
      %v1765 = vsel %vm957, %v1747, %v1749
      %v1766 = vsel %vm957, %v1749, %v1751
      %v1767 = vsel %vm957, %v1751, %v1753
      %v1768 = vsel %vm957, %v1753, %v1755
      %v1769 = vsel %vm957, %v1755, %v1757
      %1782 = vst [vmem:[#allocation3 + $0x60] sm:$0xff] %v1758
      %1783 = vst [vmem:[#allocation3 + $0x68] sm:$0xff] %v1759
      %1784 = vst [vmem:[#allocation3 + $0x70] sm:$0xff] %v1760
      %1785 = vst [vmem:[#allocation3 + $0x78] sm:$0xff] %v1761
      %1786 = vst [vmem:[#allocation3 + $0x80] sm:$0xff] %v1762
      %1787 = vst [vmem:[#allocation3 + $0x88] sm:$0xff] %v1763
      %1788 = vst [vmem:[#allocation3 + $0x90] sm:$0xff] %v1764
      %1789 = vst [vmem:[#allocation3 + $0x98] sm:$0xff] %v1765
      %1790 = vst [vmem:[#allocation3 + $0xa0] sm:$0xff] %v1766
      %1791 = vst [vmem:[#allocation3 + $0xa8] sm:$0xff] %v1767
      %1792 = vst [vmem:[#allocation3 + $0xb0] sm:$0xff] %v1768
      %1793 = vst [vmem:[#allocation3 + $0xb8] sm:$0xff] %v1769
      %v1794 = vld [vmem:[#allocation2] sm:$0xff]
      %v1795 = vld [vmem:[#allocation2 + $0x8] sm:$0xff]
      %v1796 = vld [vmem:[#allocation2 + $0x10] sm:$0xff]
      %v1797 = vld [vmem:[#allocation2 + $0x18] sm:$0xff]
      %v1798 = vld [vmem:[#allocation2 + $0x20] sm:$0xff]
      %v1799 = vld [vmem:[#allocation2 + $0x28] sm:$0xff]
      %v1800 = vld [vmem:[#allocation2 + $0x30] sm:$0xff]
      %v1801 = vld [vmem:[#allocation2 + $0x40] sm:$0xff]
      %v1802 = vld [vmem:[#allocation2 + $0x48] sm:$0xff]
      %v1803 = vld [vmem:[#allocation2 + $0x50] sm:$0xff]
      %v1804 = vld [vmem:[#allocation2 + $0x58] sm:$0xff]
      %v1805 = vld [vmem:[#allocation2 + $0x60] sm:$0xff]
      %v1806 = vld [vmem:[#allocation2 + $0x68] sm:$0xff]
      %v1807 = vld [vmem:[#allocation2 + $0x70] sm:$0xff]
      %1822 = vrot.lane.b32.xlu0 %v1794, 17
      %v1823 = vpop.permute.xlu0 %1822
      %1824 = vrot.lane.b32.xlu0 %v1795, 17
      %v1825 = vpop.permute.xlu0 %1824
      %1826 = vrot.lane.b32.xlu0 %v1796, 17
      %v1827 = vpop.permute.xlu0 %1826
      %1828 = vrot.lane.b32.xlu0 %v1797, 17
      %v1829 = vpop.permute.xlu0 %1828
      %1830 = vrot.lane.b32.xlu0 %v1798, 17
      %v1831 = vpop.permute.xlu0 %1830
      %1832 = vrot.lane.b32.xlu0 %v1799, 17
      %v1833 = vpop.permute.xlu0 %1832
      %1834 = vrot.lane.b32.xlu0 %v1800, 17
      %v1835 = vpop.permute.xlu0 %1834
      %1836 = vrot.lane.b32.xlu0 %v1801, 17
      %v1837 = vpop.permute.xlu0 %1836
      %1838 = vrot.lane.b32.xlu0 %v1802, 17
      %v1839 = vpop.permute.xlu0 %1838
      %1840 = vrot.lane.b32.xlu0 %v1803, 17
      %v1841 = vpop.permute.xlu0 %1840
      %1842 = vrot.lane.b32.xlu0 %v1804, 17
      %v1843 = vpop.permute.xlu0 %1842
      %1844 = vrot.lane.b32.xlu0 %v1805, 17
      %v1845 = vpop.permute.xlu0 %1844
      %1846 = vrot.lane.b32.xlu0 %v1806, 17
      %v1847 = vpop.permute.xlu0 %1846
      %1848 = vrot.lane.b32.xlu0 %v1807, 17
      %v1849 = vpop.permute.xlu0 %1848
      %v1850 = vsel %vm1004, %v1823, %v1825
      %v1851 = vsel %vm1004, %v1825, %v1827
      %v1852 = vsel %vm1004, %v1827, %v1829
      %v1853 = vsel %vm1004, %v1829, %v1831
      %v1854 = vsel %vm1004, %v1831, %v1833
      %v1855 = vsel %vm1004, %v1833, %v1835
      %v1856 = vsel %vm1004, %v1837, %v1839
      %v1857 = vsel %vm1004, %v1839, %v1841
      %v1858 = vsel %vm1004, %v1841, %v1843
      %v1859 = vsel %vm1004, %v1843, %v1845
      %v1860 = vsel %vm1004, %v1845, %v1847
      %v1861 = vsel %vm1004, %v1847, %v1849
      %1874 = vst [vmem:[#allocation3 + $0xc0] sm:$0xff] %v1850
      %1875 = vst [vmem:[#allocation3 + $0xc8] sm:$0xff] %v1851
      %1876 = vst [vmem:[#allocation3 + $0xd0] sm:$0xff] %v1852
      %1877 = vst [vmem:[#allocation3 + $0xd8] sm:$0xff] %v1853
      %1878 = vst [vmem:[#allocation3 + $0xe0] sm:$0xff] %v1854
      %1879 = vst [vmem:[#allocation3 + $0xe8] sm:$0xff] %v1855
      %1880 = vst [vmem:[#allocation3 + $0xf0] sm:$0xff] %v1856
      %1881 = vst [vmem:[#allocation3 + $0xf8] sm:$0xff] %v1857
      %1882 = vst [vmem:[#allocation3 + $0x100] sm:$0xff] %v1858
      %1883 = vst [vmem:[#allocation3 + $0x108] sm:$0xff] %v1859
      %1884 = vst [vmem:[#allocation3 + $0x110] sm:$0xff] %v1860
      %1885 = vst [vmem:[#allocation3 + $0x118] sm:$0xff] %v1861
      %v1886 = vld [vmem:[#allocation2] sm:$0xff]
      %v1887 = vld [vmem:[#allocation2 + $0x8] sm:$0xff]
      %v1888 = vld [vmem:[#allocation2 + $0x10] sm:$0xff]
      %v1889 = vld [vmem:[#allocation2 + $0x18] sm:$0xff]
      %v1890 = vld [vmem:[#allocation2 + $0x20] sm:$0xff]
      %v1891 = vld [vmem:[#allocation2 + $0x28] sm:$0xff]
      %v1892 = vld [vmem:[#allocation2 + $0x30] sm:$0xff]
      %v1893 = vld [vmem:[#allocation2 + $0x40] sm:$0xff]
      %v1894 = vld [vmem:[#allocation2 + $0x48] sm:$0xff]
      %v1895 = vld [vmem:[#allocation2 + $0x50] sm:$0xff]
      %v1896 = vld [vmem:[#allocation2 + $0x58] sm:$0xff]
      %v1897 = vld [vmem:[#allocation2 + $0x60] sm:$0xff]
      %v1898 = vld [vmem:[#allocation2 + $0x68] sm:$0xff]
      %v1899 = vld [vmem:[#allocation2 + $0x70] sm:$0xff]
      %1914 = vrot.lane.b32.xlu0 %v1886, 1
      %v1915 = vpop.permute.xlu0 %1914
      %1916 = vrot.lane.b32.xlu0 %v1887, 1
      %v1917 = vpop.permute.xlu0 %1916
      %1918 = vrot.lane.b32.xlu0 %v1888, 1
      %v1919 = vpop.permute.xlu0 %1918
      %1920 = vrot.lane.b32.xlu0 %v1889, 1
      %v1921 = vpop.permute.xlu0 %1920
      %1922 = vrot.lane.b32.xlu0 %v1890, 1
      %v1923 = vpop.permute.xlu0 %1922
      %1924 = vrot.lane.b32.xlu0 %v1891, 1
      %v1925 = vpop.permute.xlu0 %1924
      %1926 = vrot.lane.b32.xlu0 %v1892, 1
      %v1927 = vpop.permute.xlu0 %1926
      %1928 = vrot.lane.b32.xlu0 %v1893, 1
      %v1929 = vpop.permute.xlu0 %1928
      %1930 = vrot.lane.b32.xlu0 %v1894, 1
      %v1931 = vpop.permute.xlu0 %1930
      %1932 = vrot.lane.b32.xlu0 %v1895, 1
      %v1933 = vpop.permute.xlu0 %1932
      %1934 = vrot.lane.b32.xlu0 %v1896, 1
      %v1935 = vpop.permute.xlu0 %1934
      %1936 = vrot.lane.b32.xlu0 %v1897, 1
      %v1937 = vpop.permute.xlu0 %1936
      %1938 = vrot.lane.b32.xlu0 %v1898, 1
      %v1939 = vpop.permute.xlu0 %1938
      %1940 = vrot.lane.b32.xlu0 %v1899, 1
      %v1941 = vpop.permute.xlu0 %1940
      %v1942 = vsel %vm1051, %v1915, %v1917
      %v1943 = vsel %vm1051, %v1917, %v1919
      %v1944 = vsel %vm1051, %v1919, %v1921
      %v1945 = vsel %vm1051, %v1921, %v1923
      %v1946 = vsel %vm1051, %v1923, %v1925
      %v1947 = vsel %vm1051, %v1925, %v1927
      %v1948 = vsel %vm1051, %v1929, %v1931
      %v1949 = vsel %vm1051, %v1931, %v1933
      %v1950 = vsel %vm1051, %v1933, %v1935
      %v1951 = vsel %vm1051, %v1935, %v1937
      %v1952 = vsel %vm1051, %v1937, %v1939
      %v1953 = vsel %vm1051, %v1939, %v1941
      %1966 = vst [vmem:[#allocation3 + $0x120] sm:$0xff] %v1942
      %1967 = vst [vmem:[#allocation3 + $0x128] sm:$0xff] %v1943
      %1968 = vst [vmem:[#allocation3 + $0x130] sm:$0xff] %v1944
      %1969 = vst [vmem:[#allocation3 + $0x138] sm:$0xff] %v1945
      %1970 = vst [vmem:[#allocation3 + $0x140] sm:$0xff] %v1946
      %1971 = vst [vmem:[#allocation3 + $0x148] sm:$0xff] %v1947
      %1972 = vst [vmem:[#allocation3 + $0x150] sm:$0xff] %v1948
      %1973 = vst [vmem:[#allocation3 + $0x158] sm:$0xff] %v1949
      %1974 = vst [vmem:[#allocation3 + $0x160] sm:$0xff] %v1950
      %1975 = vst [vmem:[#allocation3 + $0x168] sm:$0xff] %v1951
      %1976 = vst [vmem:[#allocation3 + $0x170] sm:$0xff] %v1952
      %1977 = vst [vmem:[#allocation3 + $0x178] sm:$0xff] %v1953
      %v1978 = vld [vmem:[#allocation2 + $0x8] sm:$0xff]
      %v1979 = vld [vmem:[#allocation2 + $0x10] sm:$0xff]
      %v1980 = vld [vmem:[#allocation2 + $0x18] sm:$0xff]
      %v1981 = vld [vmem:[#allocation2 + $0x20] sm:$0xff]
      %v1982 = vld [vmem:[#allocation2 + $0x28] sm:$0xff]
      %v1983 = vld [vmem:[#allocation2 + $0x30] sm:$0xff]
      %v1984 = vld [vmem:[#allocation2 + $0x48] sm:$0xff]
      %v1985 = vld [vmem:[#allocation2 + $0x50] sm:$0xff]
      %v1986 = vld [vmem:[#allocation2 + $0x58] sm:$0xff]
      %v1987 = vld [vmem:[#allocation2 + $0x60] sm:$0xff]
      %v1988 = vld [vmem:[#allocation2 + $0x68] sm:$0xff]
      %v1989 = vld [vmem:[#allocation2 + $0x70] sm:$0xff]
      %1990 = vst [vmem:[#allocation3 + $0x180] sm:$0xff] %v1978
      %1991 = vst [vmem:[#allocation3 + $0x188] sm:$0xff] %v1979
      %1992 = vst [vmem:[#allocation3 + $0x190] sm:$0xff] %v1980
      %1993 = vst [vmem:[#allocation3 + $0x198] sm:$0xff] %v1981
      %1994 = vst [vmem:[#allocation3 + $0x1a0] sm:$0xff] %v1982
      %1995 = vst [vmem:[#allocation3 + $0x1a8] sm:$0xff] %v1983
      %1996 = vst [vmem:[#allocation3 + $0x1b0] sm:$0xff] %v1984
      %1997 = vst [vmem:[#allocation3 + $0x1b8] sm:$0xff] %v1985
      %1998 = vst [vmem:[#allocation3 + $0x1c0] sm:$0xff] %v1986
      %1999 = vst [vmem:[#allocation3 + $0x1c8] sm:$0xff] %v1987
      %2000 = vst [vmem:[#allocation3 + $0x1d0] sm:$0xff] %v1988
      %2001 = vst [vmem:[#allocation3 + $0x1d8] sm:$0xff] %v1989
      %v2002 = vld [vmem:[#allocation2 + $0x8] sm:$0xff]
      %v2003 = vld [vmem:[#allocation2 + $0x10] sm:$0xff]
      %v2004 = vld [vmem:[#allocation2 + $0x18] sm:$0xff]
      %v2005 = vld [vmem:[#allocation2 + $0x20] sm:$0xff]
      %v2006 = vld [vmem:[#allocation2 + $0x28] sm:$0xff]
      %v2007 = vld [vmem:[#allocation2 + $0x30] sm:$0xff]
      %v2008 = vld [vmem:[#allocation2 + $0x38] sm:$0xff]
      %v2009 = vld [vmem:[#allocation2 + $0x48] sm:$0xff]
      %v2010 = vld [vmem:[#allocation2 + $0x50] sm:$0xff]
      %v2011 = vld [vmem:[#allocation2 + $0x58] sm:$0xff]
      %v2012 = vld [vmem:[#allocation2 + $0x60] sm:$0xff]
      %v2013 = vld [vmem:[#allocation2 + $0x68] sm:$0xff]
      %v2014 = vld [vmem:[#allocation2 + $0x70] sm:$0xff]
      %v2015 = vld [vmem:[#allocation2 + $0x78] sm:$0xff]
      %2030 = vrot.lane.b32.xlu0 %v2002, 127
      %v2031 = vpop.permute.xlu0 %2030
      %2032 = vrot.lane.b32.xlu0 %v2003, 127
      %v2033 = vpop.permute.xlu0 %2032
      %2034 = vrot.lane.b32.xlu0 %v2004, 127
      %v2035 = vpop.permute.xlu0 %2034
      %2036 = vrot.lane.b32.xlu0 %v2005, 127
      %v2037 = vpop.permute.xlu0 %2036
      %2038 = vrot.lane.b32.xlu0 %v2006, 127
      %v2039 = vpop.permute.xlu0 %2038
      %2040 = vrot.lane.b32.xlu0 %v2007, 127
      %v2041 = vpop.permute.xlu0 %2040
      %2042 = vrot.lane.b32.xlu0 %v2008, 127
      %v2043 = vpop.permute.xlu0 %2042
      %2044 = vrot.lane.b32.xlu0 %v2009, 127
      %v2045 = vpop.permute.xlu0 %2044
      %2046 = vrot.lane.b32.xlu0 %v2010, 127
      %v2047 = vpop.permute.xlu0 %2046
      %2048 = vrot.lane.b32.xlu0 %v2011, 127
      %v2049 = vpop.permute.xlu0 %2048
      %2050 = vrot.lane.b32.xlu0 %v2012, 127
      %v2051 = vpop.permute.xlu0 %2050
      %2052 = vrot.lane.b32.xlu0 %v2013, 127
      %v2053 = vpop.permute.xlu0 %2052
      %2054 = vrot.lane.b32.xlu0 %v2014, 127
      %v2055 = vpop.permute.xlu0 %2054
      %2056 = vrot.lane.b32.xlu0 %v2015, 127
      %v2057 = vpop.permute.xlu0 %2056
      %v2058 = vsel %vm1110, %v2031, %v2033
      %v2059 = vsel %vm1110, %v2033, %v2035
      %v2060 = vsel %vm1110, %v2035, %v2037
      %v2061 = vsel %vm1110, %v2037, %v2039
      %v2062 = vsel %vm1110, %v2039, %v2041
      %v2063 = vsel %vm1110, %v2041, %v2043
      %v2064 = vsel %vm1110, %v2045, %v2047
      %v2065 = vsel %vm1110, %v2047, %v2049
      %v2066 = vsel %vm1110, %v2049, %v2051
      %v2067 = vsel %vm1110, %v2051, %v2053
      %v2068 = vsel %vm1110, %v2053, %v2055
      %v2069 = vsel %vm1110, %v2055, %v2057
      %2082 = vst [vmem:[#allocation3 + $0x1e0] sm:$0xff] %v2058
      %2083 = vst [vmem:[#allocation3 + $0x1e8] sm:$0xff] %v2059
      %2084 = vst [vmem:[#allocation3 + $0x1f0] sm:$0xff] %v2060
      %2085 = vst [vmem:[#allocation3 + $0x1f8] sm:$0xff] %v2061
      %2086 = vst [vmem:[#allocation3 + $0x200] sm:$0xff] %v2062
      %2087 = vst [vmem:[#allocation3 + $0x208] sm:$0xff] %v2063
      %2088 = vst [vmem:[#allocation3 + $0x210] sm:$0xff] %v2064
      %2089 = vst [vmem:[#allocation3 + $0x218] sm:$0xff] %v2065
      %2090 = vst [vmem:[#allocation3 + $0x220] sm:$0xff] %v2066
      %2091 = vst [vmem:[#allocation3 + $0x228] sm:$0xff] %v2067
      %2092 = vst [vmem:[#allocation3 + $0x230] sm:$0xff] %v2068
      %2093 = vst [vmem:[#allocation3 + $0x238] sm:$0xff] %v2069
      %v2094 = vld [vmem:[#allocation2 + $0x8] sm:$0xff]
      %v2095 = vld [vmem:[#allocation2 + $0x10] sm:$0xff]
      %v2096 = vld [vmem:[#allocation2 + $0x18] sm:$0xff]
      %v2097 = vld [vmem:[#allocation2 + $0x20] sm:$0xff]
      %v2098 = vld [vmem:[#allocation2 + $0x28] sm:$0xff]
      %v2099 = vld [vmem:[#allocation2 + $0x30] sm:$0xff]
      %v2100 = vld [vmem:[#allocation2 + $0x38] sm:$0xff]
      %v2101 = vld [vmem:[#allocation2 + $0x48] sm:$0xff]
      %v2102 = vld [vmem:[#allocation2 + $0x50] sm:$0xff]
      %v2103 = vld [vmem:[#allocation2 + $0x58] sm:$0xff]
      %v2104 = vld [vmem:[#allocation2 + $0x60] sm:$0xff]
      %v2105 = vld [vmem:[#allocation2 + $0x68] sm:$0xff]
      %v2106 = vld [vmem:[#allocation2 + $0x70] sm:$0xff]
      %v2107 = vld [vmem:[#allocation2 + $0x78] sm:$0xff]
      %2122 = vrot.lane.b32.xlu0 %v2094, 111
      %v2123 = vpop.permute.xlu0 %2122
      %2124 = vrot.lane.b32.xlu0 %v2095, 111
      %v2125 = vpop.permute.xlu0 %2124
      %2126 = vrot.lane.b32.xlu0 %v2096, 111
      %v2127 = vpop.permute.xlu0 %2126
      %2128 = vrot.lane.b32.xlu0 %v2097, 111
      %v2129 = vpop.permute.xlu0 %2128
      %2130 = vrot.lane.b32.xlu0 %v2098, 111
      %v2131 = vpop.permute.xlu0 %2130
      %2132 = vrot.lane.b32.xlu0 %v2099, 111
      %v2133 = vpop.permute.xlu0 %2132
      %2134 = vrot.lane.b32.xlu0 %v2100, 111
      %v2135 = vpop.permute.xlu0 %2134
      %2136 = vrot.lane.b32.xlu0 %v2101, 111
      %v2137 = vpop.permute.xlu0 %2136
      %2138 = vrot.lane.b32.xlu0 %v2102, 111
      %v2139 = vpop.permute.xlu0 %2138
      %2140 = vrot.lane.b32.xlu0 %v2103, 111
      %v2141 = vpop.permute.xlu0 %2140
      %2142 = vrot.lane.b32.xlu0 %v2104, 111
      %v2143 = vpop.permute.xlu0 %2142
      %2144 = vrot.lane.b32.xlu0 %v2105, 111
      %v2145 = vpop.permute.xlu0 %2144
      %2146 = vrot.lane.b32.xlu0 %v2106, 111
      %v2147 = vpop.permute.xlu0 %2146
      %2148 = vrot.lane.b32.xlu0 %v2107, 111
      %v2149 = vpop.permute.xlu0 %2148
      %v2150 = vsel %vm1157, %v2123, %v2125
      %v2151 = vsel %vm1157, %v2125, %v2127
      %v2152 = vsel %vm1157, %v2127, %v2129
      %v2153 = vsel %vm1157, %v2129, %v2131
      %v2154 = vsel %vm1157, %v2131, %v2133
      %v2155 = vsel %vm1157, %v2133, %v2135
      %v2156 = vsel %vm1157, %v2137, %v2139
      %v2157 = vsel %vm1157, %v2139, %v2141
      %v2158 = vsel %vm1157, %v2141, %v2143
      %v2159 = vsel %vm1157, %v2143, %v2145
      %v2160 = vsel %vm1157, %v2145, %v2147
      %v2161 = vsel %vm1157, %v2147, %v2149
      %2174 = vst [vmem:[#allocation3 + $0x240] sm:$0xff] %v2150
      %2175 = vst [vmem:[#allocation3 + $0x248] sm:$0xff] %v2151
      %2176 = vst [vmem:[#allocation3 + $0x250] sm:$0xff] %v2152
      %2177 = vst [vmem:[#allocation3 + $0x258] sm:$0xff] %v2153
      %2178 = vst [vmem:[#allocation3 + $0x260] sm:$0xff] %v2154
      %2179 = vst [vmem:[#allocation3 + $0x268] sm:$0xff] %v2155
      %2180 = vst [vmem:[#allocation3 + $0x270] sm:$0xff] %v2156
      %2181 = vst [vmem:[#allocation3 + $0x278] sm:$0xff] %v2157
      %2182 = vst [vmem:[#allocation3 + $0x280] sm:$0xff] %v2158
      %2183 = vst [vmem:[#allocation3 + $0x288] sm:$0xff] %v2159
      %2184 = vst [vmem:[#allocation3 + $0x290] sm:$0xff] %v2160
      %2185 = vst [vmem:[#allocation3 + $0x298] sm:$0xff] %v2161
      %v2186 = vld [vmem:[#allocation2 + $0x8] sm:$0xff]
      %v2187 = vld [vmem:[#allocation2 + $0x10] sm:$0xff]
      %v2188 = vld [vmem:[#allocation2 + $0x18] sm:$0xff]
      %v2189 = vld [vmem:[#allocation2 + $0x20] sm:$0xff]
      %v2190 = vld [vmem:[#allocation2 + $0x28] sm:$0xff]
      %v2191 = vld [vmem:[#allocation2 + $0x30] sm:$0xff]
      %v2192 = vld [vmem:[#allocation2 + $0x38] sm:$0xff]
      %v2193 = vld [vmem:[#allocation2 + $0x48] sm:$0xff]
      %v2194 = vld [vmem:[#allocation2 + $0x50] sm:$0xff]
      %v2195 = vld [vmem:[#allocation2 + $0x58] sm:$0xff]
      %v2196 = vld [vmem:[#allocation2 + $0x60] sm:$0xff]
      %v2197 = vld [vmem:[#allocation2 + $0x68] sm:$0xff]
      %v2198 = vld [vmem:[#allocation2 + $0x70] sm:$0xff]
      %v2199 = vld [vmem:[#allocation2 + $0x78] sm:$0xff]
      %2214 = vrot.lane.b32.xlu0 %v2186, 110
      %v2215 = vpop.permute.xlu0 %2214
      %2216 = vrot.lane.b32.xlu0 %v2187, 110
      %v2217 = vpop.permute.xlu0 %2216
      %2218 = vrot.lane.b32.xlu0 %v2188, 110
      %v2219 = vpop.permute.xlu0 %2218
      %2220 = vrot.lane.b32.xlu0 %v2189, 110
      %v2221 = vpop.permute.xlu0 %2220
      %2222 = vrot.lane.b32.xlu0 %v2190, 110
      %v2223 = vpop.permute.xlu0 %2222
      %2224 = vrot.lane.b32.xlu0 %v2191, 110
      %v2225 = vpop.permute.xlu0 %2224
      %2226 = vrot.lane.b32.xlu0 %v2192, 110
      %v2227 = vpop.permute.xlu0 %2226
      %2228 = vrot.lane.b32.xlu0 %v2193, 110
      %v2229 = vpop.permute.xlu0 %2228
      %2230 = vrot.lane.b32.xlu0 %v2194, 110
      %v2231 = vpop.permute.xlu0 %2230
      %2232 = vrot.lane.b32.xlu0 %v2195, 110
      %v2233 = vpop.permute.xlu0 %2232
      %2234 = vrot.lane.b32.xlu0 %v2196, 110
      %v2235 = vpop.permute.xlu0 %2234
      %2236 = vrot.lane.b32.xlu0 %v2197, 110
      %v2237 = vpop.permute.xlu0 %2236
      %2238 = vrot.lane.b32.xlu0 %v2198, 110
      %v2239 = vpop.permute.xlu0 %2238
      %2240 = vrot.lane.b32.xlu0 %v2199, 110
      %v2241 = vpop.permute.xlu0 %2240
      %v2242 = vsel %vm1204, %v2215, %v2217
      %v2243 = vsel %vm1204, %v2217, %v2219
      %v2244 = vsel %vm1204, %v2219, %v2221
      %v2245 = vsel %vm1204, %v2221, %v2223
      %v2246 = vsel %vm1204, %v2223, %v2225
      %v2247 = vsel %vm1204, %v2225, %v2227
      %v2248 = vsel %vm1204, %v2229, %v2231
      %v2249 = vsel %vm1204, %v2231, %v2233
      %v2250 = vsel %vm1204, %v2233, %v2235
      %v2251 = vsel %vm1204, %v2235, %v2237
      %v2252 = vsel %vm1204, %v2237, %v2239
      %v2253 = vsel %vm1204, %v2239, %v2241
      %2266 = vst [vmem:[#allocation3 + $0x2a0] sm:$0xff] %v2242
      %2267 = vst [vmem:[#allocation3 + $0x2a8] sm:$0xff] %v2243
      %2268 = vst [vmem:[#allocation3 + $0x2b0] sm:$0xff] %v2244
      %2269 = vst [vmem:[#allocation3 + $0x2b8] sm:$0xff] %v2245
      %2270 = vst [vmem:[#allocation3 + $0x2c0] sm:$0xff] %v2246
      %2271 = vst [vmem:[#allocation3 + $0x2c8] sm:$0xff] %v2247
      %2272 = vst [vmem:[#allocation3 + $0x2d0] sm:$0xff] %v2248
      %2273 = vst [vmem:[#allocation3 + $0x2d8] sm:$0xff] %v2249
      %2274 = vst [vmem:[#allocation3 + $0x2e0] sm:$0xff] %v2250
      %2275 = vst [vmem:[#allocation3 + $0x2e8] sm:$0xff] %v2251
      %2276 = vst [vmem:[#allocation3 + $0x2f0] sm:$0xff] %v2252
      %2277 = vst [vmem:[#allocation3 + $0x2f8] sm:$0xff] %v2253
      %v2278 = vld [vmem:[#allocation2 + $0x8] sm:$0xff]
      %v2279 = vld [vmem:[#allocation2 + $0x10] sm:$0xff]
      %v2280 = vld [vmem:[#allocation2 + $0x18] sm:$0xff]
      %v2281 = vld [vmem:[#allocation2 + $0x20] sm:$0xff]
      %v2282 = vld [vmem:[#allocation2 + $0x28] sm:$0xff]
      %v2283 = vld [vmem:[#allocation2 + $0x30] sm:$0xff]
      %v2284 = vld [vmem:[#allocation2 + $0x38] sm:$0xff]
      %v2285 = vld [vmem:[#allocation2 + $0x48] sm:$0xff]
      %v2286 = vld [vmem:[#allocation2 + $0x50] sm:$0xff]
      %v2287 = vld [vmem:[#allocation2 + $0x58] sm:$0xff]
      %v2288 = vld [vmem:[#allocation2 + $0x60] sm:$0xff]
      %v2289 = vld [vmem:[#allocation2 + $0x68] sm:$0xff]
      %v2290 = vld [vmem:[#allocation2 + $0x70] sm:$0xff]
      %v2291 = vld [vmem:[#allocation2 + $0x78] sm:$0xff]
      %2306 = vrot.lane.b32.xlu0 %v2278, 109
      %v2307 = vpop.permute.xlu0 %2306
      %2308 = vrot.lane.b32.xlu0 %v2279, 109
      %v2309 = vpop.permute.xlu0 %2308
      %2310 = vrot.lane.b32.xlu0 %v2280, 109
      %v2311 = vpop.permute.xlu0 %2310
      %2312 = vrot.lane.b32.xlu0 %v2281, 109
      %v2313 = vpop.permute.xlu0 %2312
      %2314 = vrot.lane.b32.xlu0 %v2282, 109
      %v2315 = vpop.permute.xlu0 %2314
      %2316 = vrot.lane.b32.xlu0 %v2283, 109
      %v2317 = vpop.permute.xlu0 %2316
      %2318 = vrot.lane.b32.xlu0 %v2284, 109
      %v2319 = vpop.permute.xlu0 %2318
      %2320 = vrot.lane.b32.xlu0 %v2285, 109
      %v2321 = vpop.permute.xlu0 %2320
      %2322 = vrot.lane.b32.xlu0 %v2286, 109
      %v2323 = vpop.permute.xlu0 %2322
      %2324 = vrot.lane.b32.xlu0 %v2287, 109
      %v2325 = vpop.permute.xlu0 %2324
      %2326 = vrot.lane.b32.xlu0 %v2288, 109
      %v2327 = vpop.permute.xlu0 %2326
      %2328 = vrot.lane.b32.xlu0 %v2289, 109
      %v2329 = vpop.permute.xlu0 %2328
      %2330 = vrot.lane.b32.xlu0 %v2290, 109
      %v2331 = vpop.permute.xlu0 %2330
      %2332 = vrot.lane.b32.xlu0 %v2291, 109
      %v2333 = vpop.permute.xlu0 %2332
      %v2334 = vsel %vm1251, %v2307, %v2309
      %v2335 = vsel %vm1251, %v2309, %v2311
      %v2336 = vsel %vm1251, %v2311, %v2313
      %v2337 = vsel %vm1251, %v2313, %v2315
      %v2338 = vsel %vm1251, %v2315, %v2317
      %v2339 = vsel %vm1251, %v2317, %v2319
      %v2340 = vsel %vm1251, %v2321, %v2323
      %v2341 = vsel %vm1251, %v2323, %v2325
      %v2342 = vsel %vm1251, %v2325, %v2327
      %v2343 = vsel %vm1251, %v2327, %v2329
      %v2344 = vsel %vm1251, %v2329, %v2331
      %v2345 = vsel %vm1251, %v2331, %v2333
      %2358 = vst [vmem:[#allocation3 + $0x300] sm:$0xff] %v2334
      %2359 = vst [vmem:[#allocation3 + $0x308] sm:$0xff] %v2335
      %2360 = vst [vmem:[#allocation3 + $0x310] sm:$0xff] %v2336
      %2361 = vst [vmem:[#allocation3 + $0x318] sm:$0xff] %v2337
      %2362 = vst [vmem:[#allocation3 + $0x320] sm:$0xff] %v2338
      %2363 = vst [vmem:[#allocation3 + $0x328] sm:$0xff] %v2339
      %2364 = vst [vmem:[#allocation3 + $0x330] sm:$0xff] %v2340
      %2365 = vst [vmem:[#allocation3 + $0x338] sm:$0xff] %v2341
      %2366 = vst [vmem:[#allocation3 + $0x340] sm:$0xff] %v2342
      %2367 = vst [vmem:[#allocation3 + $0x348] sm:$0xff] %v2343
      %2368 = vst [vmem:[#allocation3 + $0x350] sm:$0xff] %v2344
      %2369 = vst [vmem:[#allocation3 + $0x358] sm:$0xff] %v2345
      %v2370 = vld [vmem:[#allocation3] sm:$0xff]
      %v2371 = vld [vmem:[#allocation3 + $0x8] sm:$0xff]
      %v2372 = vld [vmem:[#allocation3 + $0x10] sm:$0xff]
      %v2373 = vld [vmem:[#allocation3 + $0x18] sm:$0xff]
      %v2374 = vld [vmem:[#allocation3 + $0x20] sm:$0xff]
      %v2375 = vld [vmem:[#allocation3 + $0x28] sm:$0xff]
      %v2376 = vld [vmem:[#allocation3 + $0x30] sm:$0xff]
      %v2377 = vld [vmem:[#allocation3 + $0x38] sm:$0xff]
      %v2378 = vld [vmem:[#allocation3 + $0x40] sm:$0xff]
      %v2379 = vld [vmem:[#allocation3 + $0x48] sm:$0xff]
      %v2380 = vld [vmem:[#allocation3 + $0x50] sm:$0xff]
      %v2381 = vld [vmem:[#allocation3 + $0x58] sm:$0xff]
      %v2382 = vld [vmem:[#allocation3 + $0x60] sm:$0xff]
      %v2383 = vld [vmem:[#allocation3 + $0x68] sm:$0xff]
      %v2384 = vld [vmem:[#allocation3 + $0x70] sm:$0xff]
      %v2385 = vld [vmem:[#allocation3 + $0x78] sm:$0xff]
      %v2386 = vld [vmem:[#allocation3 + $0x80] sm:$0xff]
      %v2387 = vld [vmem:[#allocation3 + $0x88] sm:$0xff]
      %v2388 = vld [vmem:[#allocation3 + $0x90] sm:$0xff]
      %v2389 = vld [vmem:[#allocation3 + $0x98] sm:$0xff]
      %v2390 = vld [vmem:[#allocation3 + $0xa0] sm:$0xff]
      %v2391 = vld [vmem:[#allocation3 + $0xa8] sm:$0xff]
      %v2392 = vld [vmem:[#allocation3 + $0xb0] sm:$0xff]
      %v2393 = vld [vmem:[#allocation3 + $0xb8] sm:$0xff]
      %v2394 = vld [vmem:[#allocation3 + $0xc0] sm:$0xff]
      %v2395 = vld [vmem:[#allocation3 + $0xc8] sm:$0xff]
      %v2396 = vld [vmem:[#allocation3 + $0xd0] sm:$0xff]
      %v2397 = vld [vmem:[#allocation3 + $0xd8] sm:$0xff]
      %v2398 = vld [vmem:[#allocation3 + $0xe0] sm:$0xff]
      %v2399 = vld [vmem:[#allocation3 + $0xe8] sm:$0xff]
      %v2400 = vld [vmem:[#allocation3 + $0xf0] sm:$0xff]
      %v2401 = vld [vmem:[#allocation3 + $0xf8] sm:$0xff]
      %v2402 = vld [vmem:[#allocation3 + $0x100] sm:$0xff]
      %v2403 = vld [vmem:[#allocation3 + $0x108] sm:$0xff]
      %v2404 = vld [vmem:[#allocation3 + $0x110] sm:$0xff]
      %v2405 = vld [vmem:[#allocation3 + $0x118] sm:$0xff]
      %v2406 = vld [vmem:[#allocation3 + $0x120] sm:$0xff]
      %v2407 = vld [vmem:[#allocation3 + $0x128] sm:$0xff]
      %v2408 = vld [vmem:[#allocation3 + $0x130] sm:$0xff]
      %v2409 = vld [vmem:[#allocation3 + $0x138] sm:$0xff]
      %v2410 = vld [vmem:[#allocation3 + $0x140] sm:$0xff]
      %v2411 = vld [vmem:[#allocation3 + $0x148] sm:$0xff]
      %v2412 = vld [vmem:[#allocation3 + $0x150] sm:$0xff]
      %v2413 = vld [vmem:[#allocation3 + $0x158] sm:$0xff]
      %v2414 = vld [vmem:[#allocation3 + $0x160] sm:$0xff]
      %v2415 = vld [vmem:[#allocation3 + $0x168] sm:$0xff]
      %v2416 = vld [vmem:[#allocation3 + $0x170] sm:$0xff]
      %v2417 = vld [vmem:[#allocation3 + $0x178] sm:$0xff]
      %v2418 = vld [vmem:[#allocation3 + $0x180] sm:$0xff]
      %v2419 = vld [vmem:[#allocation3 + $0x188] sm:$0xff]
      %v2420 = vld [vmem:[#allocation3 + $0x190] sm:$0xff]
      %v2421 = vld [vmem:[#allocation3 + $0x198] sm:$0xff]
      %v2422 = vld [vmem:[#allocation3 + $0x1a0] sm:$0xff]
      %v2423 = vld [vmem:[#allocation3 + $0x1a8] sm:$0xff]
      %v2424 = vld [vmem:[#allocation3 + $0x1b0] sm:$0xff]
      %v2425 = vld [vmem:[#allocation3 + $0x1b8] sm:$0xff]
      %v2426 = vld [vmem:[#allocation3 + $0x1c0] sm:$0xff]
      %v2427 = vld [vmem:[#allocation3 + $0x1c8] sm:$0xff]
      %v2428 = vld [vmem:[#allocation3 + $0x1d0] sm:$0xff]
      %v2429 = vld [vmem:[#allocation3 + $0x1d8] sm:$0xff]
      %v2430 = vld [vmem:[#allocation3 + $0x1e0] sm:$0xff]
      %v2431 = vld [vmem:[#allocation3 + $0x1e8] sm:$0xff]
      %v2432 = vld [vmem:[#allocation3 + $0x1f0] sm:$0xff]
      %v2433 = vld [vmem:[#allocation3 + $0x1f8] sm:$0xff]
      %v2434 = vld [vmem:[#allocation3 + $0x200] sm:$0xff]
      %v2435 = vld [vmem:[#allocation3 + $0x208] sm:$0xff]
      %v2436 = vld [vmem:[#allocation3 + $0x210] sm:$0xff]
      %v2437 = vld [vmem:[#allocation3 + $0x218] sm:$0xff]
      %v2438 = vld [vmem:[#allocation3 + $0x220] sm:$0xff]
      %v2439 = vld [vmem:[#allocation3 + $0x228] sm:$0xff]
      %v2440 = vld [vmem:[#allocation3 + $0x230] sm:$0xff]
      %v2441 = vld [vmem:[#allocation3 + $0x238] sm:$0xff]
      %v2442 = vld [vmem:[#allocation3 + $0x240] sm:$0xff]
      %v2443 = vld [vmem:[#allocation3 + $0x248] sm:$0xff]
      %v2444 = vld [vmem:[#allocation3 + $0x250] sm:$0xff]
      %v2445 = vld [vmem:[#allocation3 + $0x258] sm:$0xff]
      %v2446 = vld [vmem:[#allocation3 + $0x260] sm:$0xff]
      %v2447 = vld [vmem:[#allocation3 + $0x268] sm:$0xff]
      %v2448 = vld [vmem:[#allocation3 + $0x270] sm:$0xff]
      %v2449 = vld [vmem:[#allocation3 + $0x278] sm:$0xff]
      %v2450 = vld [vmem:[#allocation3 + $0x280] sm:$0xff]
      %v2451 = vld [vmem:[#allocation3 + $0x288] sm:$0xff]
      %v2452 = vld [vmem:[#allocation3 + $0x290] sm:$0xff]
      %v2453 = vld [vmem:[#allocation3 + $0x298] sm:$0xff]
      %v2454 = vld [vmem:[#allocation3 + $0x2a0] sm:$0xff]
      %v2455 = vld [vmem:[#allocation3 + $0x2a8] sm:$0xff]
      %v2456 = vld [vmem:[#allocation3 + $0x2b0] sm:$0xff]
      %v2457 = vld [vmem:[#allocation3 + $0x2b8] sm:$0xff]
      %v2458 = vld [vmem:[#allocation3 + $0x2c0] sm:$0xff]
      %v2459 = vld [vmem:[#allocation3 + $0x2c8] sm:$0xff]
      %v2460 = vld [vmem:[#allocation3 + $0x2d0] sm:$0xff]
      %v2461 = vld [vmem:[#allocation3 + $0x2d8] sm:$0xff]
      %v2462 = vld [vmem:[#allocation3 + $0x2e0] sm:$0xff]
      %v2463 = vld [vmem:[#allocation3 + $0x2e8] sm:$0xff]
      %v2464 = vld [vmem:[#allocation3 + $0x2f0] sm:$0xff]
      %v2465 = vld [vmem:[#allocation3 + $0x2f8] sm:$0xff]
      %v2466 = vld [vmem:[#allocation3 + $0x300] sm:$0xff]
      %v2467 = vld [vmem:[#allocation3 + $0x308] sm:$0xff]
      %v2468 = vld [vmem:[#allocation3 + $0x310] sm:$0xff]
      %v2469 = vld [vmem:[#allocation3 + $0x318] sm:$0xff]
      %v2470 = vld [vmem:[#allocation3 + $0x320] sm:$0xff]
      %v2471 = vld [vmem:[#allocation3 + $0x328] sm:$0xff]
      %v2472 = vld [vmem:[#allocation3 + $0x330] sm:$0xff]
      %v2473 = vld [vmem:[#allocation3 + $0x338] sm:$0xff]
      %v2474 = vld [vmem:[#allocation3 + $0x340] sm:$0xff]
      %v2475 = vld [vmem:[#allocation3 + $0x348] sm:$0xff]
      %v2476 = vld [vmem:[#allocation3 + $0x350] sm:$0xff]
      %v2477 = vld [vmem:[#allocation3 + $0x358] sm:$0xff]
      %s2478 = scalar_lea.vmem %s2, 96
      %v2479 = vld [vmem:[%s2478] sm:$0xff]
      %v2480 = vld [vmem:[%s2478 + $0x8] sm:$0xf]
      %v2481 = vld [vmem:[%s2478 + $0xc] sm:$0xff]
      %v2482 = vld [vmem:[%s2478 + $0x14] sm:$0xf]
      %s2483 = scalar_lea.vmem %s3, 64
      %v2484 = vld [vmem:[%s2483] sm:$0xff]
      %v2485 = vld [vmem:[%s2483 + $0x8] sm:$0xff]
      %2487 = vset.pattern.permute.xlu0 0
      %2488 = vperm.xlu0 %2487, %v2484
      %v2489 = vpop.permute.xlu0 %2488
      %2492 = vset.pattern.permute.xlu0 0
      %2493 = vperm.xlu0 %2492, %v2485
      %v2494 = vpop.permute.xlu0 %2493
      %v2500 = vunpack.c.l.b16 %v2479
      %v2501 = vunpack.c.h.b16 %v2479
      %v2502 = vunpack.c.l.b16 %v2480
      %v2503 = vunpack.c.l.b16 %v2481
      %v2504 = vunpack.c.h.b16 %v2481
      %v2505 = vunpack.c.l.b16 %v2482
      %v2506 = vpack.c.b16 %v2503, %v2500
      %v2507 = vpack.c.b16 %v2504, %v2501
      %v2508 = vpack.c.b16 %v2505, %v2502
      %vm2511 = vcmask 261120
      %v2513 = vsel %vm2511, %v2508, 0
      %2515 = vmatprep.subr.bf16.mxu0 %v2371
      %2516 = vmatpush1.bf16.msra.mxu0 %v2370
      %2517 = vmatprep.subr.bf16.mxu0 %v2377
      %2518 = vmatpush1.bf16.msra.mxu0 %v2376
      %2519 = vmatprep.subr.bf16.mxu0 %v2383
      %2520 = vmatpush1.bf16.msra.mxu0 %v2382
      %2521 = vmatprep.subr.bf16.mxu0 %v2389
      %2522 = vmatpush1.bf16.msra.mxu0 %v2388
      %2523 = vmatprep.subr.bf16.mxu0 %v2395
      %2524 = vmatpush1.bf16.msra.mxu0 %v2394
      %2525 = vmatprep.subr.bf16.mxu0 %v2401
      %2526 = vmatpush1.bf16.msra.mxu0 %v2400
      %2527 = vmatprep.subr.bf16.mxu0 %v2407
      %2528 = vmatpush1.bf16.msra.mxu0 %v2406
      %2529 = vmatprep.subr.bf16.mxu0 %v2413
      %2530 = vmatpush1.bf16.msra.mxu0 %v2412
      %2531 = vmatprep.subr.bf16.mxu0 %v2419
      %2532 = vmatpush1.bf16.msra.mxu0 %v2418
      %2533 = vmatprep.subr.bf16.mxu0 %v2425
      %2534 = vmatpush1.bf16.msra.mxu0 %v2424
      %2535 = vmatprep.subr.bf16.mxu0 %v2431
      %2536 = vmatpush1.bf16.msra.mxu0 %v2430
      %2537 = vmatprep.subr.bf16.mxu0 %v2437
      %2538 = vmatpush1.bf16.msra.mxu0 %v2436
      %2539 = vmatprep.subr.bf16.mxu0 %v2443
      %2540 = vmatpush1.bf16.msra.mxu0 %v2442
      %2541 = vmatprep.subr.bf16.mxu0 %v2449
      %2542 = vmatpush1.bf16.msra.mxu0 %v2448
      %2543 = vmatprep.subr.bf16.mxu0 %v2455
      %2544 = vmatpush1.bf16.msra.mxu0 %v2454
      %2545 = vmatprep.subr.bf16.mxu0 %v2461
      %2546 = vmatpush1.bf16.msra.mxu0 %v2460
      %2547 = vmatprep.mubr.bf16.mxu0 %v2507
      %2548 = vmatmul.mubr.bf16.gmra.mrb[0].mxu0 %v2506
      %v2549 = vpop.f32.mrb[0].mxu0
      %v2550 = vadd.f32 %v2489, %v2549
      %v2551 = vpop.f32.mrb[0].mxu0
      %v2552 = vadd.f32 %v2489, %v2551
      %v2553 = vpop.f32.mrb[0].mxu0
      %v2554 = vadd.f32 %v2494, %v2553
      %v2555 = vpop.f32.mrb[0].mxu0
      %v2556 = vadd.f32 %v2494, %v2555
      %2557 = vdwg.mxu0
      %2558 = vmatprep.subr.bf16.mxu0 %v2467
      %2559 = vmatpush1.bf16.msra.mxu0 %v2466
      %2560 = vmatprep.subr.bf16.mxu0 %v2473
      %2561 = vmatpush1.bf16.msra.mxu0 %v2472
      %2562 = vmatprep.subr.bf16.mxu0 0
      %2563 = vmatpush1.bf16.msra.mxu0 0
      %2564 = vmatprep.subr.bf16.mxu0 0
      %2565 = vmatpush1.bf16.msra.mxu0 0
      %2566 = vmatprep.subr.bf16.mxu0 0
      %2567 = vmatpush1.bf16.msra.mxu0 0
      %2568 = vmatprep.subr.bf16.mxu0 0
      %2569 = vmatpush1.bf16.msra.mxu0 0
      %2570 = vmatprep.subr.bf16.mxu0 0
      %2571 = vmatpush1.bf16.msra.mxu0 0
      %2572 = vmatprep.subr.bf16.mxu0 0
      %2573 = vmatpush1.bf16.msra.mxu0 0
      %2574 = vmatprep.subr.bf16.mxu0 0
      %2575 = vmatpush1.bf16.msra.mxu0 0
      %2576 = vmatprep.subr.bf16.mxu0 0
      %2577 = vmatpush1.bf16.msra.mxu0 0
      %2578 = vmatprep.subr.bf16.mxu0 0
      %2579 = vmatpush1.bf16.msra.mxu0 0
      %2580 = vmatprep.subr.bf16.mxu0 0
      %2581 = vmatpush1.bf16.msra.mxu0 0
      %2582 = vmatprep.subr.bf16.mxu0 0
      %2583 = vmatpush1.bf16.msra.mxu0 0
      %2584 = vmatprep.subr.bf16.mxu0 0
      %2585 = vmatpush1.bf16.msra.mxu0 0
      %2586 = vmatprep.subr.bf16.mxu0 0
      %2587 = vmatpush1.bf16.msra.mxu0 0
      %2588 = vmatprep.subr.bf16.mxu0 0
      %2589 = vmatpush1.bf16.msra.mxu0 0
      %2590 = vmatprep.mubr.bf16.mxu0 0
      %2591 = vmatmul.mubr.bf16.gmra.mrb[0].mxu0 %v2513
      %v2592 = vpop.f32.mrb[0].mxu0
      %v2593 = vadd.f32 %v2550, %v2592
      %v2594 = vpop.f32.mrb[0].mxu0
      %v2595 = vadd.f32 %v2552, %v2594
      %v2596 = vpop.f32.mrb[0].mxu0
      %v2597 = vadd.f32 %v2554, %v2596
      %v2598 = vpop.f32.mrb[0].mxu0
      %v2599 = vadd.f32 %v2556, %v2598
      %2600 = vdwg.mxu0
      %2601 = vmatprep.subr.bf16.mxu0 %v2373
      %2602 = vmatpush1.bf16.msra.mxu0 %v2372
      %2603 = vmatprep.subr.bf16.mxu0 %v2379
      %2604 = vmatpush1.bf16.msra.mxu0 %v2378
      %2605 = vmatprep.subr.bf16.mxu0 %v2385
      %2606 = vmatpush1.bf16.msra.mxu0 %v2384
      %2607 = vmatprep.subr.bf16.mxu0 %v2391
      %2608 = vmatpush1.bf16.msra.mxu0 %v2390
      %2609 = vmatprep.subr.bf16.mxu0 %v2397
      %2610 = vmatpush1.bf16.msra.mxu0 %v2396
      %2611 = vmatprep.subr.bf16.mxu0 %v2403
      %2612 = vmatpush1.bf16.msra.mxu0 %v2402
      %2613 = vmatprep.subr.bf16.mxu0 %v2409
      %2614 = vmatpush1.bf16.msra.mxu0 %v2408
      %2615 = vmatprep.subr.bf16.mxu0 %v2415
      %2616 = vmatpush1.bf16.msra.mxu0 %v2414
      %2617 = vmatprep.subr.bf16.mxu0 %v2421
      %2618 = vmatpush1.bf16.msra.mxu0 %v2420
      %2619 = vmatprep.subr.bf16.mxu0 %v2427
      %2620 = vmatpush1.bf16.msra.mxu0 %v2426
      %2621 = vmatprep.subr.bf16.mxu0 %v2433
      %2622 = vmatpush1.bf16.msra.mxu0 %v2432
      %2623 = vmatprep.subr.bf16.mxu0 %v2439
      %2624 = vmatpush1.bf16.msra.mxu0 %v2438
      %2625 = vmatprep.subr.bf16.mxu0 %v2445
      %2626 = vmatpush1.bf16.msra.mxu0 %v2444
      %2627 = vmatprep.subr.bf16.mxu0 %v2451
      %2628 = vmatpush1.bf16.msra.mxu0 %v2450
      %2629 = vmatprep.subr.bf16.mxu0 %v2457
      %2630 = vmatpush1.bf16.msra.mxu0 %v2456
      %2631 = vmatprep.subr.bf16.mxu0 %v2463
      %2632 = vmatpush1.bf16.msra.mxu0 %v2462
      %2633 = vmatprep.mubr.bf16.mxu0 %v2507
      %2634 = vmatmul.mubr.bf16.gmra.mrb[0].mxu0 %v2506
      %v2635 = vpop.f32.mrb[0].mxu0
      %v2636 = vadd.f32 %v2489, %v2635
      %v2637 = vpop.f32.mrb[0].mxu0
      %v2638 = vadd.f32 %v2489, %v2637
      %v2639 = vpop.f32.mrb[0].mxu0
      %v2640 = vadd.f32 %v2494, %v2639
      %v2641 = vpop.f32.mrb[0].mxu0
      %v2642 = vadd.f32 %v2494, %v2641
      %2643 = vdwg.mxu0
      %2644 = vmatprep.subr.bf16.mxu0 %v2469
      %2645 = vmatpush1.bf16.msra.mxu0 %v2468
      %2646 = vmatprep.subr.bf16.mxu0 %v2475
      %2647 = vmatpush1.bf16.msra.mxu0 %v2474
      %2648 = vmatprep.subr.bf16.mxu0 0
      %2649 = vmatpush1.bf16.msra.mxu0 0
      %2650 = vmatprep.subr.bf16.mxu0 0
      %2651 = vmatpush1.bf16.msra.mxu0 0
      %2652 = vmatprep.subr.bf16.mxu0 0
      %2653 = vmatpush1.bf16.msra.mxu0 0
      %2654 = vmatprep.subr.bf16.mxu0 0
      %2655 = vmatpush1.bf16.msra.mxu0 0
      %2656 = vmatprep.subr.bf16.mxu0 0
      %2657 = vmatpush1.bf16.msra.mxu0 0
      %2658 = vmatprep.subr.bf16.mxu0 0
      %2659 = vmatpush1.bf16.msra.mxu0 0
      %2660 = vmatprep.subr.bf16.mxu0 0
      %2661 = vmatpush1.bf16.msra.mxu0 0
      %2662 = vmatprep.subr.bf16.mxu0 0
      %2663 = vmatpush1.bf16.msra.mxu0 0
      %2664 = vmatprep.subr.bf16.mxu0 0
      %2665 = vmatpush1.bf16.msra.mxu0 0
      %2666 = vmatprep.subr.bf16.mxu0 0
      %2667 = vmatpush1.bf16.msra.mxu0 0
      %2668 = vmatprep.subr.bf16.mxu0 0
      %2669 = vmatpush1.bf16.msra.mxu0 0
      %2670 = vmatprep.subr.bf16.mxu0 0
      %2671 = vmatpush1.bf16.msra.mxu0 0
      %2672 = vmatprep.subr.bf16.mxu0 0
      %2673 = vmatpush1.bf16.msra.mxu0 0
      %2674 = vmatprep.subr.bf16.mxu0 0
      %2675 = vmatpush1.bf16.msra.mxu0 0
      %2676 = vmatprep.mubr.bf16.mxu0 0
      %2677 = vmatmul.mubr.bf16.gmra.mrb[0].mxu0 %v2513
      %v2678 = vpop.f32.mrb[0].mxu0
      %v2679 = vadd.f32 %v2636, %v2678
      %v2680 = vpop.f32.mrb[0].mxu0
      %v2681 = vadd.f32 %v2638, %v2680
      %v2682 = vpop.f32.mrb[0].mxu0
      %v2683 = vadd.f32 %v2640, %v2682
      %v2684 = vpop.f32.mrb[0].mxu0
      %v2685 = vadd.f32 %v2642, %v2684
      %2686 = vdwg.mxu0
      %2687 = vmatprep.subr.bf16.mxu0 %v2375
      %2688 = vmatpush1.bf16.msra.mxu0 %v2374
      %2689 = vmatprep.subr.bf16.mxu0 %v2381
      %2690 = vmatpush1.bf16.msra.mxu0 %v2380
      %2691 = vmatprep.subr.bf16.mxu0 %v2387
      %2692 = vmatpush1.bf16.msra.mxu0 %v2386
      %2693 = vmatprep.subr.bf16.mxu0 %v2393
      %2694 = vmatpush1.bf16.msra.mxu0 %v2392
      %2695 = vmatprep.subr.bf16.mxu0 %v2399
      %2696 = vmatpush1.bf16.msra.mxu0 %v2398
      %2697 = vmatprep.subr.bf16.mxu0 %v2405
      %2698 = vmatpush1.bf16.msra.mxu0 %v2404
      %2699 = vmatprep.subr.bf16.mxu0 %v2411
      %2700 = vmatpush1.bf16.msra.mxu0 %v2410
      %2701 = vmatprep.subr.bf16.mxu0 %v2417
      %2702 = vmatpush1.bf16.msra.mxu0 %v2416
      %2703 = vmatprep.subr.bf16.mxu0 %v2423
      %2704 = vmatpush1.bf16.msra.mxu0 %v2422
      %2705 = vmatprep.subr.bf16.mxu0 %v2429
      %2706 = vmatpush1.bf16.msra.mxu0 %v2428
      %2707 = vmatprep.subr.bf16.mxu0 %v2435
      %2708 = vmatpush1.bf16.msra.mxu0 %v2434
      %2709 = vmatprep.subr.bf16.mxu0 %v2441
      %2710 = vmatpush1.bf16.msra.mxu0 %v2440
      %2711 = vmatprep.subr.bf16.mxu0 %v2447
      %2712 = vmatpush1.bf16.msra.mxu0 %v2446
      %2713 = vmatprep.subr.bf16.mxu0 %v2453
      %2714 = vmatpush1.bf16.msra.mxu0 %v2452
      %2715 = vmatprep.subr.bf16.mxu0 %v2459
      %2716 = vmatpush1.bf16.msra.mxu0 %v2458
      %2717 = vmatprep.subr.bf16.mxu0 %v2465
      %2718 = vmatpush1.bf16.msra.mxu0 %v2464
      %2719 = vmatprep.mubr.bf16.mxu0 %v2507
      %2720 = vmatmul.mubr.bf16.gmra.mrb[0].mxu0 %v2506
      %v2721 = vpop.f32.mrb[0].mxu0
      %v2722 = vadd.f32 %v2489, %v2721
      %v2723 = vpop.f32.mrb[0].mxu0
      %v2724 = vadd.f32 %v2489, %v2723
      %v2725 = vpop.f32.mrb[0].mxu0
      %v2726 = vadd.f32 %v2494, %v2725
      %v2727 = vpop.f32.mrb[0].mxu0
      %v2728 = vadd.f32 %v2494, %v2727
      %2729 = vdwg.mxu0
      %2730 = vmatprep.subr.bf16.mxu0 %v2471
      %2731 = vmatpush1.bf16.msra.mxu0 %v2470
      %2732 = vmatprep.subr.bf16.mxu0 %v2477
      %2733 = vmatpush1.bf16.msra.mxu0 %v2476
      %2734 = vmatprep.subr.bf16.mxu0 0
      %2735 = vmatpush1.bf16.msra.mxu0 0
      %2736 = vmatprep.subr.bf16.mxu0 0
      %2737 = vmatpush1.bf16.msra.mxu0 0
      %2738 = vmatprep.subr.bf16.mxu0 0
      %2739 = vmatpush1.bf16.msra.mxu0 0
      %2740 = vmatprep.subr.bf16.mxu0 0
      %2741 = vmatpush1.bf16.msra.mxu0 0
      %2742 = vmatprep.subr.bf16.mxu0 0
      %2743 = vmatpush1.bf16.msra.mxu0 0
      %2744 = vmatprep.subr.bf16.mxu0 0
      %2745 = vmatpush1.bf16.msra.mxu0 0
      %2746 = vmatprep.subr.bf16.mxu0 0
      %2747 = vmatpush1.bf16.msra.mxu0 0
      %2748 = vmatprep.subr.bf16.mxu0 0
      %2749 = vmatpush1.bf16.msra.mxu0 0
      %2750 = vmatprep.subr.bf16.mxu0 0
      %2751 = vmatpush1.bf16.msra.mxu0 0
      %2752 = vmatprep.subr.bf16.mxu0 0
      %2753 = vmatpush1.bf16.msra.mxu0 0
      %2754 = vmatprep.subr.bf16.mxu0 0
      %2755 = vmatpush1.bf16.msra.mxu0 0
      %2756 = vmatprep.subr.bf16.mxu0 0
      %2757 = vmatpush1.bf16.msra.mxu0 0
      %2758 = vmatprep.subr.bf16.mxu0 0
      %2759 = vmatpush1.bf16.msra.mxu0 0
      %2760 = vmatprep.subr.bf16.mxu0 0
      %2761 = vmatpush1.bf16.msra.mxu0 0
      %2762 = vmatprep.mubr.bf16.mxu0 0
      %2763 = vmatmul.mubr.bf16.gmra.mrb[0].mxu0 %v2513
      %v2764 = vpop.f32.mrb[0].mxu0
      %v2765 = vadd.f32 %v2722, %v2764
      %v2766 = vpop.f32.mrb[0].mxu0
      %v2767 = vadd.f32 %v2724, %v2766
      %v2768 = vpop.f32.mrb[0].mxu0
      %v2769 = vadd.f32 %v2726, %v2768
      %v2770 = vpop.f32.mrb[0].mxu0
      %v2771 = vadd.f32 %v2728, %v2770
      %2772 = vdwg.mxu0
      %v2773 = vmax.f32 %v2593, 0.0
      %v2774 = vmax.f32 %v2595, 0.0
      %v2775 = vmax.f32 %v2679, 0.0
      %v2776 = vmax.f32 %v2681, 0.0
      %v2777 = vmax.f32 %v2765, 0.0
      %v2778 = vmax.f32 %v2767, 0.0
      %v2779 = vmax.f32 %v2597, 0.0
      %v2780 = vmax.f32 %v2599, 0.0
      %v2781 = vmax.f32 %v2683, 0.0
      %v2782 = vmax.f32 %v2685, 0.0
      %v2783 = vmax.f32 %v2769, 0.0
      %v2784 = vmax.f32 %v2771, 0.0
      %v2785 = vmul.f32 %v2773, %v832
      %v2786 = vmul.f32 %v2774, %v836
      %v2787 = vmul.f32 %v2775, %v840
      %v2788 = vmul.f32 %v2776, %v844
      %v2789 = vmul.f32 %v2777, %v848
      %v2790 = vmul.f32 %v2778, %v852
      %v2791 = vmul.f32 %v2779, %v832
      %v2792 = vmul.f32 %v2780, %v836
      %v2793 = vmul.f32 %v2781, %v840
      %v2794 = vmul.f32 %v2782, %v844
      %v2795 = vmul.f32 %v2783, %v848
      %v2796 = vmul.f32 %v2784, %v852
      %v2797 = vpack.c.bf16 %v2791, %v2785
      %v2798 = vpack.c.bf16 %v2792, %v2786
      %v2799 = vpack.c.bf16 %v2793, %v2787
      %v2800 = vpack.c.bf16 %v2794, %v2788
      %v2801 = vpack.c.bf16 %v2795, %v2789
      %v2802 = vpack.c.bf16 %v2796, %v2790
      %2803 = vst [vmem:[#allocation2 + $0x8] sm:$0xff] %v2797
      %2804 = vst [vmem:[#allocation2 + $0x10] sm:$0xff] %v2798
      %2805 = vst [vmem:[#allocation2 + $0x18] sm:$0xff] %v2799
      %2806 = vst [vmem:[#allocation2 + $0x20] sm:$0xff] %v2800
      %2807 = vst [vmem:[#allocation2 + $0x28] sm:$0xff] %v2801
      %2808 = vst [vmem:[#allocation2 + $0x30] sm:$0xff] %v2802
      %v2809 = vld [vmem:[#allocation2] sm:$0xff]
      %v2810 = vld [vmem:[#allocation2 + $0x8] sm:$0xff]
      %v2811 = vld [vmem:[#allocation2 + $0x10] sm:$0xff]
      %v2812 = vld [vmem:[#allocation2 + $0x18] sm:$0xff]
      %v2813 = vld [vmem:[#allocation2 + $0x20] sm:$0xff]
      %v2814 = vld [vmem:[#allocation2 + $0x28] sm:$0xff]
      %v2815 = vld [vmem:[#allocation2 + $0x30] sm:$0xff]
      %2823 = vrot.lane.b32.xlu0 %v2809, 19
      %v2824 = vpop.permute.xlu0 %2823
      %2825 = vrot.lane.b32.xlu0 %v2810, 19
      %v2826 = vpop.permute.xlu0 %2825
      %2827 = vrot.lane.b32.xlu0 %v2811, 19
      %v2828 = vpop.permute.xlu0 %2827
      %2829 = vrot.lane.b32.xlu0 %v2812, 19
      %v2830 = vpop.permute.xlu0 %2829
      %2831 = vrot.lane.b32.xlu0 %v2813, 19
      %v2832 = vpop.permute.xlu0 %2831
      %2833 = vrot.lane.b32.xlu0 %v2814, 19
      %v2834 = vpop.permute.xlu0 %2833
      %2835 = vrot.lane.b32.xlu0 %v2815, 19
      %v2836 = vpop.permute.xlu0 %2835
      %v2837 = vsel %vm656, %v2824, %v2826
      %v2838 = vsel %vm656, %v2826, %v2828
      %v2839 = vsel %vm656, %v2828, %v2830
      %v2840 = vsel %vm656, %v2830, %v2832
      %v2841 = vsel %vm656, %v2832, %v2834
      %v2842 = vsel %vm656, %v2834, %v2836
      %2849 = vst [vmem:[#allocation3] sm:$0xff] %v2837
      %2850 = vst [vmem:[#allocation3 + $0x8] sm:$0xff] %v2838
      %2851 = vst [vmem:[#allocation3 + $0x10] sm:$0xff] %v2839
      %2852 = vst [vmem:[#allocation3 + $0x18] sm:$0xff] %v2840
      %2853 = vst [vmem:[#allocation3 + $0x20] sm:$0xff] %v2841
      %2854 = vst [vmem:[#allocation3 + $0x28] sm:$0xff] %v2842
      %v2855 = vld [vmem:[#allocation2] sm:$0xff]
      %v2856 = vld [vmem:[#allocation2 + $0x8] sm:$0xff]
      %v2857 = vld [vmem:[#allocation2 + $0x10] sm:$0xff]
      %v2858 = vld [vmem:[#allocation2 + $0x18] sm:$0xff]
      %v2859 = vld [vmem:[#allocation2 + $0x20] sm:$0xff]
      %v2860 = vld [vmem:[#allocation2 + $0x28] sm:$0xff]
      %v2861 = vld [vmem:[#allocation2 + $0x30] sm:$0xff]
      %2869 = vrot.lane.b32.xlu0 %v2855, 18
      %v2870 = vpop.permute.xlu0 %2869
      %2871 = vrot.lane.b32.xlu0 %v2856, 18
      %v2872 = vpop.permute.xlu0 %2871
      %2873 = vrot.lane.b32.xlu0 %v2857, 18
      %v2874 = vpop.permute.xlu0 %2873
      %2875 = vrot.lane.b32.xlu0 %v2858, 18
      %v2876 = vpop.permute.xlu0 %2875
      %2877 = vrot.lane.b32.xlu0 %v2859, 18
      %v2878 = vpop.permute.xlu0 %2877
      %2879 = vrot.lane.b32.xlu0 %v2860, 18
      %v2880 = vpop.permute.xlu0 %2879
      %2881 = vrot.lane.b32.xlu0 %v2861, 18
      %v2882 = vpop.permute.xlu0 %2881
      %v2883 = vsel %vm957, %v2870, %v2872
      %v2884 = vsel %vm957, %v2872, %v2874
      %v2885 = vsel %vm957, %v2874, %v2876
      %v2886 = vsel %vm957, %v2876, %v2878
      %v2887 = vsel %vm957, %v2878, %v2880
      %v2888 = vsel %vm957, %v2880, %v2882
      %2895 = vst [vmem:[#allocation3 + $0x30] sm:$0xff] %v2883
      %2896 = vst [vmem:[#allocation3 + $0x38] sm:$0xff] %v2884
      %2897 = vst [vmem:[#allocation3 + $0x40] sm:$0xff] %v2885
      %2898 = vst [vmem:[#allocation3 + $0x48] sm:$0xff] %v2886
      %2899 = vst [vmem:[#allocation3 + $0x50] sm:$0xff] %v2887
      %2900 = vst [vmem:[#allocation3 + $0x58] sm:$0xff] %v2888
      %v2901 = vld [vmem:[#allocation2] sm:$0xff]
      %v2902 = vld [vmem:[#allocation2 + $0x8] sm:$0xff]
      %v2903 = vld [vmem:[#allocation2 + $0x10] sm:$0xff]
      %v2904 = vld [vmem:[#allocation2 + $0x18] sm:$0xff]
      %v2905 = vld [vmem:[#allocation2 + $0x20] sm:$0xff]
      %v2906 = vld [vmem:[#allocation2 + $0x28] sm:$0xff]
      %v2907 = vld [vmem:[#allocation2 + $0x30] sm:$0xff]
      %2915 = vrot.lane.b32.xlu0 %v2901, 17
      %v2916 = vpop.permute.xlu0 %2915
      %2917 = vrot.lane.b32.xlu0 %v2902, 17
      %v2918 = vpop.permute.xlu0 %2917
      %2919 = vrot.lane.b32.xlu0 %v2903, 17
      %v2920 = vpop.permute.xlu0 %2919
      %2921 = vrot.lane.b32.xlu0 %v2904, 17
      %v2922 = vpop.permute.xlu0 %2921
      %2923 = vrot.lane.b32.xlu0 %v2905, 17
      %v2924 = vpop.permute.xlu0 %2923
      %2925 = vrot.lane.b32.xlu0 %v2906, 17
      %v2926 = vpop.permute.xlu0 %2925
      %2927 = vrot.lane.b32.xlu0 %v2907, 17
      %v2928 = vpop.permute.xlu0 %2927
      %v2929 = vsel %vm1004, %v2916, %v2918
      %v2930 = vsel %vm1004, %v2918, %v2920
      %v2931 = vsel %vm1004, %v2920, %v2922
      %v2932 = vsel %vm1004, %v2922, %v2924
      %v2933 = vsel %vm1004, %v2924, %v2926
      %v2934 = vsel %vm1004, %v2926, %v2928
      %2941 = vst [vmem:[#allocation3 + $0x60] sm:$0xff] %v2929
      %2942 = vst [vmem:[#allocation3 + $0x68] sm:$0xff] %v2930
      %2943 = vst [vmem:[#allocation3 + $0x70] sm:$0xff] %v2931
      %2944 = vst [vmem:[#allocation3 + $0x78] sm:$0xff] %v2932
      %2945 = vst [vmem:[#allocation3 + $0x80] sm:$0xff] %v2933
      %2946 = vst [vmem:[#allocation3 + $0x88] sm:$0xff] %v2934
      %v2947 = vld [vmem:[#allocation2] sm:$0xff]
      %v2948 = vld [vmem:[#allocation2 + $0x8] sm:$0xff]
      %v2949 = vld [vmem:[#allocation2 + $0x10] sm:$0xff]
      %v2950 = vld [vmem:[#allocation2 + $0x18] sm:$0xff]
      %v2951 = vld [vmem:[#allocation2 + $0x20] sm:$0xff]
      %v2952 = vld [vmem:[#allocation2 + $0x28] sm:$0xff]
      %v2953 = vld [vmem:[#allocation2 + $0x30] sm:$0xff]
      %2961 = vrot.lane.b32.xlu0 %v2947, 1
      %v2962 = vpop.permute.xlu0 %2961
      %2963 = vrot.lane.b32.xlu0 %v2948, 1
      %v2964 = vpop.permute.xlu0 %2963
      %2965 = vrot.lane.b32.xlu0 %v2949, 1
      %v2966 = vpop.permute.xlu0 %2965
      %2967 = vrot.lane.b32.xlu0 %v2950, 1
      %v2968 = vpop.permute.xlu0 %2967
      %2969 = vrot.lane.b32.xlu0 %v2951, 1
      %v2970 = vpop.permute.xlu0 %2969
      %2971 = vrot.lane.b32.xlu0 %v2952, 1
      %v2972 = vpop.permute.xlu0 %2971
      %2973 = vrot.lane.b32.xlu0 %v2953, 1
      %v2974 = vpop.permute.xlu0 %2973
      %v2975 = vsel %vm1051, %v2962, %v2964
      %v2976 = vsel %vm1051, %v2964, %v2966
      %v2977 = vsel %vm1051, %v2966, %v2968
      %v2978 = vsel %vm1051, %v2968, %v2970
      %v2979 = vsel %vm1051, %v2970, %v2972
      %v2980 = vsel %vm1051, %v2972, %v2974
      %2987 = vst [vmem:[#allocation3 + $0x90] sm:$0xff] %v2975
      %2988 = vst [vmem:[#allocation3 + $0x98] sm:$0xff] %v2976
      %2989 = vst [vmem:[#allocation3 + $0xa0] sm:$0xff] %v2977
      %2990 = vst [vmem:[#allocation3 + $0xa8] sm:$0xff] %v2978
      %2991 = vst [vmem:[#allocation3 + $0xb0] sm:$0xff] %v2979
      %2992 = vst [vmem:[#allocation3 + $0xb8] sm:$0xff] %v2980
      %v2993 = vld [vmem:[#allocation2 + $0x8] sm:$0xff]
      %v2994 = vld [vmem:[#allocation2 + $0x10] sm:$0xff]
      %v2995 = vld [vmem:[#allocation2 + $0x18] sm:$0xff]
      %v2996 = vld [vmem:[#allocation2 + $0x20] sm:$0xff]
      %v2997 = vld [vmem:[#allocation2 + $0x28] sm:$0xff]
      %v2998 = vld [vmem:[#allocation2 + $0x30] sm:$0xff]
      %2999 = vst [vmem:[#allocation3 + $0xc0] sm:$0xff] %v2993
      %3000 = vst [vmem:[#allocation3 + $0xc8] sm:$0xff] %v2994
      %3001 = vst [vmem:[#allocation3 + $0xd0] sm:$0xff] %v2995
      %3002 = vst [vmem:[#allocation3 + $0xd8] sm:$0xff] %v2996
      %3003 = vst [vmem:[#allocation3 + $0xe0] sm:$0xff] %v2997
      %3004 = vst [vmem:[#allocation3 + $0xe8] sm:$0xff] %v2998
      %v3005 = vld [vmem:[#allocation2 + $0x8] sm:$0xff]
      %v3006 = vld [vmem:[#allocation2 + $0x10] sm:$0xff]
      %v3007 = vld [vmem:[#allocation2 + $0x18] sm:$0xff]
      %v3008 = vld [vmem:[#allocation2 + $0x20] sm:$0xff]
      %v3009 = vld [vmem:[#allocation2 + $0x28] sm:$0xff]
      %v3010 = vld [vmem:[#allocation2 + $0x30] sm:$0xff]
      %v3011 = vld [vmem:[#allocation2 + $0x38] sm:$0xff]
      %3019 = vrot.lane.b32.xlu0 %v3005, 127
      %v3020 = vpop.permute.xlu0 %3019
      %3021 = vrot.lane.b32.xlu0 %v3006, 127
      %v3022 = vpop.permute.xlu0 %3021
      %3023 = vrot.lane.b32.xlu0 %v3007, 127
      %v3024 = vpop.permute.xlu0 %3023
      %3025 = vrot.lane.b32.xlu0 %v3008, 127
      %v3026 = vpop.permute.xlu0 %3025
      %3027 = vrot.lane.b32.xlu0 %v3009, 127
      %v3028 = vpop.permute.xlu0 %3027
      %3029 = vrot.lane.b32.xlu0 %v3010, 127
      %v3030 = vpop.permute.xlu0 %3029
      %3031 = vrot.lane.b32.xlu0 %v3011, 127
      %v3032 = vpop.permute.xlu0 %3031
      %v3033 = vsel %vm1110, %v3020, %v3022
      %v3034 = vsel %vm1110, %v3022, %v3024
      %v3035 = vsel %vm1110, %v3024, %v3026
      %v3036 = vsel %vm1110, %v3026, %v3028
      %v3037 = vsel %vm1110, %v3028, %v3030
      %v3038 = vsel %vm1110, %v3030, %v3032
      %3045 = vst [vmem:[#allocation3 + $0xf0] sm:$0xff] %v3033
      %3046 = vst [vmem:[#allocation3 + $0xf8] sm:$0xff] %v3034
      %3047 = vst [vmem:[#allocation3 + $0x100] sm:$0xff] %v3035
      %3048 = vst [vmem:[#allocation3 + $0x108] sm:$0xff] %v3036
      %3049 = vst [vmem:[#allocation3 + $0x110] sm:$0xff] %v3037
      %3050 = vst [vmem:[#allocation3 + $0x118] sm:$0xff] %v3038
      %v3051 = vld [vmem:[#allocation2 + $0x8] sm:$0xff]
      %v3052 = vld [vmem:[#allocation2 + $0x10] sm:$0xff]
      %v3053 = vld [vmem:[#allocation2 + $0x18] sm:$0xff]
      %v3054 = vld [vmem:[#allocation2 + $0x20] sm:$0xff]
      %v3055 = vld [vmem:[#allocation2 + $0x28] sm:$0xff]
      %v3056 = vld [vmem:[#allocation2 + $0x30] sm:$0xff]
      %v3057 = vld [vmem:[#allocation2 + $0x38] sm:$0xff]
      %3065 = vrot.lane.b32.xlu0 %v3051, 111
      %v3066 = vpop.permute.xlu0 %3065
      %3067 = vrot.lane.b32.xlu0 %v3052, 111
      %v3068 = vpop.permute.xlu0 %3067
      %3069 = vrot.lane.b32.xlu0 %v3053, 111
      %v3070 = vpop.permute.xlu0 %3069
      %3071 = vrot.lane.b32.xlu0 %v3054, 111
      %v3072 = vpop.permute.xlu0 %3071
      %3073 = vrot.lane.b32.xlu0 %v3055, 111
      %v3074 = vpop.permute.xlu0 %3073
      %3075 = vrot.lane.b32.xlu0 %v3056, 111
      %v3076 = vpop.permute.xlu0 %3075
      %3077 = vrot.lane.b32.xlu0 %v3057, 111
      %v3078 = vpop.permute.xlu0 %3077
      %v3079 = vsel %vm1157, %v3066, %v3068
      %v3080 = vsel %vm1157, %v3068, %v3070
      %v3081 = vsel %vm1157, %v3070, %v3072
      %v3082 = vsel %vm1157, %v3072, %v3074
      %v3083 = vsel %vm1157, %v3074, %v3076
      %v3084 = vsel %vm1157, %v3076, %v3078
      %3091 = vst [vmem:[#allocation3 + $0x120] sm:$0xff] %v3079
      %3092 = vst [vmem:[#allocation3 + $0x128] sm:$0xff] %v3080
      %3093 = vst [vmem:[#allocation3 + $0x130] sm:$0xff] %v3081
      %3094 = vst [vmem:[#allocation3 + $0x138] sm:$0xff] %v3082
      %3095 = vst [vmem:[#allocation3 + $0x140] sm:$0xff] %v3083
      %3096 = vst [vmem:[#allocation3 + $0x148] sm:$0xff] %v3084
      %v3097 = vld [vmem:[#allocation2 + $0x8] sm:$0xff]
      %v3098 = vld [vmem:[#allocation2 + $0x10] sm:$0xff]
      %v3099 = vld [vmem:[#allocation2 + $0x18] sm:$0xff]
      %v3100 = vld [vmem:[#allocation2 + $0x20] sm:$0xff]
      %v3101 = vld [vmem:[#allocation2 + $0x28] sm:$0xff]
      %v3102 = vld [vmem:[#allocation2 + $0x30] sm:$0xff]
      %v3103 = vld [vmem:[#allocation2 + $0x38] sm:$0xff]
      %3111 = vrot.lane.b32.xlu0 %v3097, 110
      %v3112 = vpop.permute.xlu0 %3111
      %3113 = vrot.lane.b32.xlu0 %v3098, 110
      %v3114 = vpop.permute.xlu0 %3113
      %3115 = vrot.lane.b32.xlu0 %v3099, 110
      %v3116 = vpop.permute.xlu0 %3115
      %3117 = vrot.lane.b32.xlu0 %v3100, 110
      %v3118 = vpop.permute.xlu0 %3117
      %3119 = vrot.lane.b32.xlu0 %v3101, 110
      %v3120 = vpop.permute.xlu0 %3119
      %3121 = vrot.lane.b32.xlu0 %v3102, 110
      %v3122 = vpop.permute.xlu0 %3121
      %3123 = vrot.lane.b32.xlu0 %v3103, 110
      %v3124 = vpop.permute.xlu0 %3123
      %v3125 = vsel %vm1204, %v3112, %v3114
      %v3126 = vsel %vm1204, %v3114, %v3116
      %v3127 = vsel %vm1204, %v3116, %v3118
      %v3128 = vsel %vm1204, %v3118, %v3120
      %v3129 = vsel %vm1204, %v3120, %v3122
      %v3130 = vsel %vm1204, %v3122, %v3124
      %3137 = vst [vmem:[#allocation3 + $0x150] sm:$0xff] %v3125
      %3138 = vst [vmem:[#allocation3 + $0x158] sm:$0xff] %v3126
      %3139 = vst [vmem:[#allocation3 + $0x160] sm:$0xff] %v3127
      %3140 = vst [vmem:[#allocation3 + $0x168] sm:$0xff] %v3128
      %3141 = vst [vmem:[#allocation3 + $0x170] sm:$0xff] %v3129
      %3142 = vst [vmem:[#allocation3 + $0x178] sm:$0xff] %v3130
      %v3143 = vld [vmem:[#allocation2 + $0x8] sm:$0xff]
      %v3144 = vld [vmem:[#allocation2 + $0x10] sm:$0xff]
      %v3145 = vld [vmem:[#allocation2 + $0x18] sm:$0xff]
      %v3146 = vld [vmem:[#allocation2 + $0x20] sm:$0xff]
      %v3147 = vld [vmem:[#allocation2 + $0x28] sm:$0xff]
      %v3148 = vld [vmem:[#allocation2 + $0x30] sm:$0xff]
      %v3149 = vld [vmem:[#allocation2 + $0x38] sm:$0xff]
      %3157 = vrot.lane.b32.xlu0 %v3143, 109
      %v3158 = vpop.permute.xlu0 %3157
      %3159 = vrot.lane.b32.xlu0 %v3144, 109
      %v3160 = vpop.permute.xlu0 %3159
      %3161 = vrot.lane.b32.xlu0 %v3145, 109
      %v3162 = vpop.permute.xlu0 %3161
      %3163 = vrot.lane.b32.xlu0 %v3146, 109
      %v3164 = vpop.permute.xlu0 %3163
      %3165 = vrot.lane.b32.xlu0 %v3147, 109
      %v3166 = vpop.permute.xlu0 %3165
      %3167 = vrot.lane.b32.xlu0 %v3148, 109
      %v3168 = vpop.permute.xlu0 %3167
      %3169 = vrot.lane.b32.xlu0 %v3149, 109
      %v3170 = vpop.permute.xlu0 %3169
      %v3171 = vsel %vm1251, %v3158, %v3160
      %v3172 = vsel %vm1251, %v3160, %v3162
      %v3173 = vsel %vm1251, %v3162, %v3164
      %v3174 = vsel %vm1251, %v3164, %v3166
      %v3175 = vsel %vm1251, %v3166, %v3168
      %v3176 = vsel %vm1251, %v3168, %v3170
      %3183 = vst [vmem:[#allocation3 + $0x180] sm:$0xff] %v3171
      %3184 = vst [vmem:[#allocation3 + $0x188] sm:$0xff] %v3172
      %3185 = vst [vmem:[#allocation3 + $0x190] sm:$0xff] %v3173
      %3186 = vst [vmem:[#allocation3 + $0x198] sm:$0xff] %v3174
      %3187 = vst [vmem:[#allocation3 + $0x1a0] sm:$0xff] %v3175
      %3188 = vst [vmem:[#allocation3 + $0x1a8] sm:$0xff] %v3176
      %v3189 = vld [vmem:[#allocation3] sm:$0xff]
      %v3190 = vld [vmem:[#allocation3 + $0x8] sm:$0xff]
      %v3191 = vld [vmem:[#allocation3 + $0x10] sm:$0xff]
      %v3192 = vld [vmem:[#allocation3 + $0x18] sm:$0xff]
      %v3193 = vld [vmem:[#allocation3 + $0x20] sm:$0xff]
      %v3194 = vld [vmem:[#allocation3 + $0x28] sm:$0xff]
      %v3195 = vld [vmem:[#allocation3 + $0x30] sm:$0xff]
      %v3196 = vld [vmem:[#allocation3 + $0x38] sm:$0xff]
      %v3197 = vld [vmem:[#allocation3 + $0x40] sm:$0xff]
      %v3198 = vld [vmem:[#allocation3 + $0x48] sm:$0xff]
      %v3199 = vld [vmem:[#allocation3 + $0x50] sm:$0xff]
      %v3200 = vld [vmem:[#allocation3 + $0x58] sm:$0xff]
      %v3201 = vld [vmem:[#allocation3 + $0x60] sm:$0xff]
      %v3202 = vld [vmem:[#allocation3 + $0x68] sm:$0xff]
      %v3203 = vld [vmem:[#allocation3 + $0x70] sm:$0xff]
      %v3204 = vld [vmem:[#allocation3 + $0x78] sm:$0xff]
      %v3205 = vld [vmem:[#allocation3 + $0x80] sm:$0xff]
      %v3206 = vld [vmem:[#allocation3 + $0x88] sm:$0xff]
      %v3207 = vld [vmem:[#allocation3 + $0x90] sm:$0xff]
      %v3208 = vld [vmem:[#allocation3 + $0x98] sm:$0xff]
      %v3209 = vld [vmem:[#allocation3 + $0xa0] sm:$0xff]
      %v3210 = vld [vmem:[#allocation3 + $0xa8] sm:$0xff]
      %v3211 = vld [vmem:[#allocation3 + $0xb0] sm:$0xff]
      %v3212 = vld [vmem:[#allocation3 + $0xb8] sm:$0xff]
      %v3213 = vld [vmem:[#allocation3 + $0xc0] sm:$0xff]
      %v3214 = vld [vmem:[#allocation3 + $0xc8] sm:$0xff]
      %v3215 = vld [vmem:[#allocation3 + $0xd0] sm:$0xff]
      %v3216 = vld [vmem:[#allocation3 + $0xd8] sm:$0xff]
      %v3217 = vld [vmem:[#allocation3 + $0xe0] sm:$0xff]
      %v3218 = vld [vmem:[#allocation3 + $0xe8] sm:$0xff]
      %v3219 = vld [vmem:[#allocation3 + $0xf0] sm:$0xff]
      %v3220 = vld [vmem:[#allocation3 + $0xf8] sm:$0xff]
      %v3221 = vld [vmem:[#allocation3 + $0x100] sm:$0xff]
      %v3222 = vld [vmem:[#allocation3 + $0x108] sm:$0xff]
      %v3223 = vld [vmem:[#allocation3 + $0x110] sm:$0xff]
      %v3224 = vld [vmem:[#allocation3 + $0x118] sm:$0xff]
      %v3225 = vld [vmem:[#allocation3 + $0x120] sm:$0xff]
      %v3226 = vld [vmem:[#allocation3 + $0x128] sm:$0xff]
      %v3227 = vld [vmem:[#allocation3 + $0x130] sm:$0xff]
      %v3228 = vld [vmem:[#allocation3 + $0x138] sm:$0xff]
      %v3229 = vld [vmem:[#allocation3 + $0x140] sm:$0xff]
      %v3230 = vld [vmem:[#allocation3 + $0x148] sm:$0xff]
      %v3231 = vld [vmem:[#allocation3 + $0x150] sm:$0xff]
      %v3232 = vld [vmem:[#allocation3 + $0x158] sm:$0xff]
      %v3233 = vld [vmem:[#allocation3 + $0x160] sm:$0xff]
      %v3234 = vld [vmem:[#allocation3 + $0x168] sm:$0xff]
      %v3235 = vld [vmem:[#allocation3 + $0x170] sm:$0xff]
      %v3236 = vld [vmem:[#allocation3 + $0x178] sm:$0xff]
      %v3237 = vld [vmem:[#allocation3 + $0x180] sm:$0xff]
      %v3238 = vld [vmem:[#allocation3 + $0x188] sm:$0xff]
      %v3239 = vld [vmem:[#allocation3 + $0x190] sm:$0xff]
      %v3240 = vld [vmem:[#allocation3 + $0x198] sm:$0xff]
      %v3241 = vld [vmem:[#allocation3 + $0x1a0] sm:$0xff]
      %v3242 = vld [vmem:[#allocation3 + $0x1a8] sm:$0xff]
      %s3243 = scalar_lea.vmem %s2, 144
      %v3244 = vld [vmem:[%s3243] sm:$0xff]
      %s3245 = scalar_lea.vmem %s3, 96
      %v3246 = vld [vmem:[%s3245] sm:$0xff]
      %3248 = vset.pattern.permute.xlu0 0
      %3249 = vperm.xlu0 %3248, %v3246
      %v3250 = vpop.permute.xlu0 %3249
      %v3253 = vunpack.c.l.b16 %v3244
      %v3254 = vunpack.c.h.b16 %v3244
      %v3255 = vpack.c.b16 %v3253, %v3253
      %v3256 = vpack.c.b16 %v3254, %v3254
      %v3259 = vsel %vm1372, %v3256, 0
      %3261 = vmatprep.subr.bf16.mxu0 %v3190
      %3262 = vmatpush1.bf16.msra.mxu0 %v3189
      %3263 = vmatprep.subr.bf16.mxu0 %v3196
      %3264 = vmatpush1.bf16.msra.mxu0 %v3195
      %3265 = vmatprep.subr.bf16.mxu0 %v3202
      %3266 = vmatpush1.bf16.msra.mxu0 %v3201
      %3267 = vmatprep.subr.bf16.mxu0 %v3208
      %3268 = vmatpush1.bf16.msra.mxu0 %v3207
      %3269 = vmatprep.subr.bf16.mxu0 %v3214
      %3270 = vmatpush1.bf16.msra.mxu0 %v3213
      %3271 = vmatprep.subr.bf16.mxu0 %v3220
      %3272 = vmatpush1.bf16.msra.mxu0 %v3219
      %3273 = vmatprep.subr.bf16.mxu0 %v3226
      %3274 = vmatpush1.bf16.msra.mxu0 %v3225
      %3275 = vmatprep.subr.bf16.mxu0 %v3232
      %3276 = vmatpush1.bf16.msra.mxu0 %v3231
      %3277 = vmatprep.subr.bf16.mxu0 %v3238
      %3278 = vmatpush1.bf16.msra.mxu0 %v3237
      %3279 = vmatprep.subr.bf16.mxu0 0
      %3280 = vmatpush1.bf16.msra.mxu0 0
      %3281 = vmatprep.subr.bf16.mxu0 0
      %3282 = vmatpush1.bf16.msra.mxu0 0
      %3283 = vmatprep.subr.bf16.mxu0 0
      %3284 = vmatpush1.bf16.msra.mxu0 0
      %3285 = vmatprep.subr.bf16.mxu0 0
      %3286 = vmatpush1.bf16.msra.mxu0 0
      %3287 = vmatprep.subr.bf16.mxu0 0
      %3288 = vmatpush1.bf16.msra.mxu0 0
      %3289 = vmatprep.subr.bf16.mxu0 0
      %3290 = vmatpush1.bf16.msra.mxu0 0
      %3291 = vmatprep.subr.bf16.mxu0 0
      %3292 = vmatpush1.bf16.msra.mxu0 0
      %3293 = vmatprep.mubr.bf16.mxu0 %v3259
      %3294 = vmatmul.mubr.bf16.gmra.mrb[0].mxu0 %v3255
      %v3295 = vpop.f32.mrb[0].mxu0
      %v3296 = vadd.f32 %v3250, %v3295
      %v3297 = vpop.f32.mrb[0].mxu0
      %v3298 = vadd.f32 %v3250, %v3297
      %v3299 = vpop.f32.mrb[0].mxu0
      %v3300 = vpop.f32.mrb[0].mxu0
      %3301 = vdwg.mxu0
      %3302 = vmatprep.subr.bf16.mxu0 %v3192
      %3303 = vmatpush1.bf16.msra.mxu0 %v3191
      %3304 = vmatprep.subr.bf16.mxu0 %v3198
      %3305 = vmatpush1.bf16.msra.mxu0 %v3197
      %3306 = vmatprep.subr.bf16.mxu0 %v3204
      %3307 = vmatpush1.bf16.msra.mxu0 %v3203
      %3308 = vmatprep.subr.bf16.mxu0 %v3210
      %3309 = vmatpush1.bf16.msra.mxu0 %v3209
      %3310 = vmatprep.subr.bf16.mxu0 %v3216
      %3311 = vmatpush1.bf16.msra.mxu0 %v3215
      %3312 = vmatprep.subr.bf16.mxu0 %v3222
      %3313 = vmatpush1.bf16.msra.mxu0 %v3221
      %3314 = vmatprep.subr.bf16.mxu0 %v3228
      %3315 = vmatpush1.bf16.msra.mxu0 %v3227
      %3316 = vmatprep.subr.bf16.mxu0 %v3234
      %3317 = vmatpush1.bf16.msra.mxu0 %v3233
      %3318 = vmatprep.subr.bf16.mxu0 %v3240
      %3319 = vmatpush1.bf16.msra.mxu0 %v3239
      %3320 = vmatprep.subr.bf16.mxu0 0
      %3321 = vmatpush1.bf16.msra.mxu0 0
      %3322 = vmatprep.subr.bf16.mxu0 0
      %3323 = vmatpush1.bf16.msra.mxu0 0
      %3324 = vmatprep.subr.bf16.mxu0 0
      %3325 = vmatpush1.bf16.msra.mxu0 0
      %3326 = vmatprep.subr.bf16.mxu0 0
      %3327 = vmatpush1.bf16.msra.mxu0 0
      %3328 = vmatprep.subr.bf16.mxu0 0
      %3329 = vmatpush1.bf16.msra.mxu0 0
      %3330 = vmatprep.subr.bf16.mxu0 0
      %3331 = vmatpush1.bf16.msra.mxu0 0
      %3332 = vmatprep.subr.bf16.mxu0 0
      %3333 = vmatpush1.bf16.msra.mxu0 0
      %3334 = vmatprep.mubr.bf16.mxu0 %v3259
      %3335 = vmatmul.mubr.bf16.gmra.mrb[0].mxu0 %v3255
      %v3336 = vpop.f32.mrb[0].mxu0
      %v3337 = vadd.f32 %v3250, %v3336
      %v3338 = vpop.f32.mrb[0].mxu0
      %v3339 = vadd.f32 %v3250, %v3338
      %v3340 = vpop.f32.mrb[0].mxu0
      %v3341 = vpop.f32.mrb[0].mxu0
      %3342 = vdwg.mxu0
      %3343 = vmatprep.subr.bf16.mxu0 %v3194
      %3344 = vmatpush1.bf16.msra.mxu0 %v3193
      %3345 = vmatprep.subr.bf16.mxu0 %v3200
      %3346 = vmatpush1.bf16.msra.mxu0 %v3199
      %3347 = vmatprep.subr.bf16.mxu0 %v3206
      %3348 = vmatpush1.bf16.msra.mxu0 %v3205
      %3349 = vmatprep.subr.bf16.mxu0 %v3212
      %3350 = vmatpush1.bf16.msra.mxu0 %v3211
      %3351 = vmatprep.subr.bf16.mxu0 %v3218
      %3352 = vmatpush1.bf16.msra.mxu0 %v3217
      %3353 = vmatprep.subr.bf16.mxu0 %v3224
      %3354 = vmatpush1.bf16.msra.mxu0 %v3223
      %3355 = vmatprep.subr.bf16.mxu0 %v3230
      %3356 = vmatpush1.bf16.msra.mxu0 %v3229
      %3357 = vmatprep.subr.bf16.mxu0 %v3236
      %3358 = vmatpush1.bf16.msra.mxu0 %v3235
      %3359 = vmatprep.subr.bf16.mxu0 %v3242
      %3360 = vmatpush1.bf16.msra.mxu0 %v3241
      %3361 = vmatprep.subr.bf16.mxu0 0
      %3362 = vmatpush1.bf16.msra.mxu0 0
      %3363 = vmatprep.subr.bf16.mxu0 0
      %3364 = vmatpush1.bf16.msra.mxu0 0
      %3365 = vmatprep.subr.bf16.mxu0 0
      %3366 = vmatpush1.bf16.msra.mxu0 0
      %3367 = vmatprep.subr.bf16.mxu0 0
      %3368 = vmatpush1.bf16.msra.mxu0 0
      %3369 = vmatprep.subr.bf16.mxu0 0
      %3370 = vmatpush1.bf16.msra.mxu0 0
      %3371 = vmatprep.subr.bf16.mxu0 0
      %3372 = vmatpush1.bf16.msra.mxu0 0
      %3373 = vmatprep.subr.bf16.mxu0 0
      %3374 = vmatpush1.bf16.msra.mxu0 0
      %3375 = vmatprep.mubr.bf16.mxu0 %v3259
      %3376 = vmatmul.mubr.bf16.gmra.mrb[0].mxu0 %v3255
      %v3377 = vpop.f32.mrb[0].mxu0
      %v3378 = vadd.f32 %v3250, %v3377
      %v3379 = vpop.f32.mrb[0].mxu0
      %v3380 = vadd.f32 %v3250, %v3379
      %v3381 = vpop.f32.mrb[0].mxu0
      %v3382 = vpop.f32.mrb[0].mxu0
      %3383 = vdwg.mxu0
      %v3384 = vxor.u32 %v3296, 2147483648
      %v3385 = vxor.u32 %v3298, 2147483648
      %v3386 = vxor.u32 %v3337, 2147483648
      %v3387 = vxor.u32 %v3339, 2147483648
      %v3388 = vxor.u32 %v3378, 2147483648
      %v3389 = vxor.u32 %v3380, 2147483648
      %v3390 = vmul.f32 %v3384, 1.442695
      %v3391 = vpow.pop %v3390
      %v3392 = vmul.f32 %v3385, 1.442695
      %v3393 = vpow.pop %v3392
      %v3394 = vmul.f32 %v3386, 1.442695
      %v3395 = vpow.pop %v3394
      %v3396 = vmul.f32 %v3387, 1.442695
      %v3397 = vpow.pop %v3396
      %v3398 = vmul.f32 %v3388, 1.442695
      %v3399 = vpow.pop %v3398
      %v3400 = vmul.f32 %v3389, 1.442695
      %v3401 = vpow.pop %v3400
      %v3402 = vadd.f32 %v3391, 1.0
      %v3403 = vadd.f32 %v3393, 1.0
      %v3404 = vadd.f32 %v3395, 1.0
      %v3405 = vadd.f32 %v3397, 1.0
      %v3406 = vadd.f32 %v3399, 1.0
      %v3407 = vadd.f32 %v3401, 1.0
      %v3408 = vrcp.pop %v3402
      %v3409 = vmul.f32 1.0, %v3408
      %v3410 = vrcp.pop %v3403
      %v3411 = vmul.f32 1.0, %v3410
      %v3412 = vrcp.pop %v3404
      %v3413 = vmul.f32 1.0, %v3412
      %v3414 = vrcp.pop %v3405
      %v3415 = vmul.f32 1.0, %v3414
      %v3416 = vrcp.pop %v3406
      %v3417 = vmul.f32 1.0, %v3416
      %v3418 = vrcp.pop %v3407
      %v3419 = vmul.f32 1.0, %v3418
      %v3420 = vmul.f32 %v3409, %v832
      %v3421 = vmul.f32 %v3411, %v836
      %v3422 = vmul.f32 %v3413, %v840
      %v3423 = vmul.f32 %v3415, %v844
      %v3424 = vmul.f32 %v3417, %v848
      %v3425 = vmul.f32 %v3419, %v852
      %3426 = vst [vmem:[%s194] sm:$0xff] %v3420
      %3427 = vst [vmem:[%s194 + $0x8] sm:$0xff] %v3421
      %3428 = vst [vmem:[%s194 + $0x10] sm:$0xff] %v3422
      %3429 = vst [vmem:[%s194 + $0x18] sm:$0xff] %v3423
      %3430 = vst [vmem:[%s194 + $0x20] sm:$0xff] %v3424
      %3431 = vst [vmem:[%s194 + $0x28] sm:$0xff] %v3425
      %p3432 = scmp.lt.s32.totalorder %s15, 1
      %s3433 = scalar_select %p3432, %s15, 1
      %s3434 = smul.addr %s3433, 6
      %s3435 = smul.addr %s3434, 8
      %s3436 = scalar_lea.vmem %s4, %s3435
      // Predicated region
      $region37: #{masknet_forward.1} parent=35 // pred_check
        %p3437 = pneg %p122
      $region38: #{masknet_forward.1} parent=35 // pred_check_branch
        %3439 = sbr.rel (%p3437) target = $region40
      $region39: #{masknet_forward.1} parent=35 // pred_region
        _
      $region40: #{masknet_forward.1} parent=35 // pred_fallthru
        _
    $region36: #{masknet_forward.1} parent=5 // pred_fallthru
      _
    %p3440 = scmp.le.s32.totalorder 2, %s10
    // Predicated region
    $region41: #{masknet_forward.1} parent=5 // pred_check
      %p3441 = pneg %p3440
    $region42: #{masknet_forward.1} parent=5 // pred_check_branch
      %3443 = sbr.rel (%p3441) target = $region44
    $region43: #{masknet_forward.1} parent=5 // pred_region
      %s3444 = ssub.s32 %s10, 2
      // Predicated region
      $region45: #{masknet_forward.1} parent=43 // pred_check
        %p3445 = pneg %p128
      $region46: #{masknet_forward.1} parent=43 // pred_check_branch
        %3447 = sbr.rel (%p3445) target = $region48
      $region47: #{masknet_forward.1} parent=43 // pred_region
        %p3448 = scmp.lt.s32.totalorder %s16, 1
        %s3449 = scalar_select %p3448, %s16, 1
        %s3450 = smul.addr %s3449, 6
        %s3451 = smul.addr %s3450, 8
        %s3452 = scalar_lea.vmem %s4, %s3451
      $region48: #{masknet_forward.1} parent=43 // pred_fallthru
        _
    $region44: #{masknet_forward.1} parent=5 // pred_fallthru
      _
  $region6: #{masknet_forward.1} parent=0 // loop_footer
    %s14 = sadd.s32 1, %s10
  $region7: #{masknet_forward.1} parent=0 // loop_footer_branch
    %9 = sbr.rel target = $region3
  $region8: #{masknet_forward.1} parent=0 // loop_exit
    _

</llo_original>
